<compile_context>
chip_gen: v7x
topology: tpu7x:2x2x1
jax: 0.10.0
libtpu: 0.0.40
codegen_flags: <defaults>
</compile_context>

<pallas_src>
import functools

import jax
import jax.numpy as jnp
from jax.experimental import pallas as pl
from jax.experimental.pallas import tpu as pltpu

# ---------------- synthetic model config (small shapes) ----------------
VOCAB = 50
HIDDEN = 32
NUM_HEADS = 2
HEAD_DIM = HIDDEN // NUM_HEADS
FFN = 64
NUM_LAYERS = 2
SEQ = 8            # multiple of 8 -> full-sublane output tile
NUM_CLASSES = 4
BATCH = 2

CP = 128           # classifier output lanes, padded (sliced to NUM_CLASSES in the wrapper)


# ---------------- fused Pallas kernel (one grid step = one sequence) ----------------
def _bert_fused_kernel(vl_ref, x_ref, embg_ref, embb_ref,
                       wqkv_ref, bqkv_ref, wo_ref, bo_ref, ln1g_ref, ln1b_ref,
                       w1_ref, b1_ref, w2_ref, b2_ref, ln2g_ref, ln2b_ref,
                       wp_ref, bp_ref, wc_ref, bc_ref, o_ref,
                       *, hidden, num_heads, num_layers):
    f32, bf16 = jnp.float32, jnp.bfloat16
    H, NH = hidden, num_heads
    HD = H // NH
    S = x_ref.shape[0]
    b = pl.program_id(0)

    def layernorm(y, g, beta, eps=1e-12):
        mu = jnp.mean(y, axis=-1, keepdims=True)
        d = y - mu
        var = jnp.mean(d * d, axis=-1, keepdims=True)
        return d * jax.lax.rsqrt(var + eps) * g + beta

    # Additive key-padding bias for this sequence, built from SMEM valid_length.
    vl = vl_ref[b]
    kk = jax.lax.broadcasted_iota(jnp.int32, (1, S), 1)
    attn_bias = jnp.where(kk < vl, 0.0, -1e9).astype(f32)        # (1, S), broadcasts over queries

    # Embedding LayerNorm (bf16 is storage-only; math in f32).
    x = layernorm(x_ref[...].astype(f32), embg_ref[...], embb_ref[...])     # (S, H) f32

    # ---- transformer encoder layers (static unrolled, all weights VMEM-resident) ----
    for li in range(num_layers):
        # Fused QKV projection: one bf16 MXU pass. 1/sqrt(HD) is folded into the Q columns.
        qkv = jnp.dot(x.astype(bf16), wqkv_ref[li],
                      preferred_element_type=f32) + bqkv_ref[li]            # (S, 3H) f32

        ctxs = []
        for h in range(NH):                                     # static, tiny head count
            q_h = qkv[:, h * HD:(h + 1) * HD]                   # (S, HD), already scaled
            k_h = qkv[:, H + h * HD:H + (h + 1) * HD]
            v_h = qkv[:, 2 * H + h * HD:2 * H + (h + 1) * HD]
            s = jax.lax.dot_general(q_h, k_h, (((1,), (1,)), ((), ())),
                                    preferred_element_type=f32) + attn_bias  # (S, S) f32
            m = jnp.max(s, axis=-1, keepdims=True)
            p = jnp.exp(s - m)
            p = p * pl.reciprocal(jnp.sum(p, axis=-1, keepdims=True), approx=True)
            ctxs.append(jnp.dot(p, v_h, preferred_element_type=f32))         # (S, HD)
        ctx = jnp.concatenate(ctxs, axis=-1)                    # (S, NH*HD) == (S, H)

        # Single output-projection contraction (no per-head sum).
        attn_out = jnp.dot(ctx.astype(bf16), wo_ref[li],
                           preferred_element_type=f32) + bo_ref[li]
        h1 = layernorm(x + attn_out, ln1g_ref[li], ln1b_ref[li])

        f = jnp.dot(h1.astype(bf16), w1_ref[li], preferred_element_type=f32) + b1_ref[li]
        # TODO(synk): HF/KoBERT BERT uses exact erf GELU; tanh approximation used here.
        f = jax.nn.gelu(f, approximate=True)
        ffn_out = jnp.dot(f.astype(bf16), w2_ref[li], preferred_element_type=f32) + b2_ref[li]
        x = layernorm(h1 + ffn_out, ln2g_ref[li], ln2b_ref[li])

    # ---- pooler (tanh Linear) + classifier ----
    # Applied to all S rows so the store is a full (S, CP) unmasked lane-dense tile; only row 0
    # (the CLS token) is meaningful and is sliced in the wrapper.
    pooled = jnp.tanh(jnp.dot(x.astype(bf16), wp_ref[...],
                              preferred_element_type=f32) + bp_ref[...])     # (S, H)
    # TODO(synk): dropout (dr_rate) omitted — module default dr_rate=None / eval-mode identity.
    o_ref[...] = jnp.dot(pooled.astype(bf16), wc_ref[...],
                         preferred_element_type=f32) + bc_ref[...]           # (S, CP) f32


# ---------------- parameter init (deterministic, synthetic) ----------------
def init_params(key):
    scale = 1.0 / float(HEAD_DIM) ** 0.5

    def dense(k, fan_in, fan_out):
        return 0.02 * jax.random.normal(k, (fan_in, fan_out), jnp.float32)

    keys = jax.random.split(key, 6 + NUM_LAYERS)
    ln_gamma = jnp.ones((1, HIDDEN), jnp.float32)

    cls_w = jnp.zeros((HIDDEN, CP), jnp.float32).at[:, :NUM_CLASSES].set(
        dense(keys[4], HIDDEN, NUM_CLASSES))                       # nn.Linear(hidden, num_classes)

    params = {
        'tok_emb': 0.02 * jax.random.normal(keys[0], (VOCAB, HIDDEN), jnp.float32),
        'seg_emb': 0.02 * jax.random.normal(keys[1], (2, HIDDEN), jnp.float32),
        'pos_emb': 0.02 * jax.random.normal(keys[2], (SEQ, HIDDEN), jnp.float32),
        'emb_ln_g': ln_gamma,
        'emb_ln_b': jnp.zeros((1, HIDDEN), jnp.float32),
        'pool_w': dense(keys[3], HIDDEN, HIDDEN).astype(jnp.bfloat16),
        'pool_b': jnp.zeros((1, HIDDEN), jnp.float32),
        'cls_w': cls_w.astype(jnp.bfloat16),
        'cls_b': jnp.zeros((1, CP), jnp.float32),
    }

    wqkv, wo, w1, w2 = [], [], [], []
    for li in range(NUM_LAYERS):
        lk = jax.random.split(keys[6 + li], 6)
        wq = dense(lk[0], HIDDEN, HIDDEN) * scale      # fold 1/sqrt(head_dim) into Q columns
        wk = dense(lk[1], HIDDEN, HIDDEN)
        wv = dense(lk[2], HIDDEN, HIDDEN)
        wqkv.append(jnp.concatenate([wq, wk, wv], axis=1))          # (H, 3H), head-major cols
        wo.append(dense(lk[3], HIDDEN, HIDDEN))                     # (NH*HD, H)
        w1.append(dense(lk[4], HIDDEN, FFN))
        w2.append(dense(lk[5], FFN, HIDDEN))

    L = NUM_LAYERS
    params.update({
        'wqkv': jnp.stack(wqkv).astype(jnp.bfloat16),
        'bqkv': jnp.zeros((L, 1, 3 * HIDDEN), jnp.float32),   # Q-slice bias is pre-scaled (zero here)
        'wo': jnp.stack(wo).astype(jnp.bfloat16),
        'bo': jnp.zeros((L, 1, HIDDEN), jnp.float32),
        'ln1_g': jnp.stack([ln_gamma] * L), 'ln1_b': jnp.zeros((L, 1, HIDDEN), jnp.float32),
        'w1': jnp.stack(w1).astype(jnp.bfloat16), 'b1': jnp.zeros((L, 1, FFN), jnp.float32),
        'w2': jnp.stack(w2).astype(jnp.bfloat16), 'b2': jnp.zeros((L, 1, HIDDEN), jnp.float32),
        'ln2_g': jnp.stack([ln_gamma] * L), 'ln2_b': jnp.zeros((L, 1, HIDDEN), jnp.float32),
    })
    return params


# ---------------- BERTClassifier.forward ----------------
def bert_classifier_forward(params, token_ids, valid_length, segment_ids):
    B, S = token_ids.shape
    # Embedding gathers stay in plain JAX; sum in f32, store the kernel input in bf16.
    emb = (params['tok_emb'][token_ids]
           + params['seg_emb'][segment_ids]
           + params['pos_emb'][None, :S, :])
    x = emb.astype(jnp.bfloat16)                                   # (B, S, HIDDEN)

    weight_args = (params['emb_ln_g'], params['emb_ln_b'],
                   params['wqkv'], params['bqkv'], params['wo'], params['bo'],
                   params['ln1_g'], params['ln1_b'],
                   params['w1'], params['b1'], params['w2'], params['b2'],
                   params['ln2_g'], params['ln2_b'],
                   params['pool_w'], params['pool_b'],
                   params['cls_w'], params['cls_b'])

    def const_spec(a):
        zeros = (0,) * a.ndim
        # Whole-array block with a constant index map: DMA'd once, VMEM-resident across steps.
        return pl.BlockSpec(a.shape, lambda b, vl, _z=zeros: _z)

    grid_spec = pltpu.PrefetchScalarGridSpec(
        num_scalar_prefetch=1,                                     # valid_length -> SMEM
        grid=(B,),
        in_specs=([pl.BlockSpec((None, S, HIDDEN), lambda b, vl: (b, 0, 0))]
                  + [const_spec(a) for a in weight_args]),
        out_specs=pl.BlockSpec((None, S, CP), lambda b, vl: (b, 0, 0)),
    )

    kernel = functools.partial(_bert_fused_kernel, hidden=HIDDEN,
                               num_heads=NUM_HEADS, num_layers=NUM_LAYERS)
    logits_padded = pl.pallas_call(
        kernel,
        grid_spec=grid_spec,
        out_shape=jax.ShapeDtypeStruct((B, S, CP), jnp.float32),
        compiler_params=pltpu.CompilerParams(dimension_semantics=("parallel",)),
    )(valid_length.astype(jnp.int32), x, *weight_args)
    # Row 0 of each sequence is the CLS token; first NUM_CLASSES lanes are the real logits.
    return logits_padded[:, 0, :NUM_CLASSES]


if __name__ == "__main__":
    key = jax.random.PRNGKey(0)
    pkey, dkey = jax.random.split(key)
    params = init_params(pkey)

    token_ids = jax.random.randint(dkey, (BATCH, SEQ), 0, VOCAB, dtype=jnp.int32)
    segment_ids = jnp.zeros((BATCH, SEQ), jnp.int32)
    valid_length = jnp.array([5, 8], jnp.int32)

    logits = bert_classifier_forward(params, token_ids, valid_length, segment_ids)
    jax.block_until_ready(logits)
    assert logits.shape == (BATCH, NUM_CLASSES) and logits.dtype == jnp.float32
    assert bool(jnp.all(jnp.isfinite(logits)))
    print("KERNEL_OK")
</pallas_src>

<mosaic_0001>
module attributes {stable_mosaic.version = 11 : i64} {
  func.func @_bert_fused_kernel(%arg0: i32, %arg1: memref<2xi32, #tpu.memory_space<smem>>, %arg2: memref<1x8x32xbf16, #tpu.memory_space<vmem>>, %arg3: memref<1x32xf32, #tpu.memory_space<vmem>>, %arg4: memref<1x32xf32, #tpu.memory_space<vmem>>, %arg5: memref<2x32x96xbf16, #tpu.memory_space<vmem>>, %arg6: memref<2x1x96xf32, #tpu.memory_space<vmem>>, %arg7: memref<2x32x32xbf16, #tpu.memory_space<vmem>>, %arg8: memref<2x1x32xf32, #tpu.memory_space<vmem>>, %arg9: memref<2x1x32xf32, #tpu.memory_space<vmem>>, %arg10: memref<2x1x32xf32, #tpu.memory_space<vmem>>, %arg11: memref<2x32x64xbf16, #tpu.memory_space<vmem>>, %arg12: memref<2x1x64xf32, #tpu.memory_space<vmem>>, %arg13: memref<2x64x32xbf16, #tpu.memory_space<vmem>>, %arg14: memref<2x1x32xf32, #tpu.memory_space<vmem>>, %arg15: memref<2x1x32xf32, #tpu.memory_space<vmem>>, %arg16: memref<2x1x32xf32, #tpu.memory_space<vmem>>, %arg17: memref<32x32xbf16, #tpu.memory_space<vmem>>, %arg18: memref<1x32xf32, #tpu.memory_space<vmem>>, %arg19: memref<32x128xbf16, #tpu.memory_space<vmem>>, %arg20: memref<1x128xf32, #tpu.memory_space<vmem>>, %arg21: memref<1x8x128xf32, #tpu.memory_space<vmem>>) attributes {dimension_semantics = [#tpu.dimension_semantics<parallel>], iteration_bounds = array<i64: 2>, scalar_prefetch = 1 : i64, scratch_operands = 0 : i64, tpu.core_type = #tpu.core_type<tc>, window_params = [{transform_indices = @transform_0, window_bounds = array<i64: 1, 8, 32>}, {pipeline_mode = #tpu.pipeline_mode<synchronous>, transform_indices = @transform_1, window_bounds = array<i64: 1, 32>}, {pipeline_mode = #tpu.pipeline_mode<synchronous>, transform_indices = @transform_2, window_bounds = array<i64: 1, 32>}, {pipeline_mode = #tpu.pipeline_mode<synchronous>, transform_indices = @transform_3, window_bounds = array<i64: 2, 32, 96>}, {pipeline_mode = #tpu.pipeline_mode<synchronous>, transform_indices = @transform_4, window_bounds = array<i64: 2, 1, 96>}, {pipeline_mode = #tpu.pipeline_mode<synchronous>, transform_indices = @transform_5, window_bounds = array<i64: 2, 32, 32>}, {pipeline_mode = #tpu.pipeline_mode<synchronous>, transform_indices = @transform_6, window_bounds = array<i64: 2, 1, 32>}, {pipeline_mode = #tpu.pipeline_mode<synchronous>, transform_indices = @transform_7, window_bounds = array<i64: 2, 1, 32>}, {pipeline_mode = #tpu.pipeline_mode<synchronous>, transform_indices = @transform_8, window_bounds = array<i64: 2, 1, 32>}, {pipeline_mode = #tpu.pipeline_mode<synchronous>, transform_indices = @transform_9, window_bounds = array<i64: 2, 32, 64>}, {pipeline_mode = #tpu.pipeline_mode<synchronous>, transform_indices = @transform_10, window_bounds = array<i64: 2, 1, 64>}, {pipeline_mode = #tpu.pipeline_mode<synchronous>, transform_indices = @transform_11, window_bounds = array<i64: 2, 64, 32>}, {pipeline_mode = #tpu.pipeline_mode<synchronous>, transform_indices = @transform_12, window_bounds = array<i64: 2, 1, 32>}, {pipeline_mode = #tpu.pipeline_mode<synchronous>, transform_indices = @transform_13, window_bounds = array<i64: 2, 1, 32>}, {pipeline_mode = #tpu.pipeline_mode<synchronous>, transform_indices = @transform_14, window_bounds = array<i64: 2, 1, 32>}, {pipeline_mode = #tpu.pipeline_mode<synchronous>, transform_indices = @transform_15, window_bounds = array<i64: 32, 32>}, {pipeline_mode = #tpu.pipeline_mode<synchronous>, transform_indices = @transform_16, window_bounds = array<i64: 1, 32>}, {pipeline_mode = #tpu.pipeline_mode<synchronous>, transform_indices = @transform_17, window_bounds = array<i64: 32, 128>}, {pipeline_mode = #tpu.pipeline_mode<synchronous>, transform_indices = @transform_18, window_bounds = array<i64: 1, 128>}, {transform_indices = @transform_19, window_bounds = array<i64: 1, 8, 128>}]} {
    %0 = arith.index_cast %arg0 : i32 to index
    %1 = memref.load %arg1[%0] : memref<2xi32, #tpu.memory_space<smem>>
    %2 = tpu.iota {dimensions = array<i32: 1>} : vector<1x8xi32>
    %3 = vector.broadcast %1 : i32 to vector<1x8xi32>
    %4 = arith.cmpi slt, %2, %3 : vector<1x8xi32>
    %cst = arith.constant 0.000000e+00 : f32
    %cst_0 = arith.constant -1.000000e+09 : f32
    %5 = vector.broadcast %cst : f32 to vector<1x8xf32>
    %6 = vector.broadcast %cst_0 : f32 to vector<1x8xf32>
    %7 = arith.select %4, %5, %6 : vector<1x8xi1>, vector<1x8xf32>
    %c0 = arith.constant 0 : index
    %c0_1 = arith.constant 0 : index
    %c0_2 = arith.constant 0 : index
    %8 = vector.load %arg2[%c0, %c0_1, %c0_2] : memref<1x8x32xbf16, #tpu.memory_space<vmem>>, vector<1x8x32xbf16>
    %9 = vector.shape_cast %8 : vector<1x8x32xbf16> to vector<8x32xbf16>
    %10 = arith.extf %9 : vector<8x32xbf16> to vector<8x32xf32>
    %c0_3 = arith.constant 0 : index
    %c0_4 = arith.constant 0 : index
    %11 = vector.load %arg3[%c0_3, %c0_4] : memref<1x32xf32, #tpu.memory_space<vmem>>, vector<1x32xf32>
    %c0_5 = arith.constant 0 : index
    %c0_6 = arith.constant 0 : index
    %12 = vector.load %arg4[%c0_5, %c0_6] : memref<1x32xf32, #tpu.memory_space<vmem>>, vector<1x32xf32>
    %cst_7 = arith.constant dense<0.000000e+00> : vector<8xf32>
    %13 = vector.multi_reduction <add>, %10, %cst_7 [1] : vector<8x32xf32> to vector<8xf32>
    %14 = vector.shape_cast %13 : vector<8xf32> to vector<8x1xf32>
    %cst_8 = arith.constant 3.200000e+01 : f32
    %15 = vector.broadcast %cst_8 : f32 to vector<8x1xf32>
    %16 = arith.divf %14, %15 : vector<8x1xf32>
    %17 = vector.broadcast %16 : vector<8x1xf32> to vector<8x32xf32>
    %18 = arith.subf %10, %17 : vector<8x32xf32>
    %19 = arith.mulf %18, %18 : vector<8x32xf32>
    %cst_9 = arith.constant dense<0.000000e+00> : vector<8xf32>
    %20 = vector.multi_reduction <add>, %19, %cst_9 [1] : vector<8x32xf32> to vector<8xf32>
    %21 = vector.shape_cast %20 : vector<8xf32> to vector<8x1xf32>
    %cst_10 = arith.constant 3.200000e+01 : f32
    %22 = vector.broadcast %cst_10 : f32 to vector<8x1xf32>
    %23 = arith.divf %21, %22 : vector<8x1xf32>
    %cst_11 = arith.constant 9.99999996E-13 : f32
    %24 = vector.broadcast %cst_11 : f32 to vector<8x1xf32>
    %25 = arith.addf %23, %24 : vector<8x1xf32>
    %26 = math.rsqrt %25 : vector<8x1xf32>
    %27 = vector.broadcast %26 : vector<8x1xf32> to vector<8x32xf32>
    %28 = arith.mulf %18, %27 : vector<8x32xf32>
    %29 = vector.broadcast %11 : vector<1x32xf32> to vector<8x32xf32>
    %30 = arith.mulf %28, %29 : vector<8x32xf32>
    %31 = vector.broadcast %12 : vector<1x32xf32> to vector<8x32xf32>
    %32 = arith.addf %30, %31 : vector<8x32xf32>
    %33 = arith.truncf %32 : vector<8x32xf32> to vector<8x32xbf16>
    %c0_12 = arith.constant 0 : index
    %c0_13 = arith.constant 0 : index
    %c0_14 = arith.constant 0 : index
    %34 = vector.load %arg5[%c0_12, %c0_13, %c0_14] : memref<2x32x96xbf16, #tpu.memory_space<vmem>>, vector<1x32x96xbf16>
    %35 = vector.shape_cast %34 : vector<1x32x96xbf16> to vector<32x96xbf16>
    %cst_15 = arith.constant dense<0.000000e+00> : vector<8x96xf32>
    %36 = tpu.matmul %33, %35, %cst_15 {dimension_numbers = #tpu.dot_dimension_numbers<[1], [0], [0], [1], [0, 0, 1, 1], [], []>} : vector<8x32xbf16>, vector<32x96xbf16>, vector<8x96xf32> -> vector<8x96xf32>
    %c0_16 = arith.constant 0 : index
    %c0_17 = arith.constant 0 : index
    %c0_18 = arith.constant 0 : index
    %37 = vector.load %arg6[%c0_16, %c0_17, %c0_18] : memref<2x1x96xf32, #tpu.memory_space<vmem>>, vector<1x1x96xf32>
    %38 = vector.shape_cast %37 : vector<1x1x96xf32> to vector<1x96xf32>
    %39 = vector.broadcast %38 : vector<1x96xf32> to vector<8x96xf32>
    %40 = arith.addf %36, %39 : vector<8x96xf32>
    %41 = vector.extract_strided_slice %40 {offsets = [0, 0], sizes = [8, 16], strides = [1, 1]} : vector<8x96xf32> to vector<8x16xf32>
    %42 = vector.extract_strided_slice %40 {offsets = [0, 32], sizes = [8, 16], strides = [1, 1]} : vector<8x96xf32> to vector<8x16xf32>
    %43 = vector.extract_strided_slice %40 {offsets = [0, 64], sizes = [8, 16], strides = [1, 1]} : vector<8x96xf32> to vector<8x16xf32>
    %cst_19 = arith.constant dense<0.000000e+00> : vector<8x8xf32>
    %44 = tpu.matmul %41, %42, %cst_19 {dimension_numbers = #tpu.dot_dimension_numbers<[1], [1], [0], [0], [0, 0, 1, 0], [], []>} : vector<8x16xf32>, vector<8x16xf32>, vector<8x8xf32> -> vector<8x8xf32>
    %45 = vector.broadcast %7 : vector<1x8xf32> to vector<8x8xf32>
    %46 = arith.addf %44, %45 : vector<8x8xf32>
    %cst_20 = arith.constant dense<0xFF800000> : vector<8xf32>
    %47 = vector.multi_reduction <maximumf>, %46, %cst_20 [1] : vector<8x8xf32> to vector<8xf32>
    %48 = vector.shape_cast %47 : vector<8xf32> to vector<8x1xf32>
    %49 = vector.broadcast %48 : vector<8x1xf32> to vector<8x8xf32>
    %50 = arith.subf %46, %49 : vector<8x8xf32>
    %51 = math.exp %50 : vector<8x8xf32>
    %cst_21 = arith.constant dense<0.000000e+00> : vector<8xf32>
    %52 = vector.multi_reduction <add>, %51, %cst_21 [1] : vector<8x8xf32> to vector<8xf32>
    %53 = vector.shape_cast %52 : vector<8xf32> to vector<8x1xf32>
    %54 = tpu.reciprocal %53 {approx = true} : vector<8x1xf32> -> vector<8x1xf32>
    %55 = vector.broadcast %54 : vector<8x1xf32> to vector<8x8xf32>
    %56 = arith.mulf %51, %55 : vector<8x8xf32>
    %cst_22 = arith.constant dense<0.000000e+00> : vector<8x16xf32>
    %57 = tpu.matmul %56, %43, %cst_22 {dimension_numbers = #tpu.dot_dimension_numbers<[1], [0], [0], [1], [0, 0, 1, 1], [], []>} : vector<8x8xf32>, vector<8x16xf32>, vector<8x16xf32> -> vector<8x16xf32>
    %58 = vector.extract_strided_slice %40 {offsets = [0, 16], sizes = [8, 16], strides = [1, 1]} : vector<8x96xf32> to vector<8x16xf32>
    %59 = vector.extract_strided_slice %40 {offsets = [0, 48], sizes = [8, 16], strides = [1, 1]} : vector<8x96xf32> to vector<8x16xf32>
    %60 = vector.extract_strided_slice %40 {offsets = [0, 80], sizes = [8, 16], strides = [1, 1]} : vector<8x96xf32> to vector<8x16xf32>
    %cst_23 = arith.constant dense<0.000000e+00> : vector<8x8xf32>
    %61 = tpu.matmul %58, %59, %cst_23 {dimension_numbers = #tpu.dot_dimension_numbers<[1], [1], [0], [0], [0, 0, 1, 0], [], []>} : vector<8x16xf32>, vector<8x16xf32>, vector<8x8xf32> -> vector<8x8xf32>
    %62 = vector.broadcast %7 : vector<1x8xf32> to vector<8x8xf32>
    %63 = arith.addf %61, %62 : vector<8x8xf32>
    %cst_24 = arith.constant dense<0xFF800000> : vector<8xf32>
    %64 = vector.multi_reduction <maximumf>, %63, %cst_24 [1] : vector<8x8xf32> to vector<8xf32>
    %65 = vector.shape_cast %64 : vector<8xf32> to vector<8x1xf32>
    %66 = vector.broadcast %65 : vector<8x1xf32> to vector<8x8xf32>
    %67 = arith.subf %63, %66 : vector<8x8xf32>
    %68 = math.exp %67 : vector<8x8xf32>
    %cst_25 = arith.constant dense<0.000000e+00> : vector<8xf32>
    %69 = vector.multi_reduction <add>, %68, %cst_25 [1] : vector<8x8xf32> to vector<8xf32>
    %70 = vector.shape_cast %69 : vector<8xf32> to vector<8x1xf32>
    %71 = tpu.reciprocal %70 {approx = true} : vector<8x1xf32> -> vector<8x1xf32>
    %72 = vector.broadcast %71 : vector<8x1xf32> to vector<8x8xf32>
    %73 = arith.mulf %68, %72 : vector<8x8xf32>
    %cst_26 = arith.constant dense<0.000000e+00> : vector<8x16xf32>
    %74 = tpu.matmul %73, %60, %cst_26 {dimension_numbers = #tpu.dot_dimension_numbers<[1], [0], [0], [1], [0, 0, 1, 1], [], []>} : vector<8x8xf32>, vector<8x16xf32>, vector<8x16xf32> -> vector<8x16xf32>
    %75 = tpu.concatenate %57, %74 in 1 : vector<8x16xf32>, vector<8x16xf32> -> vector<8x32xf32>
    %76 = arith.truncf %75 : vector<8x32xf32> to vector<8x32xbf16>
    %c0_27 = arith.constant 0 : index
    %c0_28 = arith.constant 0 : index
    %c0_29 = arith.constant 0 : index
    %77 = vector.load %arg7[%c0_27, %c0_28, %c0_29] : memref<2x32x32xbf16, #tpu.memory_space<vmem>>, vector<1x32x32xbf16>
    %78 = vector.shape_cast %77 : vector<1x32x32xbf16> to vector<32x32xbf16>
    %cst_30 = arith.constant dense<0.000000e+00> : vector<8x32xf32>
    %79 = tpu.matmul %76, %78, %cst_30 {dimension_numbers = #tpu.dot_dimension_numbers<[1], [0], [0], [1], [0, 0, 1, 1], [], []>} : vector<8x32xbf16>, vector<32x32xbf16>, vector<8x32xf32> -> vector<8x32xf32>
    %c0_31 = arith.constant 0 : index
    %c0_32 = arith.constant 0 : index
    %c0_33 = arith.constant 0 : index
    %80 = vector.load %arg8[%c0_31, %c0_32, %c0_33] : memref<2x1x32xf32, #tpu.memory_space<vmem>>, vector<1x1x32xf32>
    %81 = vector.shape_cast %80 : vector<1x1x32xf32> to vector<1x32xf32>
    %82 = vector.broadcast %81 : vector<1x32xf32> to vector<8x32xf32>
    %83 = arith.addf %79, %82 : vector<8x32xf32>
    %84 = arith.addf %32, %83 : vector<8x32xf32>
    %c0_34 = arith.constant 0 : index
    %c0_35 = arith.constant 0 : index
    %c0_36 = arith.constant 0 : index
    %85 = vector.load %arg9[%c0_34, %c0_35, %c0_36] : memref<2x1x32xf32, #tpu.memory_space<vmem>>, vector<1x1x32xf32>
    %86 = vector.shape_cast %85 : vector<1x1x32xf32> to vector<1x32xf32>
    %c0_37 = arith.constant 0 : index
    %c0_38 = arith.constant 0 : index
    %c0_39 = arith.constant 0 : index
    %87 = vector.load %arg10[%c0_37, %c0_38, %c0_39] : memref<2x1x32xf32, #tpu.memory_space<vmem>>, vector<1x1x32xf32>
    %88 = vector.shape_cast %87 : vector<1x1x32xf32> to vector<1x32xf32>
    %cst_40 = arith.constant dense<0.000000e+00> : vector<8xf32>
    %89 = vector.multi_reduction <add>, %84, %cst_40 [1] : vector<8x32xf32> to vector<8xf32>
    %90 = vector.shape_cast %89 : vector<8xf32> to vector<8x1xf32>
    %cst_41 = arith.constant 3.200000e+01 : f32
    %91 = vector.broadcast %cst_41 : f32 to vector<8x1xf32>
    %92 = arith.divf %90, %91 : vector<8x1xf32>
    %93 = vector.broadcast %92 : vector<8x1xf32> to vector<8x32xf32>
    %94 = arith.subf %84, %93 : vector<8x32xf32>
    %95 = arith.mulf %94, %94 : vector<8x32xf32>
    %cst_42 = arith.constant dense<0.000000e+00> : vector<8xf32>
    %96 = vector.multi_reduction <add>, %95, %cst_42 [1] : vector<8x32xf32> to vector<8xf32>
    %97 = vector.shape_cast %96 : vector<8xf32> to vector<8x1xf32>
    %cst_43 = arith.constant 3.200000e+01 : f32
    %98 = vector.broadcast %cst_43 : f32 to vector<8x1xf32>
    %99 = arith.divf %97, %98 : vector<8x1xf32>
    %cst_44 = arith.constant 9.99999996E-13 : f32
    %100 = vector.broadcast %cst_44 : f32 to vector<8x1xf32>
    %101 = arith.addf %99, %100 : vector<8x1xf32>
    %102 = math.rsqrt %101 : vector<8x1xf32>
    %103 = vector.broadcast %102 : vector<8x1xf32> to vector<8x32xf32>
    %104 = arith.mulf %94, %103 : vector<8x32xf32>
    %105 = vector.broadcast %86 : vector<1x32xf32> to vector<8x32xf32>
    %106 = arith.mulf %104, %105 : vector<8x32xf32>
    %107 = vector.broadcast %88 : vector<1x32xf32> to vector<8x32xf32>
    %108 = arith.addf %106, %107 : vector<8x32xf32>
    %109 = arith.truncf %108 : vector<8x32xf32> to vector<8x32xbf16>
    %c0_45 = arith.constant 0 : index
    %c0_46 = arith.constant 0 : index
    %c0_47 = arith.constant 0 : index
    %110 = vector.load %arg11[%c0_45, %c0_46, %c0_47] : memref<2x32x64xbf16, #tpu.memory_space<vmem>>, vector<1x32x64xbf16>
    %111 = vector.shape_cast %110 : vector<1x32x64xbf16> to vector<32x64xbf16>
    %cst_48 = arith.constant dense<0.000000e+00> : vector<8x64xf32>
    %112 = tpu.matmul %109, %111, %cst_48 {dimension_numbers = #tpu.dot_dimension_numbers<[1], [0], [0], [1], [0, 0, 1, 1], [], []>} : vector<8x32xbf16>, vector<32x64xbf16>, vector<8x64xf32> -> vector<8x64xf32>
    %c0_49 = arith.constant 0 : index
    %c0_50 = arith.constant 0 : index
    %c0_51 = arith.constant 0 : index
    %113 = vector.load %arg12[%c0_49, %c0_50, %c0_51] : memref<2x1x64xf32, #tpu.memory_space<vmem>>, vector<1x1x64xf32>
    %114 = vector.shape_cast %113 : vector<1x1x64xf32> to vector<1x64xf32>
    %115 = vector.broadcast %114 : vector<1x64xf32> to vector<8x64xf32>
    %116 = arith.addf %112, %115 : vector<8x64xf32>
    %117 = arith.mulf %116, %116 : vector<8x64xf32>
    %118 = arith.mulf %116, %117 : vector<8x64xf32>
    %cst_52 = arith.constant 4.471500e-02 : f32
    %119 = vector.broadcast %cst_52 : f32 to vector<8x64xf32>
    %120 = arith.mulf %119, %118 : vector<8x64xf32>
    %121 = arith.addf %116, %120 : vector<8x64xf32>
    %cst_53 = arith.constant 0.797884583 : f32
    %122 = vector.broadcast %cst_53 : f32 to vector<8x64xf32>
    %123 = arith.mulf %122, %121 : vector<8x64xf32>
    %124 = math.tanh %123 : vector<8x64xf32>
    %cst_54 = arith.constant 1.000000e+00 : f32
    %125 = vector.broadcast %cst_54 : f32 to vector<8x64xf32>
    %126 = arith.addf %125, %124 : vector<8x64xf32>
    %cst_55 = arith.constant 5.000000e-01 : f32
    %127 = vector.broadcast %cst_55 : f32 to vector<8x64xf32>
    %128 = arith.mulf %127, %126 : vector<8x64xf32>
    %129 = arith.mulf %116, %128 : vector<8x64xf32>
    %130 = arith.truncf %129 : vector<8x64xf32> to vector<8x64xbf16>
    %c0_56 = arith.constant 0 : index
    %c0_57 = arith.constant 0 : index
    %c0_58 = arith.constant 0 : index
    %131 = vector.load %arg13[%c0_56, %c0_57, %c0_58] : memref<2x64x32xbf16, #tpu.memory_space<vmem>>, vector<1x64x32xbf16>
    %132 = vector.shape_cast %131 : vector<1x64x32xbf16> to vector<64x32xbf16>
    %cst_59 = arith.constant dense<0.000000e+00> : vector<8x32xf32>
    %133 = tpu.matmul %130, %132, %cst_59 {dimension_numbers = #tpu.dot_dimension_numbers<[1], [0], [0], [1], [0, 0, 1, 1], [], []>} : vector<8x64xbf16>, vector<64x32xbf16>, vector<8x32xf32> -> vector<8x32xf32>
    %c0_60 = arith.constant 0 : index
    %c0_61 = arith.constant 0 : index
    %c0_62 = arith.constant 0 : index
    %134 = vector.load %arg14[%c0_60, %c0_61, %c0_62] : memref<2x1x32xf32, #tpu.memory_space<vmem>>, vector<1x1x32xf32>
    %135 = vector.shape_cast %134 : vector<1x1x32xf32> to vector<1x32xf32>
    %136 = vector.broadcast %135 : vector<1x32xf32> to vector<8x32xf32>
    %137 = arith.addf %133, %136 : vector<8x32xf32>
    %138 = arith.addf %108, %137 : vector<8x32xf32>
    %c0_63 = arith.constant 0 : index
    %c0_64 = arith.constant 0 : index
    %c0_65 = arith.constant 0 : index
    %139 = vector.load %arg15[%c0_63, %c0_64, %c0_65] : memref<2x1x32xf32, #tpu.memory_space<vmem>>, vector<1x1x32xf32>
    %140 = vector.shape_cast %139 : vector<1x1x32xf32> to vector<1x32xf32>
    %c0_66 = arith.constant 0 : index
    %c0_67 = arith.constant 0 : index
    %c0_68 = arith.constant 0 : index
    %141 = vector.load %arg16[%c0_66, %c0_67, %c0_68] : memref<2x1x32xf32, #tpu.memory_space<vmem>>, vector<1x1x32xf32>
    %142 = vector.shape_cast %141 : vector<1x1x32xf32> to vector<1x32xf32>
    %cst_69 = arith.constant dense<0.000000e+00> : vector<8xf32>
    %143 = vector.multi_reduction <add>, %138, %cst_69 [1] : vector<8x32xf32> to vector<8xf32>
    %144 = vector.shape_cast %143 : vector<8xf32> to vector<8x1xf32>
    %cst_70 = arith.constant 3.200000e+01 : f32
    %145 = vector.broadcast %cst_70 : f32 to vector<8x1xf32>
    %146 = arith.divf %144, %145 : vector<8x1xf32>
    %147 = vector.broadcast %146 : vector<8x1xf32> to vector<8x32xf32>
    %148 = arith.subf %138, %147 : vector<8x32xf32>
    %149 = arith.mulf %148, %148 : vector<8x32xf32>
    %cst_71 = arith.constant dense<0.000000e+00> : vector<8xf32>
    %150 = vector.multi_reduction <add>, %149, %cst_71 [1] : vector<8x32xf32> to vector<8xf32>
    %151 = vector.shape_cast %150 : vector<8xf32> to vector<8x1xf32>
    %cst_72 = arith.constant 3.200000e+01 : f32
    %152 = vector.broadcast %cst_72 : f32 to vector<8x1xf32>
    %153 = arith.divf %151, %152 : vector<8x1xf32>
    %cst_73 = arith.constant 9.99999996E-13 : f32
    %154 = vector.broadcast %cst_73 : f32 to vector<8x1xf32>
    %155 = arith.addf %153, %154 : vector<8x1xf32>
    %156 = math.rsqrt %155 : vector<8x1xf32>
    %157 = vector.broadcast %156 : vector<8x1xf32> to vector<8x32xf32>
    %158 = arith.mulf %148, %157 : vector<8x32xf32>
    %159 = vector.broadcast %140 : vector<1x32xf32> to vector<8x32xf32>
    %160 = arith.mulf %158, %159 : vector<8x32xf32>
    %161 = vector.broadcast %142 : vector<1x32xf32> to vector<8x32xf32>
    %162 = arith.addf %160, %161 : vector<8x32xf32>
    %163 = arith.truncf %162 : vector<8x32xf32> to vector<8x32xbf16>
    %c1 = arith.constant 1 : index
    %c0_74 = arith.constant 0 : index
    %c0_75 = arith.constant 0 : index
    %164 = vector.load %arg5[%c1, %c0_74, %c0_75] : memref<2x32x96xbf16, #tpu.memory_space<vmem>>, vector<1x32x96xbf16>
    %165 = vector.shape_cast %164 : vector<1x32x96xbf16> to vector<32x96xbf16>
    %cst_76 = arith.constant dense<0.000000e+00> : vector<8x96xf32>
    %166 = tpu.matmul %163, %165, %cst_76 {dimension_numbers = #tpu.dot_dimension_numbers<[1], [0], [0], [1], [0, 0, 1, 1], [], []>} : vector<8x32xbf16>, vector<32x96xbf16>, vector<8x96xf32> -> vector<8x96xf32>
    %c1_77 = arith.constant 1 : index
    %c0_78 = arith.constant 0 : index
    %c0_79 = arith.constant 0 : index
    %167 = vector.load %arg6[%c1_77, %c0_78, %c0_79] : memref<2x1x96xf32, #tpu.memory_space<vmem>>, vector<1x1x96xf32>
    %168 = vector.shape_cast %167 : vector<1x1x96xf32> to vector<1x96xf32>
    %169 = vector.broadcast %168 : vector<1x96xf32> to vector<8x96xf32>
    %170 = arith.addf %166, %169 : vector<8x96xf32>
    %171 = vector.extract_strided_slice %170 {offsets = [0, 0], sizes = [8, 16], strides = [1, 1]} : vector<8x96xf32> to vector<8x16xf32>
    %172 = vector.extract_strided_slice %170 {offsets = [0, 32], sizes = [8, 16], strides = [1, 1]} : vector<8x96xf32> to vector<8x16xf32>
    %173 = vector.extract_strided_slice %170 {offsets = [0, 64], sizes = [8, 16], strides = [1, 1]} : vector<8x96xf32> to vector<8x16xf32>
    %cst_80 = arith.constant dense<0.000000e+00> : vector<8x8xf32>
    %174 = tpu.matmul %171, %172, %cst_80 {dimension_numbers = #tpu.dot_dimension_numbers<[1], [1], [0], [0], [0, 0, 1, 0], [], []>} : vector<8x16xf32>, vector<8x16xf32>, vector<8x8xf32> -> vector<8x8xf32>
    %175 = vector.broadcast %7 : vector<1x8xf32> to vector<8x8xf32>
    %176 = arith.addf %174, %175 : vector<8x8xf32>
    %cst_81 = arith.constant dense<0xFF800000> : vector<8xf32>
    %177 = vector.multi_reduction <maximumf>, %176, %cst_81 [1] : vector<8x8xf32> to vector<8xf32>
    %178 = vector.shape_cast %177 : vector<8xf32> to vector<8x1xf32>
    %179 = vector.broadcast %178 : vector<8x1xf32> to vector<8x8xf32>
    %180 = arith.subf %176, %179 : vector<8x8xf32>
    %181 = math.exp %180 : vector<8x8xf32>
    %cst_82 = arith.constant dense<0.000000e+00> : vector<8xf32>
    %182 = vector.multi_reduction <add>, %181, %cst_82 [1] : vector<8x8xf32> to vector<8xf32>
    %183 = vector.shape_cast %182 : vector<8xf32> to vector<8x1xf32>
    %184 = tpu.reciprocal %183 {approx = true} : vector<8x1xf32> -> vector<8x1xf32>
    %185 = vector.broadcast %184 : vector<8x1xf32> to vector<8x8xf32>
    %186 = arith.mulf %181, %185 : vector<8x8xf32>
    %cst_83 = arith.constant dense<0.000000e+00> : vector<8x16xf32>
    %187 = tpu.matmul %186, %173, %cst_83 {dimension_numbers = #tpu.dot_dimension_numbers<[1], [0], [0], [1], [0, 0, 1, 1], [], []>} : vector<8x8xf32>, vector<8x16xf32>, vector<8x16xf32> -> vector<8x16xf32>
    %188 = vector.extract_strided_slice %170 {offsets = [0, 16], sizes = [8, 16], strides = [1, 1]} : vector<8x96xf32> to vector<8x16xf32>
    %189 = vector.extract_strided_slice %170 {offsets = [0, 48], sizes = [8, 16], strides = [1, 1]} : vector<8x96xf32> to vector<8x16xf32>
    %190 = vector.extract_strided_slice %170 {offsets = [0, 80], sizes = [8, 16], strides = [1, 1]} : vector<8x96xf32> to vector<8x16xf32>
    %cst_84 = arith.constant dense<0.000000e+00> : vector<8x8xf32>
    %191 = tpu.matmul %188, %189, %cst_84 {dimension_numbers = #tpu.dot_dimension_numbers<[1], [1], [0], [0], [0, 0, 1, 0], [], []>} : vector<8x16xf32>, vector<8x16xf32>, vector<8x8xf32> -> vector<8x8xf32>
    %192 = vector.broadcast %7 : vector<1x8xf32> to vector<8x8xf32>
    %193 = arith.addf %191, %192 : vector<8x8xf32>
    %cst_85 = arith.constant dense<0xFF800000> : vector<8xf32>
    %194 = vector.multi_reduction <maximumf>, %193, %cst_85 [1] : vector<8x8xf32> to vector<8xf32>
    %195 = vector.shape_cast %194 : vector<8xf32> to vector<8x1xf32>
    %196 = vector.broadcast %195 : vector<8x1xf32> to vector<8x8xf32>
    %197 = arith.subf %193, %196 : vector<8x8xf32>
    %198 = math.exp %197 : vector<8x8xf32>
    %cst_86 = arith.constant dense<0.000000e+00> : vector<8xf32>
    %199 = vector.multi_reduction <add>, %198, %cst_86 [1] : vector<8x8xf32> to vector<8xf32>
    %200 = vector.shape_cast %199 : vector<8xf32> to vector<8x1xf32>
    %201 = tpu.reciprocal %200 {approx = true} : vector<8x1xf32> -> vector<8x1xf32>
    %202 = vector.broadcast %201 : vector<8x1xf32> to vector<8x8xf32>
    %203 = arith.mulf %198, %202 : vector<8x8xf32>
    %cst_87 = arith.constant dense<0.000000e+00> : vector<8x16xf32>
    %204 = tpu.matmul %203, %190, %cst_87 {dimension_numbers = #tpu.dot_dimension_numbers<[1], [0], [0], [1], [0, 0, 1, 1], [], []>} : vector<8x8xf32>, vector<8x16xf32>, vector<8x16xf32> -> vector<8x16xf32>
    %205 = tpu.concatenate %187, %204 in 1 : vector<8x16xf32>, vector<8x16xf32> -> vector<8x32xf32>
    %206 = arith.truncf %205 : vector<8x32xf32> to vector<8x32xbf16>
    %c1_88 = arith.constant 1 : index
    %c0_89 = arith.constant 0 : index
    %c0_90 = arith.constant 0 : index
    %207 = vector.load %arg7[%c1_88, %c0_89, %c0_90] : memref<2x32x32xbf16, #tpu.memory_space<vmem>>, vector<1x32x32xbf16>
    %208 = vector.shape_cast %207 : vector<1x32x32xbf16> to vector<32x32xbf16>
    %cst_91 = arith.constant dense<0.000000e+00> : vector<8x32xf32>
    %209 = tpu.matmul %206, %208, %cst_91 {dimension_numbers = #tpu.dot_dimension_numbers<[1], [0], [0], [1], [0, 0, 1, 1], [], []>} : vector<8x32xbf16>, vector<32x32xbf16>, vector<8x32xf32> -> vector<8x32xf32>
    %c1_92 = arith.constant 1 : index
    %c0_93 = arith.constant 0 : index
    %c0_94 = arith.constant 0 : index
    %210 = vector.load %arg8[%c1_92, %c0_93, %c0_94] : memref<2x1x32xf32, #tpu.memory_space<vmem>>, vector<1x1x32xf32>
    %211 = vector.shape_cast %210 : vector<1x1x32xf32> to vector<1x32xf32>
    %212 = vector.broadcast %211 : vector<1x32xf32> to vector<8x32xf32>
    %213 = arith.addf %209, %212 : vector<8x32xf32>
    %214 = arith.addf %162, %213 : vector<8x32xf32>
    %c1_95 = arith.constant 1 : index
    %c0_96 = arith.constant 0 : index
    %c0_97 = arith.constant 0 : index
    %215 = vector.load %arg9[%c1_95, %c0_96, %c0_97] : memref<2x1x32xf32, #tpu.memory_space<vmem>>, vector<1x1x32xf32>
    %216 = vector.shape_cast %215 : vector<1x1x32xf32> to vector<1x32xf32>
    %c1_98 = arith.constant 1 : index
    %c0_99 = arith.constant 0 : index
    %c0_100 = arith.constant 0 : index
    %217 = vector.load %arg10[%c1_98, %c0_99, %c0_100] : memref<2x1x32xf32, #tpu.memory_space<vmem>>, vector<1x1x32xf32>
    %218 = vector.shape_cast %217 : vector<1x1x32xf32> to vector<1x32xf32>
    %cst_101 = arith.constant dense<0.000000e+00> : vector<8xf32>
    %219 = vector.multi_reduction <add>, %214, %cst_101 [1] : vector<8x32xf32> to vector<8xf32>
    %220 = vector.shape_cast %219 : vector<8xf32> to vector<8x1xf32>
    %cst_102 = arith.constant 3.200000e+01 : f32
    %221 = vector.broadcast %cst_102 : f32 to vector<8x1xf32>
    %222 = arith.divf %220, %221 : vector<8x1xf32>
    %223 = vector.broadcast %222 : vector<8x1xf32> to vector<8x32xf32>
    %224 = arith.subf %214, %223 : vector<8x32xf32>
    %225 = arith.mulf %224, %224 : vector<8x32xf32>
    %cst_103 = arith.constant dense<0.000000e+00> : vector<8xf32>
    %226 = vector.multi_reduction <add>, %225, %cst_103 [1] : vector<8x32xf32> to vector<8xf32>
    %227 = vector.shape_cast %226 : vector<8xf32> to vector<8x1xf32>
    %cst_104 = arith.constant 3.200000e+01 : f32
    %228 = vector.broadcast %cst_104 : f32 to vector<8x1xf32>
    %229 = arith.divf %227, %228 : vector<8x1xf32>
    %cst_105 = arith.constant 9.99999996E-13 : f32
    %230 = vector.broadcast %cst_105 : f32 to vector<8x1xf32>
    %231 = arith.addf %229, %230 : vector<8x1xf32>
    %232 = math.rsqrt %231 : vector<8x1xf32>
    %233 = vector.broadcast %232 : vector<8x1xf32> to vector<8x32xf32>
    %234 = arith.mulf %224, %233 : vector<8x32xf32>
    %235 = vector.broadcast %216 : vector<1x32xf32> to vector<8x32xf32>
    %236 = arith.mulf %234, %235 : vector<8x32xf32>
    %237 = vector.broadcast %218 : vector<1x32xf32> to vector<8x32xf32>
    %238 = arith.addf %236, %237 : vector<8x32xf32>
    %239 = arith.truncf %238 : vector<8x32xf32> to vector<8x32xbf16>
    %c1_106 = arith.constant 1 : index
    %c0_107 = arith.constant 0 : index
    %c0_108 = arith.constant 0 : index
    %240 = vector.load %arg11[%c1_106, %c0_107, %c0_108] : memref<2x32x64xbf16, #tpu.memory_space<vmem>>, vector<1x32x64xbf16>
    %241 = vector.shape_cast %240 : vector<1x32x64xbf16> to vector<32x64xbf16>
    %cst_109 = arith.constant dense<0.000000e+00> : vector<8x64xf32>
    %242 = tpu.matmul %239, %241, %cst_109 {dimension_numbers = #tpu.dot_dimension_numbers<[1], [0], [0], [1], [0, 0, 1, 1], [], []>} : vector<8x32xbf16>, vector<32x64xbf16>, vector<8x64xf32> -> vector<8x64xf32>
    %c1_110 = arith.constant 1 : index
    %c0_111 = arith.constant 0 : index
    %c0_112 = arith.constant 0 : index
    %243 = vector.load %arg12[%c1_110, %c0_111, %c0_112] : memref<2x1x64xf32, #tpu.memory_space<vmem>>, vector<1x1x64xf32>
    %244 = vector.shape_cast %243 : vector<1x1x64xf32> to vector<1x64xf32>
    %245 = vector.broadcast %244 : vector<1x64xf32> to vector<8x64xf32>
    %246 = arith.addf %242, %245 : vector<8x64xf32>
    %247 = arith.mulf %246, %246 : vector<8x64xf32>
    %248 = arith.mulf %246, %247 : vector<8x64xf32>
    %cst_113 = arith.constant 4.471500e-02 : f32
    %249 = vector.broadcast %cst_113 : f32 to vector<8x64xf32>
    %250 = arith.mulf %249, %248 : vector<8x64xf32>
    %251 = arith.addf %246, %250 : vector<8x64xf32>
    %cst_114 = arith.constant 0.797884583 : f32
    %252 = vector.broadcast %cst_114 : f32 to vector<8x64xf32>
    %253 = arith.mulf %252, %251 : vector<8x64xf32>
    %254 = math.tanh %253 : vector<8x64xf32>
    %cst_115 = arith.constant 1.000000e+00 : f32
    %255 = vector.broadcast %cst_115 : f32 to vector<8x64xf32>
    %256 = arith.addf %255, %254 : vector<8x64xf32>
    %cst_116 = arith.constant 5.000000e-01 : f32
    %257 = vector.broadcast %cst_116 : f32 to vector<8x64xf32>
    %258 = arith.mulf %257, %256 : vector<8x64xf32>
    %259 = arith.mulf %246, %258 : vector<8x64xf32>
    %260 = arith.truncf %259 : vector<8x64xf32> to vector<8x64xbf16>
    %c1_117 = arith.constant 1 : index
    %c0_118 = arith.constant 0 : index
    %c0_119 = arith.constant 0 : index
    %261 = vector.load %arg13[%c1_117, %c0_118, %c0_119] : memref<2x64x32xbf16, #tpu.memory_space<vmem>>, vector<1x64x32xbf16>
    %262 = vector.shape_cast %261 : vector<1x64x32xbf16> to vector<64x32xbf16>
    %cst_120 = arith.constant dense<0.000000e+00> : vector<8x32xf32>
    %263 = tpu.matmul %260, %262, %cst_120 {dimension_numbers = #tpu.dot_dimension_numbers<[1], [0], [0], [1], [0, 0, 1, 1], [], []>} : vector<8x64xbf16>, vector<64x32xbf16>, vector<8x32xf32> -> vector<8x32xf32>
    %c1_121 = arith.constant 1 : index
    %c0_122 = arith.constant 0 : index
    %c0_123 = arith.constant 0 : index
    %264 = vector.load %arg14[%c1_121, %c0_122, %c0_123] : memref<2x1x32xf32, #tpu.memory_space<vmem>>, vector<1x1x32xf32>
    %265 = vector.shape_cast %264 : vector<1x1x32xf32> to vector<1x32xf32>
    %266 = vector.broadcast %265 : vector<1x32xf32> to vector<8x32xf32>
    %267 = arith.addf %263, %266 : vector<8x32xf32>
    %268 = arith.addf %238, %267 : vector<8x32xf32>
    %c1_124 = arith.constant 1 : index
    %c0_125 = arith.constant 0 : index
    %c0_126 = arith.constant 0 : index
    %269 = vector.load %arg15[%c1_124, %c0_125, %c0_126] : memref<2x1x32xf32, #tpu.memory_space<vmem>>, vector<1x1x32xf32>
    %270 = vector.shape_cast %269 : vector<1x1x32xf32> to vector<1x32xf32>
    %c1_127 = arith.constant 1 : index
    %c0_128 = arith.constant 0 : index
    %c0_129 = arith.constant 0 : index
    %271 = vector.load %arg16[%c1_127, %c0_128, %c0_129] : memref<2x1x32xf32, #tpu.memory_space<vmem>>, vector<1x1x32xf32>
    %272 = vector.shape_cast %271 : vector<1x1x32xf32> to vector<1x32xf32>
    %cst_130 = arith.constant dense<0.000000e+00> : vector<8xf32>
    %273 = vector.multi_reduction <add>, %268, %cst_130 [1] : vector<8x32xf32> to vector<8xf32>
    %274 = vector.shape_cast %273 : vector<8xf32> to vector<8x1xf32>
    %cst_131 = arith.constant 3.200000e+01 : f32
    %275 = vector.broadcast %cst_131 : f32 to vector<8x1xf32>
    %276 = arith.divf %274, %275 : vector<8x1xf32>
    %277 = vector.broadcast %276 : vector<8x1xf32> to vector<8x32xf32>
    %278 = arith.subf %268, %277 : vector<8x32xf32>
    %279 = arith.mulf %278, %278 : vector<8x32xf32>
    %cst_132 = arith.constant dense<0.000000e+00> : vector<8xf32>
    %280 = vector.multi_reduction <add>, %279, %cst_132 [1] : vector<8x32xf32> to vector<8xf32>
    %281 = vector.shape_cast %280 : vector<8xf32> to vector<8x1xf32>
    %cst_133 = arith.constant 3.200000e+01 : f32
    %282 = vector.broadcast %cst_133 : f32 to vector<8x1xf32>
    %283 = arith.divf %281, %282 : vector<8x1xf32>
    %cst_134 = arith.constant 9.99999996E-13 : f32
    %284 = vector.broadcast %cst_134 : f32 to vector<8x1xf32>
    %285 = arith.addf %283, %284 : vector<8x1xf32>
    %286 = math.rsqrt %285 : vector<8x1xf32>
    %287 = vector.broadcast %286 : vector<8x1xf32> to vector<8x32xf32>
    %288 = arith.mulf %278, %287 : vector<8x32xf32>
    %289 = vector.broadcast %270 : vector<1x32xf32> to vector<8x32xf32>
    %290 = arith.mulf %288, %289 : vector<8x32xf32>
    %291 = vector.broadcast %272 : vector<1x32xf32> to vector<8x32xf32>
    %292 = arith.addf %290, %291 : vector<8x32xf32>
    %293 = arith.truncf %292 : vector<8x32xf32> to vector<8x32xbf16>
    %c0_135 = arith.constant 0 : index
    %c0_136 = arith.constant 0 : index
    %294 = vector.load %arg17[%c0_135, %c0_136] : memref<32x32xbf16, #tpu.memory_space<vmem>>, vector<32x32xbf16>
    %cst_137 = arith.constant dense<0.000000e+00> : vector<8x32xf32>
    %295 = tpu.matmul %293, %294, %cst_137 {dimension_numbers = #tpu.dot_dimension_numbers<[1], [0], [0], [1], [0, 0, 1, 1], [], []>} : vector<8x32xbf16>, vector<32x32xbf16>, vector<8x32xf32> -> vector<8x32xf32>
    %c0_138 = arith.constant 0 : index
    %c0_139 = arith.constant 0 : index
    %296 = vector.load %arg18[%c0_138, %c0_139] : memref<1x32xf32, #tpu.memory_space<vmem>>, vector<1x32xf32>
    %297 = vector.broadcast %296 : vector<1x32xf32> to vector<8x32xf32>
    %298 = arith.addf %295, %297 : vector<8x32xf32>
    %299 = math.tanh %298 : vector<8x32xf32>
    %300 = arith.truncf %299 : vector<8x32xf32> to vector<8x32xbf16>
    %c0_140 = arith.constant 0 : index
    %c0_141 = arith.constant 0 : index
    %301 = vector.load %arg19[%c0_140, %c0_141] : memref<32x128xbf16, #tpu.memory_space<vmem>>, vector<32x128xbf16>
    %cst_142 = arith.constant dense<0.000000e+00> : vector<8x128xf32>
    %302 = tpu.matmul %300, %301, %cst_142 {dimension_numbers = #tpu.dot_dimension_numbers<[1], [0], [0], [1], [0, 0, 1, 1], [], []>} : vector<8x32xbf16>, vector<32x128xbf16>, vector<8x128xf32> -> vector<8x128xf32>
    %c0_143 = arith.constant 0 : index
    %c0_144 = arith.constant 0 : index
    %303 = vector.load %arg20[%c0_143, %c0_144] : memref<1x128xf32, #tpu.memory_space<vmem>>, vector<1x128xf32>
    %304 = vector.broadcast %303 : vector<1x128xf32> to vector<8x128xf32>
    %305 = arith.addf %302, %304 : vector<8x128xf32>
    %c0_145 = arith.constant 0 : index
    %c0_146 = arith.constant 0 : index
    %c0_147 = arith.constant 0 : index
    %306 = vector.load %arg21[%c0_145, %c0_146, %c0_147] : memref<1x8x128xf32, #tpu.memory_space<vmem>>, vector<1x8x128xf32>
    %307 = vector.shape_cast %306 : vector<1x8x128xf32> to vector<8x128xf32>
    %308 = vector.shape_cast %305 : vector<8x128xf32> to vector<1x8x128xf32>
    tpu.vector_store %arg21[%c0_145, %c0_146, %c0_147], %308 {strides = array<i32>} : memref<1x8x128xf32, #tpu.memory_space<vmem>>, vector<1x8x128xf32>,
    return
  }
  func.func @transform_0(%arg0: i32, %arg1: memref<2xi32, #tpu.memory_space<smem>>) -> (i32, i32, i32) {
    %c0_i32 = arith.constant 0 : i32
    %c0_i32_0 = arith.constant 0 : i32
    %c0_i32_1 = arith.constant 0 : i32
    return %arg0, %c0_i32, %c0_i32_0 : i32, i32, i32
  }
  func.func @transform_1(%arg0: i32, %arg1: memref<2xi32, #tpu.memory_space<smem>>) -> (i32, i32) {
    %c0_i32 = arith.constant 0 : i32
    %c0_i32_0 = arith.constant 0 : i32
    %c0_i32_1 = arith.constant 0 : i32
    return %c0_i32, %c0_i32_0 : i32, i32
  }
  func.func @transform_2(%arg0: i32, %arg1: memref<2xi32, #tpu.memory_space<smem>>) -> (i32, i32) {
    %c0_i32 = arith.constant 0 : i32
    %c0_i32_0 = arith.constant 0 : i32
    %c0_i32_1 = arith.constant 0 : i32
    return %c0_i32, %c0_i32_0 : i32, i32
  }
  func.func @transform_3(%arg0: i32, %arg1: memref<2xi32, #tpu.memory_space<smem>>) -> (i32, i32, i32) {
    %c0_i32 = arith.constant 0 : i32
    %c0_i32_0 = arith.constant 0 : i32
    %c0_i32_1 = arith.constant 0 : i32
    %c0_i32_2 = arith.constant 0 : i32
    return %c0_i32, %c0_i32_0, %c0_i32_1 : i32, i32, i32
  }
  func.func @transform_4(%arg0: i32, %arg1: memref<2xi32, #tpu.memory_space<smem>>) -> (i32, i32, i32) {
    %c0_i32 = arith.constant 0 : i32
    %c0_i32_0 = arith.constant 0 : i32
    %c0_i32_1 = arith.constant 0 : i32
    %c0_i32_2 = arith.constant 0 : i32
    return %c0_i32, %c0_i32_0, %c0_i32_1 : i32, i32, i32
  }
  func.func @transform_5(%arg0: i32, %arg1: memref<2xi32, #tpu.memory_space<smem>>) -> (i32, i32, i32) {
    %c0_i32 = arith.constant 0 : i32
    %c0_i32_0 = arith.constant 0 : i32
    %c0_i32_1 = arith.constant 0 : i32
    %c0_i32_2 = arith.constant 0 : i32
    return %c0_i32, %c0_i32_0, %c0_i32_1 : i32, i32, i32
  }
  func.func @transform_6(%arg0: i32, %arg1: memref<2xi32, #tpu.memory_space<smem>>) -> (i32, i32, i32) {
    %c0_i32 = arith.constant 0 : i32
    %c0_i32_0 = arith.constant 0 : i32
    %c0_i32_1 = arith.constant 0 : i32
    %c0_i32_2 = arith.constant 0 : i32
    return %c0_i32, %c0_i32_0, %c0_i32_1 : i32, i32, i32
  }
  func.func @transform_7(%arg0: i32, %arg1: memref<2xi32, #tpu.memory_space<smem>>) -> (i32, i32, i32) {
    %c0_i32 = arith.constant 0 : i32
    %c0_i32_0 = arith.constant 0 : i32
    %c0_i32_1 = arith.constant 0 : i32
    %c0_i32_2 = arith.constant 0 : i32
    return %c0_i32, %c0_i32_0, %c0_i32_1 : i32, i32, i32
  }
  func.func @transform_8(%arg0: i32, %arg1: memref<2xi32, #tpu.memory_space<smem>>) -> (i32, i32, i32) {
    %c0_i32 = arith.constant 0 : i32
    %c0_i32_0 = arith.constant 0 : i32
    %c0_i32_1 = arith.constant 0 : i32
    %c0_i32_2 = arith.constant 0 : i32
    return %c0_i32, %c0_i32_0, %c0_i32_1 : i32, i32, i32
  }
  func.func @transform_9(%arg0: i32, %arg1: memref<2xi32, #tpu.memory_space<smem>>) -> (i32, i32, i32) {
    %c0_i32 = arith.constant 0 : i32
    %c0_i32_0 = arith.constant 0 : i32
    %c0_i32_1 = arith.constant 0 : i32
    %c0_i32_2 = arith.constant 0 : i32
    return %c0_i32, %c0_i32_0, %c0_i32_1 : i32, i32, i32
  }
  func.func @transform_10(%arg0: i32, %arg1: memref<2xi32, #tpu.memory_space<smem>>) -> (i32, i32, i32) {
    %c0_i32 = arith.constant 0 : i32
    %c0_i32_0 = arith.constant 0 : i32
    %c0_i32_1 = arith.constant 0 : i32
    %c0_i32_2 = arith.constant 0 : i32
    return %c0_i32, %c0_i32_0, %c0_i32_1 : i32, i32, i32
  }
  func.func @transform_11(%arg0: i32, %arg1: memref<2xi32, #tpu.memory_space<smem>>) -> (i32, i32, i32) {
    %c0_i32 = arith.constant 0 : i32
    %c0_i32_0 = arith.constant 0 : i32
    %c0_i32_1 = arith.constant 0 : i32
    %c0_i32_2 = arith.constant 0 : i32
    return %c0_i32, %c0_i32_0, %c0_i32_1 : i32, i32, i32
  }
  func.func @transform_12(%arg0: i32, %arg1: memref<2xi32, #tpu.memory_space<smem>>) -> (i32, i32, i32) {
    %c0_i32 = arith.constant 0 : i32
    %c0_i32_0 = arith.constant 0 : i32
    %c0_i32_1 = arith.constant 0 : i32
    %c0_i32_2 = arith.constant 0 : i32
    return %c0_i32, %c0_i32_0, %c0_i32_1 : i32, i32, i32
  }
  func.func @transform_13(%arg0: i32, %arg1: memref<2xi32, #tpu.memory_space<smem>>) -> (i32, i32, i32) {
    %c0_i32 = arith.constant 0 : i32
    %c0_i32_0 = arith.constant 0 : i32
    %c0_i32_1 = arith.constant 0 : i32
    %c0_i32_2 = arith.constant 0 : i32
    return %c0_i32, %c0_i32_0, %c0_i32_1 : i32, i32, i32
  }
  func.func @transform_14(%arg0: i32, %arg1: memref<2xi32, #tpu.memory_space<smem>>) -> (i32, i32, i32) {
    %c0_i32 = arith.constant 0 : i32
    %c0_i32_0 = arith.constant 0 : i32
    %c0_i32_1 = arith.constant 0 : i32
    %c0_i32_2 = arith.constant 0 : i32
    return %c0_i32, %c0_i32_0, %c0_i32_1 : i32, i32, i32
  }
  func.func @transform_15(%arg0: i32, %arg1: memref<2xi32, #tpu.memory_space<smem>>) -> (i32, i32) {
    %c0_i32 = arith.constant 0 : i32
    %c0_i32_0 = arith.constant 0 : i32
    %c0_i32_1 = arith.constant 0 : i32
    return %c0_i32, %c0_i32_0 : i32, i32
  }
  func.func @transform_16(%arg0: i32, %arg1: memref<2xi32, #tpu.memory_space<smem>>) -> (i32, i32) {
    %c0_i32 = arith.constant 0 : i32
    %c0_i32_0 = arith.constant 0 : i32
    %c0_i32_1 = arith.constant 0 : i32
    return %c0_i32, %c0_i32_0 : i32, i32
  }
  func.func @transform_17(%arg0: i32, %arg1: memref<2xi32, #tpu.memory_space<smem>>) -> (i32, i32) {
    %c0_i32 = arith.constant 0 : i32
    %c0_i32_0 = arith.constant 0 : i32
    %c0_i32_1 = arith.constant 0 : i32
    return %c0_i32, %c0_i32_0 : i32, i32
  }
  func.func @transform_18(%arg0: i32, %arg1: memref<2xi32, #tpu.memory_space<smem>>) -> (i32, i32) {
    %c0_i32 = arith.constant 0 : i32
    %c0_i32_0 = arith.constant 0 : i32
    %c0_i32_1 = arith.constant 0 : i32
    return %c0_i32, %c0_i32_0 : i32, i32
  }
  func.func @transform_19(%arg0: i32, %arg1: memref<2xi32, #tpu.memory_space<smem>>) -> (i32, i32, i32) {
    %c0_i32 = arith.constant 0 : i32
    %c0_i32_0 = arith.constant 0 : i32
    %c0_i32_1 = arith.constant 0 : i32
    return %arg0, %c0_i32, %c0_i32_0 : i32, i32, i32
  }
}

</mosaic_0001>

<llo_original>
// kernel: tpu_custom_call.1
$region0: #{tpu_custom_call.1}
  #allocation0 [shape = 'u32[]', space=smem, size = 0x4, offset = 0x4, fixed_abs, tag = 'smem constant byte address 0x4 - core index']
  #allocation1 [shape = 'u32[144,128]{1,0:T(1,128)}', space=vmem, size = 0x12000, scoped, tag = 'internal scratch']
  #allocation2 [shape = 's32[1]{0}', space=sflag, size = 0x4, scoped, tag = 'scoped memory for tpu_custom_call.1']
  #allocation3 [shape = 'u8[512]{0}', space=smem, size = 0x200, scoped, tag = 'prefetched SMEM operand 0']
  %s0 = inlined_call_operand.hbm [shape: s32[2], index: 0, kind: input, shape index: {}]
  %s1 = inlined_call_operand.hbm [shape: bf16[2,8,32], index: 1, kind: input, shape index: {}]
  %s2 = inlined_call_operand.hbm [shape: f32[1,32], index: 2, kind: input, shape index: {}]
  %s3 = inlined_call_operand.hbm [shape: f32[1,32], index: 3, kind: input, shape index: {}]
  %s4 = inlined_call_operand.vmem [shape: bf16[2,32,96], index: 4, kind: input, shape index: {}]
  %s5 = inlined_call_operand.hbm [shape: f32[2,1,96], index: 5, kind: input, shape index: {}]
  %s6 = inlined_call_operand.vmem [shape: bf16[2,32,32], index: 6, kind: input, shape index: {}]
  %s7 = inlined_call_operand.hbm [shape: f32[2,1,32], index: 7, kind: input, shape index: {}]
  %s8 = inlined_call_operand.hbm [shape: f32[2,1,32], index: 8, kind: input, shape index: {}]
  %s9 = inlined_call_operand.hbm [shape: f32[2,1,32], index: 9, kind: input, shape index: {}]
  %s10 = inlined_call_operand.vmem [shape: bf16[2,32,64], index: 10, kind: input, shape index: {}]
  %s11 = inlined_call_operand.hbm [shape: f32[2,1,64], index: 11, kind: input, shape index: {}]
  %s12 = inlined_call_operand.vmem [shape: bf16[2,64,32], index: 12, kind: input, shape index: {}]
  %s13 = inlined_call_operand.hbm [shape: f32[2,1,32], index: 13, kind: input, shape index: {}]
  %s14 = inlined_call_operand.hbm [shape: f32[2,1,32], index: 14, kind: input, shape index: {}]
  %s15 = inlined_call_operand.hbm [shape: f32[2,1,32], index: 15, kind: input, shape index: {}]
  %s16 = inlined_call_operand.vmem [shape: bf16[32,32], index: 16, kind: input, shape index: {}]
  %s17 = inlined_call_operand.hbm [shape: f32[1,32], index: 17, kind: input, shape index: {}]
  %s18 = inlined_call_operand.vmem [shape: bf16[32,128], index: 18, kind: input, shape index: {}]
  %s19 = inlined_call_operand.vmem [shape: f32[1,128], index: 19, kind: input, shape index: {}]
  %s20 = inlined_call_operand.hbm [shape: f32[2,8,128], index: 20, kind: output, shape index: {}]
  %s21 = sld [smem:[#allocation0]]
  $region157: #{tpu_custom_call.1} parent=0
    _
  %s23 = ssub.s32 1, %s21
  %s24 = scalar_select 0, %s23, %s21
  %26 = dma.hbm_to_smem %s0, 16, [#allocation3], [#allocation2]
  %27 = dma.done [#allocation2], 16
  %28 = sfence
  $region1: #{tpu_custom_call.1} parent=0
    #allocation4 [shape = 'u8[4096]{0}', space=vmem, size = 0x1000, scoped, tag = 'input window, operand 1']
    #allocation5 [shape = 's32[2]{0}', space=sflag, size = 0x8, scoped, tag = 'scoped memory for tpu_custom_call.1']
    #allocation6 [shape = 's32[2]{0}', space=sflag, size = 0x8, scoped, tag = 'scoped memory for tpu_custom_call.1']
    #allocation7 [shape = 'u8[512]{0}', space=vmem, size = 0x400, scoped, tag = 'input window, operand 2, single buffered']
    #allocation8 [shape = 's32[1]{0}', space=sflag, size = 0x4, scoped, tag = 'scoped memory for tpu_custom_call.1']
    #allocation9 [shape = 'u8[512]{0}', space=vmem, size = 0x400, scoped, tag = 'input window, operand 3, single buffered']
    #allocation10 [shape = 'u8[1024]{0}', space=vmem, size = 0x400, scoped, tag = 'input window, operand 5, single buffered']
    #allocation11 [shape = 's32[1]{0}', space=sflag, size = 0x4, scoped, tag = 'scoped memory for tpu_custom_call.1']
    #allocation12 [shape = 'u8[1024]{0}', space=vmem, size = 0x400, scoped, tag = 'input window, operand 7, single buffered']
    #allocation13 [shape = 'u8[1024]{0}', space=vmem, size = 0x400, scoped, tag = 'input window, operand 8, single buffered']
    #allocation14 [shape = 's32[1]{0}', space=sflag, size = 0x4, scoped, tag = 'scoped memory for tpu_custom_call.1']
    #allocation15 [shape = 'u8[1024]{0}', space=vmem, size = 0x400, scoped, tag = 'input window, operand 9, single buffered']
    #allocation16 [shape = 'u8[1024]{0}', space=vmem, size = 0x400, scoped, tag = 'input window, operand 11, single buffered']
    #allocation17 [shape = 's32[1]{0}', space=sflag, size = 0x4, scoped, tag = 'scoped memory for tpu_custom_call.1']
    #allocation18 [shape = 'u8[1024]{0}', space=vmem, size = 0x400, scoped, tag = 'input window, operand 13, single buffered']
    #allocation19 [shape = 'u8[1024]{0}', space=vmem, size = 0x400, scoped, tag = 'input window, operand 14, single buffered']
    #allocation20 [shape = 's32[1]{0}', space=sflag, size = 0x4, scoped, tag = 'scoped memory for tpu_custom_call.1']
    #allocation21 [shape = 'u8[1024]{0}', space=vmem, size = 0x400, scoped, tag = 'input window, operand 15, single buffered']
    #allocation22 [shape = 'u8[512]{0}', space=vmem, size = 0x400, scoped, tag = 'input window, operand 17, single buffered']
    #allocation23 [shape = 's32[1]{0}', space=sflag, size = 0x4, scoped, tag = 'scoped memory for tpu_custom_call.1']
    #allocation24 [shape = 'u8[8192]{0}', space=vmem, size = 0x2000, scoped, tag = 'output window, operand 0']
    %29 = vsyncpa [#allocation5], 0
    %s30 = scalar_lea.sflag [#allocation5], 1
    %31 = vsyncpa %s30, 0
    %32 = vsyncpa [#allocation8], 0
    %33 = vsyncpa [#allocation11], 0
    %34 = vsyncpa [#allocation14], 0
    %35 = vsyncpa [#allocation17], 0
    %36 = vsyncpa [#allocation20], 0
    %37 = vsyncpa [#allocation23], 0
    %38 = vsyncpa [#allocation6], 0
    %s39 = scalar_lea.sflag [#allocation6], 1
    %40 = vsyncpa %s39, 0
    loop: start=0, step=1, limit=4
    $region2: #{tpu_custom_call.1} parent=1 // loop_pre_header
      _
    $region3: #{tpu_custom_call.1} parent=1 // loop_header
      %s42 = sphi 0, %s46
      %p43 = scmp.ge.s32.totalorder %s42, 4
      %s52 = sphi 0, %s54
      %s55 = sphi 0, %s52
      %s56 = sphi 0, %s55
      %s72 = sphi 0, %s56
      %s76 = sphi 0, %s76
      %s78 = sphi 0, %s76
      %s79 = sphi 0, %s78
      %s93 = sphi 0, %s79
      %s97 = sphi 0, %s97
      %s99 = sphi 0, %s97
      %s100 = sphi 0, %s99
      %s114 = sphi 0, %s100
      %s118 = sphi 0, %s118
      %s120 = sphi 0, %s118
      %s121 = sphi 0, %s120
      %s135 = sphi 0, %s121
      %s139 = sphi 0, %s139
      %s141 = sphi 0, %s139
      %s142 = sphi 0, %s141
      %s156 = sphi 0, %s142
      %s160 = sphi 0, %s160
      %s162 = sphi 0, %s160
      %s163 = sphi 0, %s162
      %s177 = sphi 0, %s163
      %s181 = sphi 0, %s181
      %s183 = sphi 0, %s181
      %s184 = sphi 0, %s183
      %s198 = sphi 0, %s184
      %s202 = sphi 0, %s202
      %s204 = sphi 0, %s202
      %s205 = sphi 0, %s204
      %s219 = sphi 0, %s205
      %s223 = sphi 0, %s223
      %s225 = sphi 0, %s223
      %s226 = sphi 0, %s225
      %s240 = sphi 0, %s226
      %s244 = sphi 0, %s244
      %s246 = sphi 0, %s244
      %s247 = sphi 0, %s246
      %s261 = sphi 0, %s247
      %s265 = sphi 0, %s265
      %s267 = sphi 0, %s265
      %s268 = sphi 0, %s267
      %s282 = sphi 0, %s268
      %s286 = sphi 0, %s286
      %s288 = sphi 0, %s286
      %s289 = sphi 0, %s288
      %s303 = sphi 0, %s289
      %s307 = sphi 0, %s307
      %s309 = sphi 0, %s307
      %s310 = sphi 0, %s309
      %s324 = sphi 0, %s310
      %s328 = sphi 0, %s328
      %s330 = sphi 0, %s328
      %s331 = sphi 0, %s330
      %s345 = sphi 0, %s331
      %s349 = sphi 0, %s349
      %s351 = sphi 0, %s349
      %s352 = sphi 0, %s351
      %s366 = sphi 0, %s352
      %s370 = sphi 0, %s370
      %s372 = sphi 0, %s370
      %s373 = sphi 0, %s372
      %s387 = sphi 0, %s373
      %s391 = sphi 0, %s391
      %s393 = sphi 0, %s391
      %s394 = sphi 0, %s393
      %s408 = sphi 0, %s394
      %s412 = sphi 0, %s412
      %s414 = sphi 0, %s412
      %s415 = sphi 0, %s414
      %s429 = sphi 0, %s415
      %s433 = sphi 0, %s433
      %s435 = sphi 0, %s433
      %s436 = sphi 0, %s435
      %s450 = sphi 0, %s436
      %s456 = sphi 0, %s458
      %s459 = sphi 0, %s456
      %s460 = sphi 0, %s459
      %s476 = sphi 0, %s460
    $region4: #{tpu_custom_call.1} parent=1 // loop_header_branch
      %45 = sbr.rel (%p43) target = $region8
    $region5: #{tpu_custom_call.1} parent=1 // loop_body
      %s47 = ssub.s32 %s42, 1
      %s48 = ssub.s32 %s42, 2
      %s49 = sadd.s32 %s42, 1
      %s50 = ssub.s32 %s42, %s49
      %p51 = scmp.eq.s32.totalorder %s50, 0
      %s53 = sadd.s32 %s52, 1
      %s54 = scalar_select %p51, %s52, %s53
      %p57 = pneg %p51
      %p58 = scmp.eq.s32.totalorder %s42, 1
      %p59 = por %p57, %p58
      %p60 = scmp.ne.s32.totalorder %s52, %s55
      %p61 = scmp.eq.s32.totalorder %s42, 0
      %p62 = por %p60, %p61
      %p63 = scmp.ne.s32.totalorder %s52, %s55
      %p64 = scmp.eq.s32.totalorder %s47, 1
      %p65 = por %p63, %p64
      %p66 = scmp.ne.s32.totalorder %s55, %s56
      %p67 = scmp.eq.s32.totalorder %s47, 0
      %p68 = por %p66, %p67
      %p69 = scmp.ne.s32.totalorder %s55, %s56
      %p70 = scmp.eq.s32.totalorder %s48, 1
      %p71 = por %p69, %p70
      %p73 = scmp.ne.s32.totalorder %s56, %s72
      %p74 = scmp.eq.s32.totalorder %s48, 0
      %p75 = por %p73, %p74
      %s77 = sadd.s32 %s76, 1
      %p80 = scmp.eq.s32.totalorder %s42, 1
      %p81 = scmp.ne.s32.totalorder %s76, %s78
      %p82 = scmp.eq.s32.totalorder %s42, 0
      %p83 = por %p81, %p82
      %p84 = scmp.ne.s32.totalorder %s76, %s78
      %p85 = scmp.eq.s32.totalorder %s47, 1
      %p86 = por %p84, %p85
      %p87 = scmp.ne.s32.totalorder %s78, %s79
      %p88 = scmp.eq.s32.totalorder %s47, 0
      %p89 = por %p87, %p88
      %p90 = scmp.ne.s32.totalorder %s78, %s79
      %p91 = scmp.eq.s32.totalorder %s48, 1
      %p92 = por %p90, %p91
      %p94 = scmp.ne.s32.totalorder %s79, %s93
      %p95 = scmp.eq.s32.totalorder %s48, 0
      %p96 = por %p94, %p95
      %s98 = sadd.s32 %s97, 1
      %p101 = scmp.eq.s32.totalorder %s42, 1
      %p102 = scmp.ne.s32.totalorder %s97, %s99
      %p103 = scmp.eq.s32.totalorder %s42, 0
      %p104 = por %p102, %p103
      %p105 = scmp.ne.s32.totalorder %s97, %s99
      %p106 = scmp.eq.s32.totalorder %s47, 1
      %p107 = por %p105, %p106
      %p108 = scmp.ne.s32.totalorder %s99, %s100
      %p109 = scmp.eq.s32.totalorder %s47, 0
      %p110 = por %p108, %p109
      %p111 = scmp.ne.s32.totalorder %s99, %s100
      %p112 = scmp.eq.s32.totalorder %s48, 1
      %p113 = por %p111, %p112
      %p115 = scmp.ne.s32.totalorder %s100, %s114
      %p116 = scmp.eq.s32.totalorder %s48, 0
      %p117 = por %p115, %p116
      %s119 = sadd.s32 %s118, 1
      %p122 = scmp.eq.s32.totalorder %s42, 1
      %p123 = scmp.ne.s32.totalorder %s118, %s120
      %p124 = scmp.eq.s32.totalorder %s42, 0
      %p125 = por %p123, %p124
      %p126 = scmp.ne.s32.totalorder %s118, %s120
      %p127 = scmp.eq.s32.totalorder %s47, 1
      %p128 = por %p126, %p127
      %p129 = scmp.ne.s32.totalorder %s120, %s121
      %p130 = scmp.eq.s32.totalorder %s47, 0
      %p131 = por %p129, %p130
      %p132 = scmp.ne.s32.totalorder %s120, %s121
      %p133 = scmp.eq.s32.totalorder %s48, 1
      %p134 = por %p132, %p133
      %p136 = scmp.ne.s32.totalorder %s121, %s135
      %p137 = scmp.eq.s32.totalorder %s48, 0
      %p138 = por %p136, %p137
      %s140 = sadd.s32 %s139, 1
      %p143 = scmp.eq.s32.totalorder %s42, 1
      %p144 = scmp.ne.s32.totalorder %s139, %s141
      %p145 = scmp.eq.s32.totalorder %s42, 0
      %p146 = por %p144, %p145
      %p147 = scmp.ne.s32.totalorder %s139, %s141
      %p148 = scmp.eq.s32.totalorder %s47, 1
      %p149 = por %p147, %p148
      %p150 = scmp.ne.s32.totalorder %s141, %s142
      %p151 = scmp.eq.s32.totalorder %s47, 0
      %p152 = por %p150, %p151
      %p153 = scmp.ne.s32.totalorder %s141, %s142
      %p154 = scmp.eq.s32.totalorder %s48, 1
      %p155 = por %p153, %p154
      %p157 = scmp.ne.s32.totalorder %s142, %s156
      %p158 = scmp.eq.s32.totalorder %s48, 0
      %p159 = por %p157, %p158
      %s161 = sadd.s32 %s160, 1
      %p164 = scmp.eq.s32.totalorder %s42, 1
      %p165 = scmp.ne.s32.totalorder %s160, %s162
      %p166 = scmp.eq.s32.totalorder %s42, 0
      %p167 = por %p165, %p166
      %p168 = scmp.ne.s32.totalorder %s160, %s162
      %p169 = scmp.eq.s32.totalorder %s47, 1
      %p170 = por %p168, %p169
      %p171 = scmp.ne.s32.totalorder %s162, %s163
      %p172 = scmp.eq.s32.totalorder %s47, 0
      %p173 = por %p171, %p172
      %p174 = scmp.ne.s32.totalorder %s162, %s163
      %p175 = scmp.eq.s32.totalorder %s48, 1
      %p176 = por %p174, %p175
      %p178 = scmp.ne.s32.totalorder %s163, %s177
      %p179 = scmp.eq.s32.totalorder %s48, 0
      %p180 = por %p178, %p179
      %s182 = sadd.s32 %s181, 1
      %p185 = scmp.eq.s32.totalorder %s42, 1
      %p186 = scmp.ne.s32.totalorder %s181, %s183
      %p187 = scmp.eq.s32.totalorder %s42, 0
      %p188 = por %p186, %p187
      %p189 = scmp.ne.s32.totalorder %s181, %s183
      %p190 = scmp.eq.s32.totalorder %s47, 1
      %p191 = por %p189, %p190
      %p192 = scmp.ne.s32.totalorder %s183, %s184
      %p193 = scmp.eq.s32.totalorder %s47, 0
      %p194 = por %p192, %p193
      %p195 = scmp.ne.s32.totalorder %s183, %s184
      %p196 = scmp.eq.s32.totalorder %s48, 1
      %p197 = por %p195, %p196
      %p199 = scmp.ne.s32.totalorder %s184, %s198
      %p200 = scmp.eq.s32.totalorder %s48, 0
      %p201 = por %p199, %p200
      %s203 = sadd.s32 %s202, 1
      %p206 = scmp.eq.s32.totalorder %s42, 1
      %p207 = scmp.ne.s32.totalorder %s202, %s204
      %p208 = scmp.eq.s32.totalorder %s42, 0
      %p209 = por %p207, %p208
      %p210 = scmp.ne.s32.totalorder %s202, %s204
      %p211 = scmp.eq.s32.totalorder %s47, 1
      %p212 = por %p210, %p211
      %p213 = scmp.ne.s32.totalorder %s204, %s205
      %p214 = scmp.eq.s32.totalorder %s47, 0
      %p215 = por %p213, %p214
      %p216 = scmp.ne.s32.totalorder %s204, %s205
      %p217 = scmp.eq.s32.totalorder %s48, 1
      %p218 = por %p216, %p217
      %p220 = scmp.ne.s32.totalorder %s205, %s219
      %p221 = scmp.eq.s32.totalorder %s48, 0
      %p222 = por %p220, %p221
      %s224 = sadd.s32 %s223, 1
      %p227 = scmp.eq.s32.totalorder %s42, 1
      %p228 = scmp.ne.s32.totalorder %s223, %s225
      %p229 = scmp.eq.s32.totalorder %s42, 0
      %p230 = por %p228, %p229
      %p231 = scmp.ne.s32.totalorder %s223, %s225
      %p232 = scmp.eq.s32.totalorder %s47, 1
      %p233 = por %p231, %p232
      %p234 = scmp.ne.s32.totalorder %s225, %s226
      %p235 = scmp.eq.s32.totalorder %s47, 0
      %p236 = por %p234, %p235
      %p237 = scmp.ne.s32.totalorder %s225, %s226
      %p238 = scmp.eq.s32.totalorder %s48, 1
      %p239 = por %p237, %p238
      %p241 = scmp.ne.s32.totalorder %s226, %s240
      %p242 = scmp.eq.s32.totalorder %s48, 0
      %p243 = por %p241, %p242
      %s245 = sadd.s32 %s244, 1
      %p248 = scmp.eq.s32.totalorder %s42, 1
      %p249 = scmp.ne.s32.totalorder %s244, %s246
      %p250 = scmp.eq.s32.totalorder %s42, 0
      %p251 = por %p249, %p250
      %p252 = scmp.ne.s32.totalorder %s244, %s246
      %p253 = scmp.eq.s32.totalorder %s47, 1
      %p254 = por %p252, %p253
      %p255 = scmp.ne.s32.totalorder %s246, %s247
      %p256 = scmp.eq.s32.totalorder %s47, 0
      %p257 = por %p255, %p256
      %p258 = scmp.ne.s32.totalorder %s246, %s247
      %p259 = scmp.eq.s32.totalorder %s48, 1
      %p260 = por %p258, %p259
      %p262 = scmp.ne.s32.totalorder %s247, %s261
      %p263 = scmp.eq.s32.totalorder %s48, 0
      %p264 = por %p262, %p263
      %s266 = sadd.s32 %s265, 1
      %p269 = scmp.eq.s32.totalorder %s42, 1
      %p270 = scmp.ne.s32.totalorder %s265, %s267
      %p271 = scmp.eq.s32.totalorder %s42, 0
      %p272 = por %p270, %p271
      %p273 = scmp.ne.s32.totalorder %s265, %s267
      %p274 = scmp.eq.s32.totalorder %s47, 1
      %p275 = por %p273, %p274
      %p276 = scmp.ne.s32.totalorder %s267, %s268
      %p277 = scmp.eq.s32.totalorder %s47, 0
      %p278 = por %p276, %p277
      %p279 = scmp.ne.s32.totalorder %s267, %s268
      %p280 = scmp.eq.s32.totalorder %s48, 1
      %p281 = por %p279, %p280
      %p283 = scmp.ne.s32.totalorder %s268, %s282
      %p284 = scmp.eq.s32.totalorder %s48, 0
      %p285 = por %p283, %p284
      %s287 = sadd.s32 %s286, 1
      %p290 = scmp.eq.s32.totalorder %s42, 1
      %p291 = scmp.ne.s32.totalorder %s286, %s288
      %p292 = scmp.eq.s32.totalorder %s42, 0
      %p293 = por %p291, %p292
      %p294 = scmp.ne.s32.totalorder %s286, %s288
      %p295 = scmp.eq.s32.totalorder %s47, 1
      %p296 = por %p294, %p295
      %p297 = scmp.ne.s32.totalorder %s288, %s289
      %p298 = scmp.eq.s32.totalorder %s47, 0
      %p299 = por %p297, %p298
      %p300 = scmp.ne.s32.totalorder %s288, %s289
      %p301 = scmp.eq.s32.totalorder %s48, 1
      %p302 = por %p300, %p301
      %p304 = scmp.ne.s32.totalorder %s289, %s303
      %p305 = scmp.eq.s32.totalorder %s48, 0
      %p306 = por %p304, %p305
      %s308 = sadd.s32 %s307, 1
      %p311 = scmp.eq.s32.totalorder %s42, 1
      %p312 = scmp.ne.s32.totalorder %s307, %s309
      %p313 = scmp.eq.s32.totalorder %s42, 0
      %p314 = por %p312, %p313
      %p315 = scmp.ne.s32.totalorder %s307, %s309
      %p316 = scmp.eq.s32.totalorder %s47, 1
      %p317 = por %p315, %p316
      %p318 = scmp.ne.s32.totalorder %s309, %s310
      %p319 = scmp.eq.s32.totalorder %s47, 0
      %p320 = por %p318, %p319
      %p321 = scmp.ne.s32.totalorder %s309, %s310
      %p322 = scmp.eq.s32.totalorder %s48, 1
      %p323 = por %p321, %p322
      %p325 = scmp.ne.s32.totalorder %s310, %s324
      %p326 = scmp.eq.s32.totalorder %s48, 0
      %p327 = por %p325, %p326
      %s329 = sadd.s32 %s328, 1
      %p332 = scmp.eq.s32.totalorder %s42, 1
      %p333 = scmp.ne.s32.totalorder %s328, %s330
      %p334 = scmp.eq.s32.totalorder %s42, 0
      %p335 = por %p333, %p334
      %p336 = scmp.ne.s32.totalorder %s328, %s330
      %p337 = scmp.eq.s32.totalorder %s47, 1
      %p338 = por %p336, %p337
      %p339 = scmp.ne.s32.totalorder %s330, %s331
      %p340 = scmp.eq.s32.totalorder %s47, 0
      %p341 = por %p339, %p340
      %p342 = scmp.ne.s32.totalorder %s330, %s331
      %p343 = scmp.eq.s32.totalorder %s48, 1
      %p344 = por %p342, %p343
      %p346 = scmp.ne.s32.totalorder %s331, %s345
      %p347 = scmp.eq.s32.totalorder %s48, 0
      %p348 = por %p346, %p347
      %s350 = sadd.s32 %s349, 1
      %p353 = scmp.eq.s32.totalorder %s42, 1
      %p354 = scmp.ne.s32.totalorder %s349, %s351
      %p355 = scmp.eq.s32.totalorder %s42, 0
      %p356 = por %p354, %p355
      %p357 = scmp.ne.s32.totalorder %s349, %s351
      %p358 = scmp.eq.s32.totalorder %s47, 1
      %p359 = por %p357, %p358
      %p360 = scmp.ne.s32.totalorder %s351, %s352
      %p361 = scmp.eq.s32.totalorder %s47, 0
      %p362 = por %p360, %p361
      %p363 = scmp.ne.s32.totalorder %s351, %s352
      %p364 = scmp.eq.s32.totalorder %s48, 1
      %p365 = por %p363, %p364
      %p367 = scmp.ne.s32.totalorder %s352, %s366
      %p368 = scmp.eq.s32.totalorder %s48, 0
      %p369 = por %p367, %p368
      %s371 = sadd.s32 %s370, 1
      %p374 = scmp.eq.s32.totalorder %s42, 1
      %p375 = scmp.ne.s32.totalorder %s370, %s372
      %p376 = scmp.eq.s32.totalorder %s42, 0
      %p377 = por %p375, %p376
      %p378 = scmp.ne.s32.totalorder %s370, %s372
      %p379 = scmp.eq.s32.totalorder %s47, 1
      %p380 = por %p378, %p379
      %p381 = scmp.ne.s32.totalorder %s372, %s373
      %p382 = scmp.eq.s32.totalorder %s47, 0
      %p383 = por %p381, %p382
      %p384 = scmp.ne.s32.totalorder %s372, %s373
      %p385 = scmp.eq.s32.totalorder %s48, 1
      %p386 = por %p384, %p385
      %p388 = scmp.ne.s32.totalorder %s373, %s387
      %p389 = scmp.eq.s32.totalorder %s48, 0
      %p390 = por %p388, %p389
      %s392 = sadd.s32 %s391, 1
      %p395 = scmp.eq.s32.totalorder %s42, 1
      %p396 = scmp.ne.s32.totalorder %s391, %s393
      %p397 = scmp.eq.s32.totalorder %s42, 0
      %p398 = por %p396, %p397
      %p399 = scmp.ne.s32.totalorder %s391, %s393
      %p400 = scmp.eq.s32.totalorder %s47, 1
      %p401 = por %p399, %p400
      %p402 = scmp.ne.s32.totalorder %s393, %s394
      %p403 = scmp.eq.s32.totalorder %s47, 0
      %p404 = por %p402, %p403
      %p405 = scmp.ne.s32.totalorder %s393, %s394
      %p406 = scmp.eq.s32.totalorder %s48, 1
      %p407 = por %p405, %p406
      %p409 = scmp.ne.s32.totalorder %s394, %s408
      %p410 = scmp.eq.s32.totalorder %s48, 0
      %p411 = por %p409, %p410
      %s413 = sadd.s32 %s412, 1
      %p416 = scmp.eq.s32.totalorder %s42, 1
      %p417 = scmp.ne.s32.totalorder %s412, %s414
      %p418 = scmp.eq.s32.totalorder %s42, 0
      %p419 = por %p417, %p418
      %p420 = scmp.ne.s32.totalorder %s412, %s414
      %p421 = scmp.eq.s32.totalorder %s47, 1
      %p422 = por %p420, %p421
      %p423 = scmp.ne.s32.totalorder %s414, %s415
      %p424 = scmp.eq.s32.totalorder %s47, 0
      %p425 = por %p423, %p424
      %p426 = scmp.ne.s32.totalorder %s414, %s415
      %p427 = scmp.eq.s32.totalorder %s48, 1
      %p428 = por %p426, %p427
      %p430 = scmp.ne.s32.totalorder %s415, %s429
      %p431 = scmp.eq.s32.totalorder %s48, 0
      %p432 = por %p430, %p431
      %s434 = sadd.s32 %s433, 1
      %p437 = scmp.eq.s32.totalorder %s42, 1
      %p438 = scmp.ne.s32.totalorder %s433, %s435
      %p439 = scmp.eq.s32.totalorder %s42, 0
      %p440 = por %p438, %p439
      %p441 = scmp.ne.s32.totalorder %s433, %s435
      %p442 = scmp.eq.s32.totalorder %s47, 1
      %p443 = por %p441, %p442
      %p444 = scmp.ne.s32.totalorder %s435, %s436
      %p445 = scmp.eq.s32.totalorder %s47, 0
      %p446 = por %p444, %p445
      %p447 = scmp.ne.s32.totalorder %s435, %s436
      %p448 = scmp.eq.s32.totalorder %s48, 1
      %p449 = por %p447, %p448
      %p451 = scmp.ne.s32.totalorder %s436, %s450
      %p452 = scmp.eq.s32.totalorder %s48, 0
      %p453 = por %p451, %p452
      %s454 = ssub.s32 %s42, %s49
      %p455 = scmp.eq.s32.totalorder %s454, 0
      %s457 = sadd.s32 %s456, 1
      %s458 = scalar_select %p455, %s456, %s457
      %p461 = pneg %p455
      %p462 = scmp.eq.s32.totalorder %s42, 1
      %p463 = por %p461, %p462
      %p464 = scmp.ne.s32.totalorder %s456, %s459
      %p465 = scmp.eq.s32.totalorder %s42, 0
      %p466 = por %p464, %p465
      %p467 = scmp.ne.s32.totalorder %s456, %s459
      %p468 = scmp.eq.s32.totalorder %s47, 1
      %p469 = por %p467, %p468
      %p470 = scmp.ne.s32.totalorder %s459, %s460
      %p471 = scmp.eq.s32.totalorder %s47, 0
      %p472 = por %p470, %p471
      %p473 = scmp.ne.s32.totalorder %s459, %s460
      %p474 = scmp.eq.s32.totalorder %s48, 1
      %p475 = por %p473, %p474
      %p477 = scmp.ne.s32.totalorder %s460, %s476
      %p478 = scmp.eq.s32.totalorder %s48, 0
      %p479 = por %p477, %p478
      %p480 = scmp.le.s32.totalorder 1, %s42
      %p481 = scmp.lt.s32.totalorder %s42, 3
      %p482 = pnand %p480, %p481
      %p483 = pneg %p482
      // Predicated region
      $region9: #{tpu_custom_call.1} parent=5 // pred_check
        _
      $region10: #{tpu_custom_call.1} parent=5 // pred_check_branch
        %485 = sbr.rel (%p482) target = $region12
      $region11: #{tpu_custom_call.1} parent=5 // pred_region
        %s486 = ssub.s32 %s42, 1
        // Predicated region
        $region13: #{tpu_custom_call.1} parent=11 // pred_check
          %p487 = pneg %p89
        $region14: #{tpu_custom_call.1} parent=11 // pred_check_branch
          %489 = sbr.rel (%p487) target = $region16
        $region15: #{tpu_custom_call.1} parent=11 // pred_region
          %s491 = ssub.s32 16, 16
          %492 = vsyncadd [#allocation8], %s491
          %s494 = sshll.u32 [#allocation7], 4
          %s495 = int_to_ptr.vmem [resolvable:$true] %s494
          %497 = dma.hbm_to_vmem [thread:$0]  %s2, 16, %s495, [#allocation8]
        $region16: #{tpu_custom_call.1} parent=11 // pred_fallthru
          _
        // Predicated region
        $region17: #{tpu_custom_call.1} parent=11 // pred_check
          %p498 = pneg %p110
        $region18: #{tpu_custom_call.1} parent=11 // pred_check_branch
          %500 = sbr.rel (%p498) target = $region20
        $region19: #{tpu_custom_call.1} parent=11 // pred_region
          %s502 = ssub.s32 16, 16
          %503 = vsyncadd [#allocation8], %s502
          %s505 = sshll.u32 [#allocation9], 4
          %s506 = int_to_ptr.vmem [resolvable:$true] %s505
          %508 = dma.hbm_to_vmem [thread:$0]  %s3, 16, %s506, [#allocation8]
        $region20: #{tpu_custom_call.1} parent=11 // pred_fallthru
          _
        // Predicated region
        $region21: #{tpu_custom_call.1} parent=11 // pred_check
          %p509 = pneg %p131
        $region22: #{tpu_custom_call.1} parent=11 // pred_check_branch
          %511 = sbr.rel (%p509) target = $region24
        $region23: #{tpu_custom_call.1} parent=11 // pred_region
          _
        $region24: #{tpu_custom_call.1} parent=11 // pred_fallthru
          _
        // Predicated region
        $region25: #{tpu_custom_call.1} parent=11 // pred_check
          %p512 = pneg %p152
        $region26: #{tpu_custom_call.1} parent=11 // pred_check_branch
          %514 = sbr.rel (%p512) target = $region28
        $region27: #{tpu_custom_call.1} parent=11 // pred_region
          %s516 = ssub.s32 32, 32
          %517 = vsyncadd [#allocation11], %s516
          %s518 = sshll.u32 [#allocation10], 4
          %s519 = int_to_ptr.vmem [resolvable:$true] %s518
          %524 = dma.hbm_to_vmem [thread:$0]  %s5, 32, %s519, [#allocation11], 16, 16, 1
        $region28: #{tpu_custom_call.1} parent=11 // pred_fallthru
          _
        // Predicated region
        $region29: #{tpu_custom_call.1} parent=11 // pred_check
          %p525 = pneg %p173
        $region30: #{tpu_custom_call.1} parent=11 // pred_check_branch
          %527 = sbr.rel (%p525) target = $region32
        $region31: #{tpu_custom_call.1} parent=11 // pred_region
          _
        $region32: #{tpu_custom_call.1} parent=11 // pred_fallthru
          _
        // Predicated region
        $region33: #{tpu_custom_call.1} parent=11 // pred_check
          %p528 = pneg %p194
        $region34: #{tpu_custom_call.1} parent=11 // pred_check_branch
          %530 = sbr.rel (%p528) target = $region36
        $region35: #{tpu_custom_call.1} parent=11 // pred_region
          %s532 = ssub.s32 32, 32
          %533 = vsyncadd [#allocation11], %s532
          %s534 = sshll.u32 [#allocation12], 4
          %s535 = int_to_ptr.vmem [resolvable:$true] %s534
          %540 = dma.hbm_to_vmem [thread:$0]  %s7, 32, %s535, [#allocation11], 16, 16, 1
        $region36: #{tpu_custom_call.1} parent=11 // pred_fallthru
          _
        // Predicated region
        $region37: #{tpu_custom_call.1} parent=11 // pred_check
          %p541 = pneg %p215
        $region38: #{tpu_custom_call.1} parent=11 // pred_check_branch
          %543 = sbr.rel (%p541) target = $region40
        $region39: #{tpu_custom_call.1} parent=11 // pred_region
          %s545 = ssub.s32 32, 32
          %546 = vsyncadd [#allocation14], %s545
          %s547 = sshll.u32 [#allocation13], 4
          %s548 = int_to_ptr.vmem [resolvable:$true] %s547
          %553 = dma.hbm_to_vmem [thread:$0]  %s8, 32, %s548, [#allocation14], 16, 16, 1
        $region40: #{tpu_custom_call.1} parent=11 // pred_fallthru
          _
        // Predicated region
        $region41: #{tpu_custom_call.1} parent=11 // pred_check
          %p554 = pneg %p236
        $region42: #{tpu_custom_call.1} parent=11 // pred_check_branch
          %556 = sbr.rel (%p554) target = $region44
        $region43: #{tpu_custom_call.1} parent=11 // pred_region
          %s558 = ssub.s32 32, 32
          %559 = vsyncadd [#allocation14], %s558
          %s560 = sshll.u32 [#allocation15], 4
          %s561 = int_to_ptr.vmem [resolvable:$true] %s560
          %566 = dma.hbm_to_vmem [thread:$0]  %s9, 32, %s561, [#allocation14], 16, 16, 1
        $region44: #{tpu_custom_call.1} parent=11 // pred_fallthru
          _
        // Predicated region
        $region45: #{tpu_custom_call.1} parent=11 // pred_check
          %p567 = pneg %p257
        $region46: #{tpu_custom_call.1} parent=11 // pred_check_branch
          %569 = sbr.rel (%p567) target = $region48
        $region47: #{tpu_custom_call.1} parent=11 // pred_region
          _
        $region48: #{tpu_custom_call.1} parent=11 // pred_fallthru
          _
        // Predicated region
        $region49: #{tpu_custom_call.1} parent=11 // pred_check
          %p570 = pneg %p278
        $region50: #{tpu_custom_call.1} parent=11 // pred_check_branch
          %572 = sbr.rel (%p570) target = $region52
        $region51: #{tpu_custom_call.1} parent=11 // pred_region
          %s574 = ssub.s32 32, 32
          %575 = vsyncadd [#allocation17], %s574
          %s576 = sshll.u32 [#allocation16], 4
          %s577 = int_to_ptr.vmem [resolvable:$true] %s576
          %582 = dma.hbm_to_vmem [thread:$0]  %s11, 32, %s577, [#allocation17], 16, 16, 1
        $region52: #{tpu_custom_call.1} parent=11 // pred_fallthru
          _
        // Predicated region
        $region53: #{tpu_custom_call.1} parent=11 // pred_check
          %p583 = pneg %p299
        $region54: #{tpu_custom_call.1} parent=11 // pred_check_branch
          %585 = sbr.rel (%p583) target = $region56
        $region55: #{tpu_custom_call.1} parent=11 // pred_region
          _
        $region56: #{tpu_custom_call.1} parent=11 // pred_fallthru
          _
        // Predicated region
        $region57: #{tpu_custom_call.1} parent=11 // pred_check
          %p586 = pneg %p320
        $region58: #{tpu_custom_call.1} parent=11 // pred_check_branch
          %588 = sbr.rel (%p586) target = $region60
        $region59: #{tpu_custom_call.1} parent=11 // pred_region
          %s590 = ssub.s32 32, 32
          %591 = vsyncadd [#allocation17], %s590
          %s592 = sshll.u32 [#allocation18], 4
          %s593 = int_to_ptr.vmem [resolvable:$true] %s592
          %598 = dma.hbm_to_vmem [thread:$0]  %s13, 32, %s593, [#allocation17], 16, 16, 1
        $region60: #{tpu_custom_call.1} parent=11 // pred_fallthru
          _
        // Predicated region
        $region61: #{tpu_custom_call.1} parent=11 // pred_check
          %p599 = pneg %p341
        $region62: #{tpu_custom_call.1} parent=11 // pred_check_branch
          %601 = sbr.rel (%p599) target = $region64
        $region63: #{tpu_custom_call.1} parent=11 // pred_region
          %s603 = ssub.s32 32, 32
          %604 = vsyncadd [#allocation20], %s603
          %s605 = sshll.u32 [#allocation19], 4
          %s606 = int_to_ptr.vmem [resolvable:$true] %s605
          %611 = dma.hbm_to_vmem [thread:$0]  %s14, 32, %s606, [#allocation20], 16, 16, 1
        $region64: #{tpu_custom_call.1} parent=11 // pred_fallthru
          _
        // Predicated region
        $region65: #{tpu_custom_call.1} parent=11 // pred_check
          %p612 = pneg %p362
        $region66: #{tpu_custom_call.1} parent=11 // pred_check_branch
          %614 = sbr.rel (%p612) target = $region68
        $region67: #{tpu_custom_call.1} parent=11 // pred_region
          %s616 = ssub.s32 32, 32
          %617 = vsyncadd [#allocation20], %s616
          %s618 = sshll.u32 [#allocation21], 4
          %s619 = int_to_ptr.vmem [resolvable:$true] %s618
          %624 = dma.hbm_to_vmem [thread:$0]  %s15, 32, %s619, [#allocation20], 16, 16, 1
        $region68: #{tpu_custom_call.1} parent=11 // pred_fallthru
          _
        // Predicated region
        $region69: #{tpu_custom_call.1} parent=11 // pred_check
          %p625 = pneg %p383
        $region70: #{tpu_custom_call.1} parent=11 // pred_check_branch
          %627 = sbr.rel (%p625) target = $region72
        $region71: #{tpu_custom_call.1} parent=11 // pred_region
          _
        $region72: #{tpu_custom_call.1} parent=11 // pred_fallthru
          _
        // Predicated region
        $region73: #{tpu_custom_call.1} parent=11 // pred_check
          %p628 = pneg %p404
        $region74: #{tpu_custom_call.1} parent=11 // pred_check_branch
          %630 = sbr.rel (%p628) target = $region76
        $region75: #{tpu_custom_call.1} parent=11 // pred_region
          %s632 = ssub.s32 16, 16
          %633 = vsyncadd [#allocation23], %s632
          %s635 = sshll.u32 [#allocation22], 4
          %s636 = int_to_ptr.vmem [resolvable:$true] %s635
          %638 = dma.hbm_to_vmem [thread:$0]  %s17, 16, %s636, [#allocation23]
        $region76: #{tpu_custom_call.1} parent=11 // pred_fallthru
          _
        // Predicated region
        $region77: #{tpu_custom_call.1} parent=11 // pred_check
          %p639 = pneg %p425
        $region78: #{tpu_custom_call.1} parent=11 // pred_check_branch
          %641 = sbr.rel (%p639) target = $region80
        $region79: #{tpu_custom_call.1} parent=11 // pred_region
          _
        $region80: #{tpu_custom_call.1} parent=11 // pred_fallthru
          _
        // Predicated region
        $region81: #{tpu_custom_call.1} parent=11 // pred_check
          %p642 = pneg %p446
        $region82: #{tpu_custom_call.1} parent=11 // pred_check_branch
          %644 = sbr.rel (%p642) target = $region84
        $region83: #{tpu_custom_call.1} parent=11 // pred_region
          _
        $region84: #{tpu_custom_call.1} parent=11 // pred_fallthru
          _
      $region12: #{tpu_custom_call.1} parent=5 // pred_fallthru
        _
      %p645 = scmp.lt.s32.totalorder %s42, 2
      // Predicated region
      $region85: #{tpu_custom_call.1} parent=5 // pred_check
        %p646 = pneg %p645
      $region86: #{tpu_custom_call.1} parent=5 // pred_check_branch
        %648 = sbr.rel (%p646) target = $region88
      $region87: #{tpu_custom_call.1} parent=5 // pred_region
        // Predicated region
        $region89: #{tpu_custom_call.1} parent=87 // pred_check
          %p649 = pneg %p62
        $region90: #{tpu_custom_call.1} parent=87 // pred_check_branch
          %651 = sbr.rel (%p649) target = $region92
        $region91: #{tpu_custom_call.1} parent=87 // pred_region
          %s652 = sand.u32 %s52, 1
          %s653 = scalar_lea.sflag [#allocation5], %s652
          %s654 = sand.u32 %s52, 1
          %s655 = smul.addr %s654, 4
          %s656 = scalar_lea.vmem [#allocation4], %s655
          %s658 = ssub.s32 64, 64
          %659 = vsyncadd %s653, %s658
          %s660 = smul.addr %s42, 64
          %s661 = scalar_lea.hbm %s1, %s660
          %s663 = sshll.u32 %s656, 4
          %s664 = int_to_ptr.vmem [resolvable:$true] %s663
          %666 = dma.hbm_to_vmem [thread:$0]  %s661, 64, %s664, %s653
        $region92: #{tpu_custom_call.1} parent=87 // pred_fallthru
          _
      $region88: #{tpu_custom_call.1} parent=5 // pred_fallthru
        _
      %p667 = scmp.le.s32.totalorder 1, %s42
      %p668 = scmp.lt.s32.totalorder %s42, 3
      %p669 = pnand %p667, %p668
      %p670 = pneg %p669
      // Predicated region
      $region93: #{tpu_custom_call.1} parent=5 // pred_check
        _
      $region94: #{tpu_custom_call.1} parent=5 // pred_check_branch
        %672 = sbr.rel (%p669) target = $region96
      $region95: #{tpu_custom_call.1} parent=5 // pred_region
        %s673 = ssub.s32 %s42, 1
        %s674 = sand.u32 %s55, 1
        %s675 = scalar_lea.sflag [#allocation5], %s674
        %s676 = sand.u32 %s55, 1
        %s677 = smul.addr %s676, 4
        %s678 = scalar_lea.vmem [#allocation4], %s677
        // Predicated region
        $region97: #{tpu_custom_call.1} parent=95 // pred_check
          %p679 = pneg %p68
        $region98: #{tpu_custom_call.1} parent=95 // pred_check_branch
          %681 = sbr.rel (%p679) target = $region100
        $region99: #{tpu_custom_call.1} parent=95 // pred_region
          %682 = dma.done %s675, 64
        $region100: #{tpu_custom_call.1} parent=95 // pred_fallthru
          _
        // Predicated region
        $region101: #{tpu_custom_call.1} parent=95 // pred_check
          %p683 = pneg %p89
        $region102: #{tpu_custom_call.1} parent=95 // pred_check_branch
          %685 = sbr.rel (%p683) target = $region104
        $region103: #{tpu_custom_call.1} parent=95 // pred_region
          %686 = dma.done [#allocation8], 16
        $region104: #{tpu_custom_call.1} parent=95 // pred_fallthru
          _
        // Predicated region
        $region105: #{tpu_custom_call.1} parent=95 // pred_check
          %p687 = pneg %p110
        $region106: #{tpu_custom_call.1} parent=95 // pred_check_branch
          %689 = sbr.rel (%p687) target = $region108
        $region107: #{tpu_custom_call.1} parent=95 // pred_region
          %690 = dma.done [#allocation8], 16
        $region108: #{tpu_custom_call.1} parent=95 // pred_fallthru
          _
        // Predicated region
        $region109: #{tpu_custom_call.1} parent=95 // pred_check
          %p691 = pneg %p152
        $region110: #{tpu_custom_call.1} parent=95 // pred_check_branch
          %693 = sbr.rel (%p691) target = $region112
        $region111: #{tpu_custom_call.1} parent=95 // pred_region
          %694 = dma.done [#allocation11], 32
        $region112: #{tpu_custom_call.1} parent=95 // pred_fallthru
          _
        // Predicated region
        $region113: #{tpu_custom_call.1} parent=95 // pred_check
          %p695 = pneg %p194
        $region114: #{tpu_custom_call.1} parent=95 // pred_check_branch
          %697 = sbr.rel (%p695) target = $region116
        $region115: #{tpu_custom_call.1} parent=95 // pred_region
          %698 = dma.done [#allocation11], 32
        $region116: #{tpu_custom_call.1} parent=95 // pred_fallthru
          _
        // Predicated region
        $region117: #{tpu_custom_call.1} parent=95 // pred_check
          %p699 = pneg %p215
        $region118: #{tpu_custom_call.1} parent=95 // pred_check_branch
          %701 = sbr.rel (%p699) target = $region120
        $region119: #{tpu_custom_call.1} parent=95 // pred_region
          %702 = dma.done [#allocation14], 32
        $region120: #{tpu_custom_call.1} parent=95 // pred_fallthru
          _
        // Predicated region
        $region121: #{tpu_custom_call.1} parent=95 // pred_check
          %p703 = pneg %p236
        $region122: #{tpu_custom_call.1} parent=95 // pred_check_branch
          %705 = sbr.rel (%p703) target = $region124
        $region123: #{tpu_custom_call.1} parent=95 // pred_region
          %706 = dma.done [#allocation14], 32
        $region124: #{tpu_custom_call.1} parent=95 // pred_fallthru
          _
        // Predicated region
        $region125: #{tpu_custom_call.1} parent=95 // pred_check
          %p707 = pneg %p278
        $region126: #{tpu_custom_call.1} parent=95 // pred_check_branch
          %709 = sbr.rel (%p707) target = $region128
        $region127: #{tpu_custom_call.1} parent=95 // pred_region
          %710 = dma.done [#allocation17], 32
        $region128: #{tpu_custom_call.1} parent=95 // pred_fallthru
          _
        // Predicated region
        $region129: #{tpu_custom_call.1} parent=95 // pred_check
          %p711 = pneg %p320
        $region130: #{tpu_custom_call.1} parent=95 // pred_check_branch
          %713 = sbr.rel (%p711) target = $region132
        $region131: #{tpu_custom_call.1} parent=95 // pred_region
          %714 = dma.done [#allocation17], 32
        $region132: #{tpu_custom_call.1} parent=95 // pred_fallthru
          _
        // Predicated region
        $region133: #{tpu_custom_call.1} parent=95 // pred_check
          %p715 = pneg %p341
        $region134: #{tpu_custom_call.1} parent=95 // pred_check_branch
          %717 = sbr.rel (%p715) target = $region136
        $region135: #{tpu_custom_call.1} parent=95 // pred_region
          %718 = dma.done [#allocation20], 32
        $region136: #{tpu_custom_call.1} parent=95 // pred_fallthru
          _
        // Predicated region
        $region137: #{tpu_custom_call.1} parent=95 // pred_check
          %p719 = pneg %p362
        $region138: #{tpu_custom_call.1} parent=95 // pred_check_branch
          %721 = sbr.rel (%p719) target = $region140
        $region139: #{tpu_custom_call.1} parent=95 // pred_region
          %722 = dma.done [#allocation20], 32
        $region140: #{tpu_custom_call.1} parent=95 // pred_fallthru
          _
        // Predicated region
        $region141: #{tpu_custom_call.1} parent=95 // pred_check
          %p723 = pneg %p404
        $region142: #{tpu_custom_call.1} parent=95 // pred_check_branch
          %725 = sbr.rel (%p723) target = $region144
        $region143: #{tpu_custom_call.1} parent=95 // pred_region
          %726 = dma.done [#allocation23], 16
        $region144: #{tpu_custom_call.1} parent=95 // pred_fallthru
          _
        %s727 = sand.u32 %s55, 1
        %s728 = scalar_lea.sflag [#allocation5], %s727
        %s729 = sand.u32 %s55, 1
        %s730 = smul.addr %s729, 4
        %s731 = scalar_lea.vmem [#allocation4], %s730
        %p732 = pneg %p68
        %p733 = pneg %p65
        %p734 = pneg %p89
        %p735 = pneg %p86
        %p736 = pneg %p110
        %p737 = pneg %p107
        %p738 = pneg %p131
        %p739 = pneg %p128
        %p740 = pneg %p152
        %p741 = pneg %p149
        %p742 = pneg %p173
        %p743 = pneg %p170
        %p744 = pneg %p194
        %p745 = pneg %p191
        %p746 = pneg %p215
        %p747 = pneg %p212
        %p748 = pneg %p236
        %p749 = pneg %p233
        %p750 = pneg %p257
        %p751 = pneg %p254
        %p752 = pneg %p278
        %p753 = pneg %p275
        %p754 = pneg %p299
        %p755 = pneg %p296
        %p756 = pneg %p320
        %p757 = pneg %p317
        %p758 = pneg %p341
        %p759 = pneg %p338
        %p760 = pneg %p362
        %p761 = pneg %p359
        %p762 = pneg %p383
        %p763 = pneg %p380
        %p764 = pneg %p404
        %p765 = pneg %p401
        %p766 = pneg %p425
        %p767 = pneg %p422
        %p768 = pneg %p446
        %p769 = pneg %p443
        %p770 = pneg %p472
        %p771 = pneg %p469
        %s772 = sand.u32 %s459, 1
        %s773 = scalar_lea.sflag [#allocation6], %s772
        %s774 = sand.u32 %s459, 1
        %s775 = smul.addr %s774, 8
        %s776 = scalar_lea.vmem [#allocation24], %s775
        %s778 = sld [smem:[#allocation3 + %s47]]
        %v779 = vlaneseq
        %v780 = vand.u32 %v779, 127
        %v781 = vstv %s778
        %vm782 = vcmp.lt.s32.totalorder %v780, %v781
        %v783 = vsel %vm782, 0.0, -1e+09
        %v784 = vld [vmem:[%s678] sm:$0xf]
        %v785 = vunpack.c.l.bf16 %v784
        %v786 = vld [vmem:[#allocation7] sm:$0x1]
        %v787 = vld [vmem:[#allocation9] sm:$0x1]
        %vm788 = vcmask 261120
        %v789 = vsel %vm788, %v785, 0.0
        %790 = vadd.xlane.f32.xlu0 %v789
        %v791 = vpop.xlane.xlu0 %790
        %v792 = vrcp.pop 32.0
        %v793 = vmul.f32 %v791, %v792
        %v794 = vsub.f32 %v785, %v793
        %v795 = vmul.f32 %v794, %v794
        %v796 = vsel %vm788, %v795, 0.0
        %797 = vadd.xlane.f32.xlu0 %v796
        %v798 = vpop.xlane.xlu0 %797
        %v799 = vmul.f32 %v798, %v792
        %v800 = vadd.f32 %v799, 1e-12
        %v801 = vrsqrt.pop %v800
        %v802 = vmul.f32 %v794, %v801
        %v804 = vlaneseq
        %v805 = vshrl.u32 %v804, 7
        %v806 = vsub.s32 0, %v805
        %v807 = vrot.slane %v786, %v806
        %v809 = vmul.f32 %v802, %v807
        %v811 = vlaneseq
        %v812 = vshrl.u32 %v811, 7
        %v813 = vsub.s32 0, %v812
        %v814 = vrot.slane %v787, %v813
        %v816 = vadd.f32 %v809, %v814
        %v817 = vpack.c.bf16 %v816, %v816
        %v818 = vld [vmem:[%s4] sm:$0xf]
        %v819 = vld [vmem:[%s4 + $0x4] sm:$0xf]
        %v820 = vld [vmem:[%s4 + $0x8] sm:$0xf]
        %v821 = vld [vmem:[%s4 + $0xc] sm:$0xf]
        %v822 = vld [vmem:[#allocation10] sm:$0x1]
        %v824 = vlaneseq
        %v825 = vshrl.u32 %v824, 7
        %v826 = vsub.s32 0, %v825
        %v827 = vrot.slane %v822, %v826
        %v833 = vunpack.c.l.b16 %v818
        %v834 = vunpack.c.l.b16 %v819
        %v835 = vunpack.c.l.b16 %v820
        %v836 = vunpack.c.l.b16 %v821
        %v837 = vpack.c.b16 %v834, %v833
        %v838 = vpack.c.b16 %v836, %v835
        %v842 = vsel %vm788, %v817, 0
        %844 = vmatprep.subr.bf16.mxu0 0
        %845 = vmatpush1.bf16.msra.mxu0 %v837
        %846 = vmatprep.subr.bf16.mxu0 0
        %847 = vmatpush1.bf16.msra.mxu0 %v838
        %848 = vmatprep.subr.bf16.mxu0 0
        %849 = vmatpush1.bf16.msra.mxu0 0
        %850 = vmatprep.subr.bf16.mxu0 0
        %851 = vmatpush1.bf16.msra.mxu0 0
        %852 = vmatprep.subr.bf16.mxu0 0
        %853 = vmatpush1.bf16.msra.mxu0 0
        %854 = vmatprep.subr.bf16.mxu0 0
        %855 = vmatpush1.bf16.msra.mxu0 0
        %856 = vmatprep.subr.bf16.mxu0 0
        %857 = vmatpush1.bf16.msra.mxu0 0
        %858 = vmatprep.subr.bf16.mxu0 0
        %859 = vmatpush1.bf16.msra.mxu0 0
        %860 = vmatprep.subr.bf16.mxu0 0
        %861 = vmatpush1.bf16.msra.mxu0 0
        %862 = vmatprep.subr.bf16.mxu0 0
        %863 = vmatpush1.bf16.msra.mxu0 0
        %864 = vmatprep.subr.bf16.mxu0 0
        %865 = vmatpush1.bf16.msra.mxu0 0
        %866 = vmatprep.subr.bf16.mxu0 0
        %867 = vmatpush1.bf16.msra.mxu0 0
        %868 = vmatprep.subr.bf16.mxu0 0
        %869 = vmatpush1.bf16.msra.mxu0 0
        %870 = vmatprep.subr.bf16.mxu0 0
        %871 = vmatpush1.bf16.msra.mxu0 0
        %872 = vmatprep.subr.bf16.mxu0 0
        %873 = vmatpush1.bf16.msra.mxu0 0
        %874 = vmatprep.subr.bf16.mxu0 0
        %875 = vmatpush1.bf16.msra.mxu0 0
        %876 = vmatprep.mubr.bf16.mxu0 0
        %877 = vmatmul.mubr.bf16.gmra.mrb[0].mxu0 %v842
        %v878 = vpop.f32.mrb[0].mxu0
        %v879 = vadd.f32 %v827, %v878
        %v880 = vpop.f32.mrb[0].mxu0
        %v881 = vpop.f32.mrb[0].mxu0
        %v882 = vpop.f32.mrb[0].mxu0
        %883 = vdwg.mxu0
        %885 = vrot.lane.b32.xlu0 %v879, 96
        %v886 = vpop.permute.xlu0 %885
        %vm887 = vcmask 130048
        %v888 = vsel %vm887, %v879, 0
        %v890 = vsel %vm887, %v886, 0
        %892 = vmatprep.subr.mxu0 0.0
        %893 = vmatpush1.xpose.msra.mxu0 %v890
        %894 = vmatprep.subr.mxu0 0.0
        %895 = vmatpush1.xpose.msra.mxu0 0.0
        %896 = vmatprep.subr.mxu0 0.0
        %897 = vmatpush1.xpose.msra.mxu0 0.0
        %898 = vmatprep.subr.mxu0 0.0
        %899 = vmatpush1.xpose.msra.mxu0 0.0
        %900 = vmatprep.subr.mxu0 0.0
        %901 = vmatpush1.xpose.msra.mxu0 0.0
        %902 = vmatprep.subr.mxu0 0.0
        %903 = vmatpush1.xpose.msra.mxu0 0.0
        %904 = vmatprep.subr.mxu0 0.0
        %905 = vmatpush1.xpose.msra.mxu0 0.0
        %906 = vmatprep.subr.mxu0 0.0
        %907 = vmatpush1.xpose.msra.mxu0 0.0
        %908 = vmatprep.subr.mxu0 0.0
        %909 = vmatpush1.xpose.msra.mxu0 0.0
        %910 = vmatprep.subr.mxu0 0.0
        %911 = vmatpush1.xpose.msra.mxu0 0.0
        %912 = vmatprep.subr.mxu0 0.0
        %913 = vmatpush1.xpose.msra.mxu0 0.0
        %914 = vmatprep.subr.mxu0 0.0
        %915 = vmatpush1.xpose.msra.mxu0 0.0
        %916 = vmatprep.subr.mxu0 0.0
        %917 = vmatpush1.xpose.msra.mxu0 0.0
        %918 = vmatprep.subr.mxu0 0.0
        %919 = vmatpush1.xpose.msra.mxu0 0.0
        %920 = vmatprep.subr.mxu0 0.0
        %921 = vmatpush1.xpose.msra.mxu0 0.0
        %922 = vmatprep.subr.mxu0 0.0
        %923 = vmatpush1.xpose.msra.mxu0 0.0
        %924 = vmatprep.subr.mxu0 0.0
        %925 = vmatpush1.xpose.msra.mxu0 0.0
        %926 = vmatprep.subr.mxu0 0.0
        %927 = vmatpush1.xpose.msra.mxu0 0.0
        %928 = vmatprep.subr.mxu0 0.0
        %929 = vmatpush1.xpose.msra.mxu0 0.0
        %930 = vmatprep.subr.mxu0 0.0
        %931 = vmatpush1.xpose.msra.mxu0 0.0
        %932 = vmatprep.subr.mxu0 0.0
        %933 = vmatpush1.xpose.msra.mxu0 0.0
        %934 = vmatprep.subr.mxu0 0.0
        %935 = vmatpush1.xpose.msra.mxu0 0.0
        %936 = vmatprep.subr.mxu0 0.0
        %937 = vmatpush1.xpose.msra.mxu0 0.0
        %938 = vmatprep.subr.mxu0 0.0
        %939 = vmatpush1.xpose.msra.mxu0 0.0
        %940 = vmatprep.subr.mxu0 0.0
        %941 = vmatpush1.xpose.msra.mxu0 0.0
        %942 = vmatprep.subr.mxu0 0.0
        %943 = vmatpush1.xpose.msra.mxu0 0.0
        %944 = vmatprep.subr.mxu0 0.0
        %945 = vmatpush1.xpose.msra.mxu0 0.0
        %946 = vmatprep.subr.mxu0 0.0
        %947 = vmatpush1.xpose.msra.mxu0 0.0
        %948 = vmatprep.subr.mxu0 0.0
        %949 = vmatpush1.xpose.msra.mxu0 0.0
        %950 = vmatprep.subr.mxu0 0.0
        %951 = vmatpush1.xpose.msra.mxu0 0.0
        %952 = vmatprep.subr.mxu0 0.0
        %953 = vmatpush1.xpose.msra.mxu0 0.0
        %954 = vmatprep.subr.mxu0 0.0
        %955 = vmatpush1.xpose.msra.mxu0 0.0
        %956 = vmatprep.mubr.f32.mxu0 0.0
        %957 = vmatmul.mubr.f32.gmra.mrb[0].mxu0 %v888
        %v958 = vpop.f32.mrb[0].mxu0
        %v959 = vadd.f32 %v783, %v958
        %v960 = vpop.f32.mrb[0].mxu0
        %961 = vdwg.mxu0
        %vm962 = vcmask 64512
        %v963 = vsel %vm962, %v959, -inf
        %964 = vmax.xlane.f32.xlu0 %v963
        %v965 = vpop.xlane.xlu0 %964
        %v966 = vsub.f32 %v959, %v965
        %v967 = vmul.f32 %v966, 1.442695
        %v968 = vpow.pop %v967
        %v969 = vsel %vm962, %v968, 0.0
        %970 = vadd.xlane.f32.xlu0 %v969
        %v971 = vpop.xlane.xlu0 %970
        %v972 = vrcp.pop %v971
        %v973 = vmul.f32 %v968, %v972
        %974 = vrot.lane.b32.xlu0 %v879, 64
        %v975 = vpop.permute.xlu0 %974
        %v978 = vsel %vm962, %v973, 0
        %980 = vmatprep.subr.mxu0 0.0
        %981 = vmatpush1.msra.mxu0 %v975
        %982 = vmatprep.subr.mxu0 0.0
        %983 = vmatpush1.msra.mxu0 0.0
        %984 = vmatprep.subr.mxu0 0.0
        %985 = vmatpush1.msra.mxu0 0.0
        %986 = vmatprep.subr.mxu0 0.0
        %987 = vmatpush1.msra.mxu0 0.0
        %988 = vmatprep.subr.mxu0 0.0
        %989 = vmatpush1.msra.mxu0 0.0
        %990 = vmatprep.subr.mxu0 0.0
        %991 = vmatpush1.msra.mxu0 0.0
        %992 = vmatprep.subr.mxu0 0.0
        %993 = vmatpush1.msra.mxu0 0.0
        %994 = vmatprep.subr.mxu0 0.0
        %995 = vmatpush1.msra.mxu0 0.0
        %996 = vmatprep.subr.mxu0 0.0
        %997 = vmatpush1.msra.mxu0 0.0
        %998 = vmatprep.subr.mxu0 0.0
        %999 = vmatpush1.msra.mxu0 0.0
        %1000 = vmatprep.subr.mxu0 0.0
        %1001 = vmatpush1.msra.mxu0 0.0
        %1002 = vmatprep.subr.mxu0 0.0
        %1003 = vmatpush1.msra.mxu0 0.0
        %1004 = vmatprep.subr.mxu0 0.0
        %1005 = vmatpush1.msra.mxu0 0.0
        %1006 = vmatprep.subr.mxu0 0.0
        %1007 = vmatpush1.msra.mxu0 0.0
        %1008 = vmatprep.subr.mxu0 0.0
        %1009 = vmatpush1.msra.mxu0 0.0
        %1010 = vmatprep.subr.mxu0 0.0
        %1011 = vmatpush1.msra.mxu0 0.0
        %1012 = vmatprep.subr.mxu0 0.0
        %1013 = vmatpush1.msra.mxu0 0.0
        %1014 = vmatprep.subr.mxu0 0.0
        %1015 = vmatpush1.msra.mxu0 0.0
        %1016 = vmatprep.subr.mxu0 0.0
        %1017 = vmatpush1.msra.mxu0 0.0
        %1018 = vmatprep.subr.mxu0 0.0
        %1019 = vmatpush1.msra.mxu0 0.0
        %1020 = vmatprep.subr.mxu0 0.0
        %1021 = vmatpush1.msra.mxu0 0.0
        %1022 = vmatprep.subr.mxu0 0.0
        %1023 = vmatpush1.msra.mxu0 0.0
        %1024 = vmatprep.subr.mxu0 0.0
        %1025 = vmatpush1.msra.mxu0 0.0
        %1026 = vmatprep.subr.mxu0 0.0
        %1027 = vmatpush1.msra.mxu0 0.0
        %1028 = vmatprep.subr.mxu0 0.0
        %1029 = vmatpush1.msra.mxu0 0.0
        %1030 = vmatprep.subr.mxu0 0.0
        %1031 = vmatpush1.msra.mxu0 0.0
        %1032 = vmatprep.subr.mxu0 0.0
        %1033 = vmatpush1.msra.mxu0 0.0
        %1034 = vmatprep.subr.mxu0 0.0
        %1035 = vmatpush1.msra.mxu0 0.0
        %1036 = vmatprep.subr.mxu0 0.0
        %1037 = vmatpush1.msra.mxu0 0.0
        %1038 = vmatprep.subr.mxu0 0.0
        %1039 = vmatpush1.msra.mxu0 0.0
        %1040 = vmatprep.subr.mxu0 0.0
        %1041 = vmatpush1.msra.mxu0 0.0
        %1042 = vmatprep.subr.mxu0 0.0
        %1043 = vmatpush1.msra.mxu0 0.0
        %1044 = vmatprep.mubr.f32.mxu0 0.0
        %1045 = vmatmul.mubr.f32.gmra.mrb[0].mxu0 %v978
        %v1046 = vpop.f32.mrb[0].mxu0
        %v1047 = vadd.f32 0.0, %v1046
        %v1048 = vpop.f32.mrb[0].mxu0
        %1049 = vdwg.mxu0
        %1050 = vrot.lane.b32.xlu0 %v879, 112
        %v1051 = vpop.permute.xlu0 %1050
        %1052 = vrot.lane.b32.xlu0 %v879, 80
        %v1053 = vpop.permute.xlu0 %1052
        %v1054 = vsel %vm887, %v1051, 0
        %v1056 = vsel %vm887, %v1053, 0
        %1058 = vmatprep.subr.mxu0 0.0
        %1059 = vmatpush1.xpose.msra.mxu0 %v1056
        %1060 = vmatprep.subr.mxu0 0.0
        %1061 = vmatpush1.xpose.msra.mxu0 0.0
        %1062 = vmatprep.subr.mxu0 0.0
        %1063 = vmatpush1.xpose.msra.mxu0 0.0
        %1064 = vmatprep.subr.mxu0 0.0
        %1065 = vmatpush1.xpose.msra.mxu0 0.0
        %1066 = vmatprep.subr.mxu0 0.0
        %1067 = vmatpush1.xpose.msra.mxu0 0.0
        %1068 = vmatprep.subr.mxu0 0.0
        %1069 = vmatpush1.xpose.msra.mxu0 0.0
        %1070 = vmatprep.subr.mxu0 0.0
        %1071 = vmatpush1.xpose.msra.mxu0 0.0
        %1072 = vmatprep.subr.mxu0 0.0
        %1073 = vmatpush1.xpose.msra.mxu0 0.0
        %1074 = vmatprep.subr.mxu0 0.0
        %1075 = vmatpush1.xpose.msra.mxu0 0.0
        %1076 = vmatprep.subr.mxu0 0.0
        %1077 = vmatpush1.xpose.msra.mxu0 0.0
        %1078 = vmatprep.subr.mxu0 0.0
        %1079 = vmatpush1.xpose.msra.mxu0 0.0
        %1080 = vmatprep.subr.mxu0 0.0
        %1081 = vmatpush1.xpose.msra.mxu0 0.0
        %1082 = vmatprep.subr.mxu0 0.0
        %1083 = vmatpush1.xpose.msra.mxu0 0.0
        %1084 = vmatprep.subr.mxu0 0.0
        %1085 = vmatpush1.xpose.msra.mxu0 0.0
        %1086 = vmatprep.subr.mxu0 0.0
        %1087 = vmatpush1.xpose.msra.mxu0 0.0
        %1088 = vmatprep.subr.mxu0 0.0
        %1089 = vmatpush1.xpose.msra.mxu0 0.0
        %1090 = vmatprep.subr.mxu0 0.0
        %1091 = vmatpush1.xpose.msra.mxu0 0.0
        %1092 = vmatprep.subr.mxu0 0.0
        %1093 = vmatpush1.xpose.msra.mxu0 0.0
        %1094 = vmatprep.subr.mxu0 0.0
        %1095 = vmatpush1.xpose.msra.mxu0 0.0
        %1096 = vmatprep.subr.mxu0 0.0
        %1097 = vmatpush1.xpose.msra.mxu0 0.0
        %1098 = vmatprep.subr.mxu0 0.0
        %1099 = vmatpush1.xpose.msra.mxu0 0.0
        %1100 = vmatprep.subr.mxu0 0.0
        %1101 = vmatpush1.xpose.msra.mxu0 0.0
        %1102 = vmatprep.subr.mxu0 0.0
        %1103 = vmatpush1.xpose.msra.mxu0 0.0
        %1104 = vmatprep.subr.mxu0 0.0
        %1105 = vmatpush1.xpose.msra.mxu0 0.0
        %1106 = vmatprep.subr.mxu0 0.0
        %1107 = vmatpush1.xpose.msra.mxu0 0.0
        %1108 = vmatprep.subr.mxu0 0.0
        %1109 = vmatpush1.xpose.msra.mxu0 0.0
        %1110 = vmatprep.subr.mxu0 0.0
        %1111 = vmatpush1.xpose.msra.mxu0 0.0
        %1112 = vmatprep.subr.mxu0 0.0
        %1113 = vmatpush1.xpose.msra.mxu0 0.0
        %1114 = vmatprep.subr.mxu0 0.0
        %1115 = vmatpush1.xpose.msra.mxu0 0.0
        %1116 = vmatprep.subr.mxu0 0.0
        %1117 = vmatpush1.xpose.msra.mxu0 0.0
        %1118 = vmatprep.subr.mxu0 0.0
        %1119 = vmatpush1.xpose.msra.mxu0 0.0
        %1120 = vmatprep.subr.mxu0 0.0
        %1121 = vmatpush1.xpose.msra.mxu0 0.0
        %1122 = vmatprep.mubr.f32.mxu0 0.0
        %1123 = vmatmul.mubr.f32.gmra.mrb[0].mxu0 %v1054
        %v1124 = vpop.f32.mrb[0].mxu0
        %v1125 = vadd.f32 %v783, %v1124
        %v1126 = vpop.f32.mrb[0].mxu0
        %1127 = vdwg.mxu0
        %v1128 = vsel %vm962, %v1125, -inf
        %1129 = vmax.xlane.f32.xlu0 %v1128
        %v1130 = vpop.xlane.xlu0 %1129
        %v1131 = vsub.f32 %v1125, %v1130
        %v1132 = vmul.f32 %v1131, 1.442695
        %v1133 = vpow.pop %v1132
        %v1134 = vsel %vm962, %v1133, 0.0
        %1135 = vadd.xlane.f32.xlu0 %v1134
        %v1136 = vpop.xlane.xlu0 %1135
        %v1137 = vrcp.pop %v1136
        %v1138 = vmul.f32 %v1133, %v1137
        %1139 = vrot.lane.b32.xlu0 %v879, 48
        %v1140 = vpop.permute.xlu0 %1139
        %v1143 = vsel %vm962, %v1138, 0
        %1145 = vmatprep.subr.mxu0 0.0
        %1146 = vmatpush1.msra.mxu0 %v1140
        %1147 = vmatprep.subr.mxu0 0.0
        %1148 = vmatpush1.msra.mxu0 0.0
        %1149 = vmatprep.subr.mxu0 0.0
        %1150 = vmatpush1.msra.mxu0 0.0
        %1151 = vmatprep.subr.mxu0 0.0
        %1152 = vmatpush1.msra.mxu0 0.0
        %1153 = vmatprep.subr.mxu0 0.0
        %1154 = vmatpush1.msra.mxu0 0.0
        %1155 = vmatprep.subr.mxu0 0.0
        %1156 = vmatpush1.msra.mxu0 0.0
        %1157 = vmatprep.subr.mxu0 0.0
        %1158 = vmatpush1.msra.mxu0 0.0
        %1159 = vmatprep.subr.mxu0 0.0
        %1160 = vmatpush1.msra.mxu0 0.0
        %1161 = vmatprep.subr.mxu0 0.0
        %1162 = vmatpush1.msra.mxu0 0.0
        %1163 = vmatprep.subr.mxu0 0.0
        %1164 = vmatpush1.msra.mxu0 0.0
        %1165 = vmatprep.subr.mxu0 0.0
        %1166 = vmatpush1.msra.mxu0 0.0
        %1167 = vmatprep.subr.mxu0 0.0
        %1168 = vmatpush1.msra.mxu0 0.0
        %1169 = vmatprep.subr.mxu0 0.0
        %1170 = vmatpush1.msra.mxu0 0.0
        %1171 = vmatprep.subr.mxu0 0.0
        %1172 = vmatpush1.msra.mxu0 0.0
        %1173 = vmatprep.subr.mxu0 0.0
        %1174 = vmatpush1.msra.mxu0 0.0
        %1175 = vmatprep.subr.mxu0 0.0
        %1176 = vmatpush1.msra.mxu0 0.0
        %1177 = vmatprep.subr.mxu0 0.0
        %1178 = vmatpush1.msra.mxu0 0.0
        %1179 = vmatprep.subr.mxu0 0.0
        %1180 = vmatpush1.msra.mxu0 0.0
        %1181 = vmatprep.subr.mxu0 0.0
        %1182 = vmatpush1.msra.mxu0 0.0
        %1183 = vmatprep.subr.mxu0 0.0
        %1184 = vmatpush1.msra.mxu0 0.0
        %1185 = vmatprep.subr.mxu0 0.0
        %1186 = vmatpush1.msra.mxu0 0.0
        %1187 = vmatprep.subr.mxu0 0.0
        %1188 = vmatpush1.msra.mxu0 0.0
        %1189 = vmatprep.subr.mxu0 0.0
        %1190 = vmatpush1.msra.mxu0 0.0
        %1191 = vmatprep.subr.mxu0 0.0
        %1192 = vmatpush1.msra.mxu0 0.0
        %1193 = vmatprep.subr.mxu0 0.0
        %1194 = vmatpush1.msra.mxu0 0.0
        %1195 = vmatprep.subr.mxu0 0.0
        %1196 = vmatpush1.msra.mxu0 0.0
        %1197 = vmatprep.subr.mxu0 0.0
        %1198 = vmatpush1.msra.mxu0 0.0
        %1199 = vmatprep.subr.mxu0 0.0
        %1200 = vmatpush1.msra.mxu0 0.0
        %1201 = vmatprep.subr.mxu0 0.0
        %1202 = vmatpush1.msra.mxu0 0.0
        %1203 = vmatprep.subr.mxu0 0.0
        %1204 = vmatpush1.msra.mxu0 0.0
        %1205 = vmatprep.subr.mxu0 0.0
        %1206 = vmatpush1.msra.mxu0 0.0
        %1207 = vmatprep.subr.mxu0 0.0
        %1208 = vmatpush1.msra.mxu0 0.0
        %1209 = vmatprep.mubr.f32.mxu0 0.0
        %1210 = vmatmul.mubr.f32.gmra.mrb[0].mxu0 %v1143
        %v1211 = vpop.f32.mrb[0].mxu0
        %v1212 = vadd.f32 0.0, %v1211
        %v1213 = vpop.f32.mrb[0].mxu0
        %1214 = vdwg.mxu0
        %1216 = vrot.lane.b32.xlu0 %v1212, 16
        %v1217 = vpop.permute.xlu0 %1216
        %v1219 = vsel %vm887, %v1047, %v1217
        %v1220 = vpack.c.bf16 %v1219, %v1219
        %v1221 = vld [vmem:[%s6] sm:$0xf]
        %v1222 = vld [vmem:[%s6 + $0x4] sm:$0xf]
        %v1223 = vld [vmem:[%s6 + $0x8] sm:$0xf]
        %v1224 = vld [vmem:[%s6 + $0xc] sm:$0xf]
        %v1225 = vld [vmem:[#allocation12] sm:$0x1]
        %v1227 = vlaneseq
        %v1228 = vshrl.u32 %v1227, 7
        %v1229 = vsub.s32 0, %v1228
        %v1230 = vrot.slane %v1225, %v1229
        %v1236 = vunpack.c.l.b16 %v1221
        %v1237 = vunpack.c.l.b16 %v1222
        %v1238 = vunpack.c.l.b16 %v1223
        %v1239 = vunpack.c.l.b16 %v1224
        %v1240 = vpack.c.b16 %v1237, %v1236
        %v1241 = vpack.c.b16 %v1239, %v1238
        %v1245 = vsel %vm788, %v1220, 0
        %1247 = vmatprep.subr.bf16.mxu0 0
        %1248 = vmatpush1.bf16.msra.mxu0 %v1240
        %1249 = vmatprep.subr.bf16.mxu0 0
        %1250 = vmatpush1.bf16.msra.mxu0 %v1241
        %1251 = vmatprep.subr.bf16.mxu0 0
        %1252 = vmatpush1.bf16.msra.mxu0 0
        %1253 = vmatprep.subr.bf16.mxu0 0
        %1254 = vmatpush1.bf16.msra.mxu0 0
        %1255 = vmatprep.subr.bf16.mxu0 0
        %1256 = vmatpush1.bf16.msra.mxu0 0
        %1257 = vmatprep.subr.bf16.mxu0 0
        %1258 = vmatpush1.bf16.msra.mxu0 0
        %1259 = vmatprep.subr.bf16.mxu0 0
        %1260 = vmatpush1.bf16.msra.mxu0 0
        %1261 = vmatprep.subr.bf16.mxu0 0
        %1262 = vmatpush1.bf16.msra.mxu0 0
        %1263 = vmatprep.subr.bf16.mxu0 0
        %1264 = vmatpush1.bf16.msra.mxu0 0
        %1265 = vmatprep.subr.bf16.mxu0 0
        %1266 = vmatpush1.bf16.msra.mxu0 0
        %1267 = vmatprep.subr.bf16.mxu0 0
        %1268 = vmatpush1.bf16.msra.mxu0 0
        %1269 = vmatprep.subr.bf16.mxu0 0
        %1270 = vmatpush1.bf16.msra.mxu0 0
        %1271 = vmatprep.subr.bf16.mxu0 0
        %1272 = vmatpush1.bf16.msra.mxu0 0
        %1273 = vmatprep.subr.bf16.mxu0 0
        %1274 = vmatpush1.bf16.msra.mxu0 0
        %1275 = vmatprep.subr.bf16.mxu0 0
        %1276 = vmatpush1.bf16.msra.mxu0 0
        %1277 = vmatprep.subr.bf16.mxu0 0
        %1278 = vmatpush1.bf16.msra.mxu0 0
        %1279 = vmatprep.mubr.bf16.mxu0 0
        %1280 = vmatmul.mubr.bf16.gmra.mrb[0].mxu0 %v1245
        %v1281 = vpop.f32.mrb[0].mxu0
        %v1282 = vadd.f32 %v1230, %v1281
        %v1283 = vpop.f32.mrb[0].mxu0
        %v1284 = vpop.f32.mrb[0].mxu0
        %v1285 = vpop.f32.mrb[0].mxu0
        %1286 = vdwg.mxu0
        %v1287 = vadd.f32 %v816, %v1282
        %v1288 = vld [vmem:[#allocation13] sm:$0x1]
        %v1289 = vld [vmem:[#allocation15] sm:$0x1]
        %v1290 = vsel %vm788, %v1287, 0.0
        %1291 = vadd.xlane.f32.xlu0 %v1290
        %v1292 = vpop.xlane.xlu0 %1291
        %v1293 = vmul.f32 %v1292, %v792
        %v1294 = vsub.f32 %v1287, %v1293
        %v1295 = vmul.f32 %v1294, %v1294
        %v1296 = vsel %vm788, %v1295, 0.0
        %1297 = vadd.xlane.f32.xlu0 %v1296
        %v1298 = vpop.xlane.xlu0 %1297
        %v1299 = vmul.f32 %v1298, %v792
        %v1300 = vadd.f32 %v1299, 1e-12
        %v1301 = vrsqrt.pop %v1300
        %v1302 = vmul.f32 %v1294, %v1301
        %v1304 = vlaneseq
        %v1305 = vshrl.u32 %v1304, 7
        %v1306 = vsub.s32 0, %v1305
        %v1307 = vrot.slane %v1288, %v1306
        %v1309 = vmul.f32 %v1302, %v1307
        %v1311 = vlaneseq
        %v1312 = vshrl.u32 %v1311, 7
        %v1313 = vsub.s32 0, %v1312
        %v1314 = vrot.slane %v1289, %v1313
        %v1316 = vadd.f32 %v1309, %v1314
        %v1317 = vpack.c.bf16 %v1316, %v1316
        %v1318 = vld [vmem:[%s10] sm:$0xf]
        %v1319 = vld [vmem:[%s10 + $0x4] sm:$0xf]
        %v1320 = vld [vmem:[%s10 + $0x8] sm:$0xf]
        %v1321 = vld [vmem:[%s10 + $0xc] sm:$0xf]
        %v1322 = vld [vmem:[#allocation16] sm:$0x1]
        %v1324 = vlaneseq
        %v1325 = vshrl.u32 %v1324, 7
        %v1326 = vsub.s32 0, %v1325
        %v1327 = vrot.slane %v1322, %v1326
        %v1333 = vunpack.c.l.b16 %v1318
        %v1334 = vunpack.c.l.b16 %v1319
        %v1335 = vunpack.c.l.b16 %v1320
        %v1336 = vunpack.c.l.b16 %v1321
        %v1337 = vpack.c.b16 %v1334, %v1333
        %v1338 = vpack.c.b16 %v1336, %v1335
        %v1342 = vsel %vm788, %v1317, 0
        %1344 = vmatprep.subr.bf16.mxu0 0
        %1345 = vmatpush1.bf16.msra.mxu0 %v1337
        %1346 = vmatprep.subr.bf16.mxu0 0
        %1347 = vmatpush1.bf16.msra.mxu0 %v1338
        %1348 = vmatprep.subr.bf16.mxu0 0
        %1349 = vmatpush1.bf16.msra.mxu0 0
        %1350 = vmatprep.subr.bf16.mxu0 0
        %1351 = vmatpush1.bf16.msra.mxu0 0
        %1352 = vmatprep.subr.bf16.mxu0 0
        %1353 = vmatpush1.bf16.msra.mxu0 0
        %1354 = vmatprep.subr.bf16.mxu0 0
        %1355 = vmatpush1.bf16.msra.mxu0 0
        %1356 = vmatprep.subr.bf16.mxu0 0
        %1357 = vmatpush1.bf16.msra.mxu0 0
        %1358 = vmatprep.subr.bf16.mxu0 0
        %1359 = vmatpush1.bf16.msra.mxu0 0
        %1360 = vmatprep.subr.bf16.mxu0 0
        %1361 = vmatpush1.bf16.msra.mxu0 0
        %1362 = vmatprep.subr.bf16.mxu0 0
        %1363 = vmatpush1.bf16.msra.mxu0 0
        %1364 = vmatprep.subr.bf16.mxu0 0
        %1365 = vmatpush1.bf16.msra.mxu0 0
        %1366 = vmatprep.subr.bf16.mxu0 0
        %1367 = vmatpush1.bf16.msra.mxu0 0
        %1368 = vmatprep.subr.bf16.mxu0 0
        %1369 = vmatpush1.bf16.msra.mxu0 0
        %1370 = vmatprep.subr.bf16.mxu0 0
        %1371 = vmatpush1.bf16.msra.mxu0 0
        %1372 = vmatprep.subr.bf16.mxu0 0
        %1373 = vmatpush1.bf16.msra.mxu0 0
        %1374 = vmatprep.subr.bf16.mxu0 0
        %1375 = vmatpush1.bf16.msra.mxu0 0
        %1376 = vmatprep.mubr.bf16.mxu0 0
        %1377 = vmatmul.mubr.bf16.gmra.mrb[0].mxu0 %v1342
        %v1378 = vpop.f32.mrb[0].mxu0
        %v1379 = vadd.f32 %v1327, %v1378
        %v1380 = vpop.f32.mrb[0].mxu0
        %v1381 = vpop.f32.mrb[0].mxu0
        %v1382 = vpop.f32.mrb[0].mxu0
        %1383 = vdwg.mxu0
        %v1384 = vmul.f32 %v1379, %v1379
        %v1385 = vmul.f32 %v1379, %v1384
        %v1386 = vmul.f32 %v1385, 0.044715
        %v1387 = vadd.f32 %v1379, %v1386
        %v1388 = vmul.f32 %v1387, 0.7978846
        %v1389 = vtanh.pop %v1388
        %v1390 = vadd.f32 %v1389, 1.0
        %v1391 = vmul.f32 %v1390, 0.5
        %v1392 = vmul.f32 %v1379, %v1391
        %v1393 = vpack.c.bf16 %v1392, %v1392
        %v1394 = vld [vmem:[%s12] sm:$0xf]
        %v1395 = vld [vmem:[%s12 + $0x4] sm:$0xf]
        %v1396 = vld [vmem:[%s12 + $0x8] sm:$0xf]
        %v1397 = vld [vmem:[%s12 + $0xc] sm:$0xf]
        %v1398 = vld [vmem:[%s12 + $0x10] sm:$0xf]
        %v1399 = vld [vmem:[%s12 + $0x14] sm:$0xf]
        %v1400 = vld [vmem:[%s12 + $0x18] sm:$0xf]
        %v1401 = vld [vmem:[%s12 + $0x1c] sm:$0xf]
        %v1402 = vld [vmem:[#allocation18] sm:$0x1]
        %v1404 = vlaneseq
        %v1405 = vshrl.u32 %v1404, 7
        %v1406 = vsub.s32 0, %v1405
        %v1407 = vrot.slane %v1402, %v1406
        %v1417 = vunpack.c.l.b16 %v1394
        %v1418 = vunpack.c.l.b16 %v1395
        %v1419 = vunpack.c.l.b16 %v1396
        %v1420 = vunpack.c.l.b16 %v1397
        %v1421 = vunpack.c.l.b16 %v1398
        %v1422 = vunpack.c.l.b16 %v1399
        %v1423 = vunpack.c.l.b16 %v1400
        %v1424 = vunpack.c.l.b16 %v1401
        %v1425 = vpack.c.b16 %v1418, %v1417
        %v1426 = vpack.c.b16 %v1420, %v1419
        %v1427 = vpack.c.b16 %v1422, %v1421
        %v1428 = vpack.c.b16 %v1424, %v1423
        %vm1433 = vcmask 523264
        %v1435 = vsel %vm1433, %v1393, 0
        %1437 = vmatprep.subr.bf16.mxu0 0
        %1438 = vmatpush1.bf16.msra.mxu0 %v1425
        %1439 = vmatprep.subr.bf16.mxu0 0
        %1440 = vmatpush1.bf16.msra.mxu0 %v1426
        %1441 = vmatprep.subr.bf16.mxu0 0
        %1442 = vmatpush1.bf16.msra.mxu0 %v1427
        %1443 = vmatprep.subr.bf16.mxu0 0
        %1444 = vmatpush1.bf16.msra.mxu0 %v1428
        %1445 = vmatprep.subr.bf16.mxu0 0
        %1446 = vmatpush1.bf16.msra.mxu0 0
        %1447 = vmatprep.subr.bf16.mxu0 0
        %1448 = vmatpush1.bf16.msra.mxu0 0
        %1449 = vmatprep.subr.bf16.mxu0 0
        %1450 = vmatpush1.bf16.msra.mxu0 0
        %1451 = vmatprep.subr.bf16.mxu0 0
        %1452 = vmatpush1.bf16.msra.mxu0 0
        %1453 = vmatprep.subr.bf16.mxu0 0
        %1454 = vmatpush1.bf16.msra.mxu0 0
        %1455 = vmatprep.subr.bf16.mxu0 0
        %1456 = vmatpush1.bf16.msra.mxu0 0
        %1457 = vmatprep.subr.bf16.mxu0 0
        %1458 = vmatpush1.bf16.msra.mxu0 0
        %1459 = vmatprep.subr.bf16.mxu0 0
        %1460 = vmatpush1.bf16.msra.mxu0 0
        %1461 = vmatprep.subr.bf16.mxu0 0
        %1462 = vmatpush1.bf16.msra.mxu0 0
        %1463 = vmatprep.subr.bf16.mxu0 0
        %1464 = vmatpush1.bf16.msra.mxu0 0
        %1465 = vmatprep.subr.bf16.mxu0 0
        %1466 = vmatpush1.bf16.msra.mxu0 0
        %1467 = vmatprep.subr.bf16.mxu0 0
        %1468 = vmatpush1.bf16.msra.mxu0 0
        %1469 = vmatprep.mubr.bf16.mxu0 0
        %1470 = vmatmul.mubr.bf16.gmra.mrb[0].mxu0 %v1435
        %v1471 = vpop.f32.mrb[0].mxu0
        %v1472 = vadd.f32 %v1407, %v1471
        %v1473 = vpop.f32.mrb[0].mxu0
        %v1474 = vpop.f32.mrb[0].mxu0
        %v1475 = vpop.f32.mrb[0].mxu0
        %1476 = vdwg.mxu0
        %v1477 = vadd.f32 %v1316, %v1472
        %v1478 = vld [vmem:[#allocation19] sm:$0x1]
        %v1479 = vld [vmem:[#allocation21] sm:$0x1]
        %v1480 = vsel %vm788, %v1477, 0.0
        %1481 = vadd.xlane.f32.xlu0 %v1480
        %v1482 = vpop.xlane.xlu0 %1481
        %v1483 = vmul.f32 %v1482, %v792
        %v1484 = vsub.f32 %v1477, %v1483
        %v1485 = vmul.f32 %v1484, %v1484
        %v1486 = vsel %vm788, %v1485, 0.0
        %1487 = vadd.xlane.f32.xlu0 %v1486
        %v1488 = vpop.xlane.xlu0 %1487
        %v1489 = vmul.f32 %v1488, %v792
        %v1490 = vadd.f32 %v1489, 1e-12
        %v1491 = vrsqrt.pop %v1490
        %v1492 = vmul.f32 %v1484, %v1491
        %v1494 = vlaneseq
        %v1495 = vshrl.u32 %v1494, 7
        %v1496 = vsub.s32 0, %v1495
        %v1497 = vrot.slane %v1478, %v1496
        %v1499 = vmul.f32 %v1492, %v1497
        %v1501 = vlaneseq
        %v1502 = vshrl.u32 %v1501, 7
        %v1503 = vsub.s32 0, %v1502
        %v1504 = vrot.slane %v1479, %v1503
        %v1506 = vadd.f32 %v1499, %v1504
        %v1507 = vpack.c.bf16 %v1506, %v1506
        %s1508 = scalar_lea.vmem %s4, 16
        %v1509 = vld [vmem:[%s1508] sm:$0xf]
        %v1510 = vld [vmem:[%s1508 + $0x4] sm:$0xf]
        %v1511 = vld [vmem:[%s1508 + $0x8] sm:$0xf]
        %v1512 = vld [vmem:[%s1508 + $0xc] sm:$0xf]
        %s1513 = scalar_lea.vmem [#allocation10], 1
        %v1514 = vld [vmem:[%s1513] sm:$0x1]
        %v1516 = vlaneseq
        %v1517 = vshrl.u32 %v1516, 7
        %v1518 = vsub.s32 0, %v1517
        %v1519 = vrot.slane %v1514, %v1518
        %v1525 = vunpack.c.l.b16 %v1509
        %v1526 = vunpack.c.l.b16 %v1510
        %v1527 = vunpack.c.l.b16 %v1511
        %v1528 = vunpack.c.l.b16 %v1512
        %v1529 = vpack.c.b16 %v1526, %v1525
        %v1530 = vpack.c.b16 %v1528, %v1527
        %v1534 = vsel %vm788, %v1507, 0
        %1536 = vmatprep.subr.bf16.mxu0 0
        %1537 = vmatpush1.bf16.msra.mxu0 %v1529
        %1538 = vmatprep.subr.bf16.mxu0 0
        %1539 = vmatpush1.bf16.msra.mxu0 %v1530
        %1540 = vmatprep.subr.bf16.mxu0 0
        %1541 = vmatpush1.bf16.msra.mxu0 0
        %1542 = vmatprep.subr.bf16.mxu0 0
        %1543 = vmatpush1.bf16.msra.mxu0 0
        %1544 = vmatprep.subr.bf16.mxu0 0
        %1545 = vmatpush1.bf16.msra.mxu0 0
        %1546 = vmatprep.subr.bf16.mxu0 0
        %1547 = vmatpush1.bf16.msra.mxu0 0
        %1548 = vmatprep.subr.bf16.mxu0 0
        %1549 = vmatpush1.bf16.msra.mxu0 0
        %1550 = vmatprep.subr.bf16.mxu0 0
        %1551 = vmatpush1.bf16.msra.mxu0 0
        %1552 = vmatprep.subr.bf16.mxu0 0
        %1553 = vmatpush1.bf16.msra.mxu0 0
        %1554 = vmatprep.subr.bf16.mxu0 0
        %1555 = vmatpush1.bf16.msra.mxu0 0
        %1556 = vmatprep.subr.bf16.mxu0 0
        %1557 = vmatpush1.bf16.msra.mxu0 0
        %1558 = vmatprep.subr.bf16.mxu0 0
        %1559 = vmatpush1.bf16.msra.mxu0 0
        %1560 = vmatprep.subr.bf16.mxu0 0
        %1561 = vmatpush1.bf16.msra.mxu0 0
        %1562 = vmatprep.subr.bf16.mxu0 0
        %1563 = vmatpush1.bf16.msra.mxu0 0
        %1564 = vmatprep.subr.bf16.mxu0 0
        %1565 = vmatpush1.bf16.msra.mxu0 0
        %1566 = vmatprep.subr.bf16.mxu0 0
        %1567 = vmatpush1.bf16.msra.mxu0 0
        %1568 = vmatprep.mubr.bf16.mxu0 0
        %1569 = vmatmul.mubr.bf16.gmra.mrb[0].mxu0 %v1534
        %v1570 = vpop.f32.mrb[0].mxu0
        %v1571 = vadd.f32 %v1519, %v1570
        %v1572 = vpop.f32.mrb[0].mxu0
        %v1573 = vpop.f32.mrb[0].mxu0
        %v1574 = vpop.f32.mrb[0].mxu0
        %1575 = vdwg.mxu0
        %1577 = vrot.lane.b32.xlu0 %v1571, 96
        %v1578 = vpop.permute.xlu0 %1577
        %v1579 = vsel %vm887, %v1571, 0
        %v1581 = vsel %vm887, %v1578, 0
        %1583 = vmatprep.subr.mxu0 0.0
        %1584 = vmatpush1.xpose.msra.mxu0 %v1581
        %1585 = vmatprep.subr.mxu0 0.0
        %1586 = vmatpush1.xpose.msra.mxu0 0.0
        %1587 = vmatprep.subr.mxu0 0.0
        %1588 = vmatpush1.xpose.msra.mxu0 0.0
        %1589 = vmatprep.subr.mxu0 0.0
        %1590 = vmatpush1.xpose.msra.mxu0 0.0
        %1591 = vmatprep.subr.mxu0 0.0
        %1592 = vmatpush1.xpose.msra.mxu0 0.0
        %1593 = vmatprep.subr.mxu0 0.0
        %1594 = vmatpush1.xpose.msra.mxu0 0.0
        %1595 = vmatprep.subr.mxu0 0.0
        %1596 = vmatpush1.xpose.msra.mxu0 0.0
        %1597 = vmatprep.subr.mxu0 0.0
        %1598 = vmatpush1.xpose.msra.mxu0 0.0
        %1599 = vmatprep.subr.mxu0 0.0
        %1600 = vmatpush1.xpose.msra.mxu0 0.0
        %1601 = vmatprep.subr.mxu0 0.0
        %1602 = vmatpush1.xpose.msra.mxu0 0.0
        %1603 = vmatprep.subr.mxu0 0.0
        %1604 = vmatpush1.xpose.msra.mxu0 0.0
        %1605 = vmatprep.subr.mxu0 0.0
        %1606 = vmatpush1.xpose.msra.mxu0 0.0
        %1607 = vmatprep.subr.mxu0 0.0
        %1608 = vmatpush1.xpose.msra.mxu0 0.0
        %1609 = vmatprep.subr.mxu0 0.0
        %1610 = vmatpush1.xpose.msra.mxu0 0.0
        %1611 = vmatprep.subr.mxu0 0.0
        %1612 = vmatpush1.xpose.msra.mxu0 0.0
        %1613 = vmatprep.subr.mxu0 0.0
        %1614 = vmatpush1.xpose.msra.mxu0 0.0
        %1615 = vmatprep.subr.mxu0 0.0
        %1616 = vmatpush1.xpose.msra.mxu0 0.0
        %1617 = vmatprep.subr.mxu0 0.0
        %1618 = vmatpush1.xpose.msra.mxu0 0.0
        %1619 = vmatprep.subr.mxu0 0.0
        %1620 = vmatpush1.xpose.msra.mxu0 0.0
        %1621 = vmatprep.subr.mxu0 0.0
        %1622 = vmatpush1.xpose.msra.mxu0 0.0
        %1623 = vmatprep.subr.mxu0 0.0
        %1624 = vmatpush1.xpose.msra.mxu0 0.0
        %1625 = vmatprep.subr.mxu0 0.0
        %1626 = vmatpush1.xpose.msra.mxu0 0.0
        %1627 = vmatprep.subr.mxu0 0.0
        %1628 = vmatpush1.xpose.msra.mxu0 0.0
        %1629 = vmatprep.subr.mxu0 0.0
        %1630 = vmatpush1.xpose.msra.mxu0 0.0
        %1631 = vmatprep.subr.mxu0 0.0
        %1632 = vmatpush1.xpose.msra.mxu0 0.0
        %1633 = vmatprep.subr.mxu0 0.0
        %1634 = vmatpush1.xpose.msra.mxu0 0.0
        %1635 = vmatprep.subr.mxu0 0.0
        %1636 = vmatpush1.xpose.msra.mxu0 0.0
        %1637 = vmatprep.subr.mxu0 0.0
        %1638 = vmatpush1.xpose.msra.mxu0 0.0
        %1639 = vmatprep.subr.mxu0 0.0
        %1640 = vmatpush1.xpose.msra.mxu0 0.0
        %1641 = vmatprep.subr.mxu0 0.0
        %1642 = vmatpush1.xpose.msra.mxu0 0.0
        %1643 = vmatprep.subr.mxu0 0.0
        %1644 = vmatpush1.xpose.msra.mxu0 0.0
        %1645 = vmatprep.subr.mxu0 0.0
        %1646 = vmatpush1.xpose.msra.mxu0 0.0
        %1647 = vmatprep.mubr.f32.mxu0 0.0
        %1648 = vmatmul.mubr.f32.gmra.mrb[0].mxu0 %v1579
        %v1649 = vpop.f32.mrb[0].mxu0
        %v1650 = vadd.f32 %v783, %v1649
        %v1651 = vpop.f32.mrb[0].mxu0
        %1652 = vdwg.mxu0
        %v1653 = vsel %vm962, %v1650, -inf
        %1654 = vmax.xlane.f32.xlu0 %v1653
        %v1655 = vpop.xlane.xlu0 %1654
        %v1656 = vsub.f32 %v1650, %v1655
        %v1657 = vmul.f32 %v1656, 1.442695
        %v1658 = vpow.pop %v1657
        %v1659 = vsel %vm962, %v1658, 0.0
        %1660 = vadd.xlane.f32.xlu0 %v1659
        %v1661 = vpop.xlane.xlu0 %1660
        %v1662 = vrcp.pop %v1661
        %v1663 = vmul.f32 %v1658, %v1662
        %1664 = vrot.lane.b32.xlu0 %v1571, 64
        %v1665 = vpop.permute.xlu0 %1664
        %v1668 = vsel %vm962, %v1663, 0
        %1670 = vmatprep.subr.mxu0 0.0
        %1671 = vmatpush1.msra.mxu0 %v1665
        %1672 = vmatprep.subr.mxu0 0.0
        %1673 = vmatpush1.msra.mxu0 0.0
        %1674 = vmatprep.subr.mxu0 0.0
        %1675 = vmatpush1.msra.mxu0 0.0
        %1676 = vmatprep.subr.mxu0 0.0
        %1677 = vmatpush1.msra.mxu0 0.0
        %1678 = vmatprep.subr.mxu0 0.0
        %1679 = vmatpush1.msra.mxu0 0.0
        %1680 = vmatprep.subr.mxu0 0.0
        %1681 = vmatpush1.msra.mxu0 0.0
        %1682 = vmatprep.subr.mxu0 0.0
        %1683 = vmatpush1.msra.mxu0 0.0
        %1684 = vmatprep.subr.mxu0 0.0
        %1685 = vmatpush1.msra.mxu0 0.0
        %1686 = vmatprep.subr.mxu0 0.0
        %1687 = vmatpush1.msra.mxu0 0.0
        %1688 = vmatprep.subr.mxu0 0.0
        %1689 = vmatpush1.msra.mxu0 0.0
        %1690 = vmatprep.subr.mxu0 0.0
        %1691 = vmatpush1.msra.mxu0 0.0
        %1692 = vmatprep.subr.mxu0 0.0
        %1693 = vmatpush1.msra.mxu0 0.0
        %1694 = vmatprep.subr.mxu0 0.0
        %1695 = vmatpush1.msra.mxu0 0.0
        %1696 = vmatprep.subr.mxu0 0.0
        %1697 = vmatpush1.msra.mxu0 0.0
        %1698 = vmatprep.subr.mxu0 0.0
        %1699 = vmatpush1.msra.mxu0 0.0
        %1700 = vmatprep.subr.mxu0 0.0
        %1701 = vmatpush1.msra.mxu0 0.0
        %1702 = vmatprep.subr.mxu0 0.0
        %1703 = vmatpush1.msra.mxu0 0.0
        %1704 = vmatprep.subr.mxu0 0.0
        %1705 = vmatpush1.msra.mxu0 0.0
        %1706 = vmatprep.subr.mxu0 0.0
        %1707 = vmatpush1.msra.mxu0 0.0
        %1708 = vmatprep.subr.mxu0 0.0
        %1709 = vmatpush1.msra.mxu0 0.0
        %1710 = vmatprep.subr.mxu0 0.0
        %1711 = vmatpush1.msra.mxu0 0.0
        %1712 = vmatprep.subr.mxu0 0.0
        %1713 = vmatpush1.msra.mxu0 0.0
        %1714 = vmatprep.subr.mxu0 0.0
        %1715 = vmatpush1.msra.mxu0 0.0
        %1716 = vmatprep.subr.mxu0 0.0
        %1717 = vmatpush1.msra.mxu0 0.0
        %1718 = vmatprep.subr.mxu0 0.0
        %1719 = vmatpush1.msra.mxu0 0.0
        %1720 = vmatprep.subr.mxu0 0.0
        %1721 = vmatpush1.msra.mxu0 0.0
        %1722 = vmatprep.subr.mxu0 0.0
        %1723 = vmatpush1.msra.mxu0 0.0
        %1724 = vmatprep.subr.mxu0 0.0
        %1725 = vmatpush1.msra.mxu0 0.0
        %1726 = vmatprep.subr.mxu0 0.0
        %1727 = vmatpush1.msra.mxu0 0.0
        %1728 = vmatprep.subr.mxu0 0.0
        %1729 = vmatpush1.msra.mxu0 0.0
        %1730 = vmatprep.subr.mxu0 0.0
        %1731 = vmatpush1.msra.mxu0 0.0
        %1732 = vmatprep.subr.mxu0 0.0
        %1733 = vmatpush1.msra.mxu0 0.0
        %1734 = vmatprep.mubr.f32.mxu0 0.0
        %1735 = vmatmul.mubr.f32.gmra.mrb[0].mxu0 %v1668
        %v1736 = vpop.f32.mrb[0].mxu0
        %v1737 = vadd.f32 0.0, %v1736
        %v1738 = vpop.f32.mrb[0].mxu0
        %1739 = vdwg.mxu0
        %1740 = vrot.lane.b32.xlu0 %v1571, 112
        %v1741 = vpop.permute.xlu0 %1740
        %1742 = vrot.lane.b32.xlu0 %v1571, 80
        %v1743 = vpop.permute.xlu0 %1742
        %v1744 = vsel %vm887, %v1741, 0
        %v1746 = vsel %vm887, %v1743, 0
        %1748 = vmatprep.subr.mxu0 0.0
        %1749 = vmatpush1.xpose.msra.mxu0 %v1746
        %1750 = vmatprep.subr.mxu0 0.0
        %1751 = vmatpush1.xpose.msra.mxu0 0.0
        %1752 = vmatprep.subr.mxu0 0.0
        %1753 = vmatpush1.xpose.msra.mxu0 0.0
        %1754 = vmatprep.subr.mxu0 0.0
        %1755 = vmatpush1.xpose.msra.mxu0 0.0
        %1756 = vmatprep.subr.mxu0 0.0
        %1757 = vmatpush1.xpose.msra.mxu0 0.0
        %1758 = vmatprep.subr.mxu0 0.0
        %1759 = vmatpush1.xpose.msra.mxu0 0.0
        %1760 = vmatprep.subr.mxu0 0.0
        %1761 = vmatpush1.xpose.msra.mxu0 0.0
        %1762 = vmatprep.subr.mxu0 0.0
        %1763 = vmatpush1.xpose.msra.mxu0 0.0
        %1764 = vmatprep.subr.mxu0 0.0
        %1765 = vmatpush1.xpose.msra.mxu0 0.0
        %1766 = vmatprep.subr.mxu0 0.0
        %1767 = vmatpush1.xpose.msra.mxu0 0.0
        %1768 = vmatprep.subr.mxu0 0.0
        %1769 = vmatpush1.xpose.msra.mxu0 0.0
        %1770 = vmatprep.subr.mxu0 0.0
        %1771 = vmatpush1.xpose.msra.mxu0 0.0
        %1772 = vmatprep.subr.mxu0 0.0
        %1773 = vmatpush1.xpose.msra.mxu0 0.0
        %1774 = vmatprep.subr.mxu0 0.0
        %1775 = vmatpush1.xpose.msra.mxu0 0.0
        %1776 = vmatprep.subr.mxu0 0.0
        %1777 = vmatpush1.xpose.msra.mxu0 0.0
        %1778 = vmatprep.subr.mxu0 0.0
        %1779 = vmatpush1.xpose.msra.mxu0 0.0
        %1780 = vmatprep.subr.mxu0 0.0
        %1781 = vmatpush1.xpose.msra.mxu0 0.0
        %1782 = vmatprep.subr.mxu0 0.0
        %1783 = vmatpush1.xpose.msra.mxu0 0.0
        %1784 = vmatprep.subr.mxu0 0.0
        %1785 = vmatpush1.xpose.msra.mxu0 0.0
        %1786 = vmatprep.subr.mxu0 0.0
        %1787 = vmatpush1.xpose.msra.mxu0 0.0
        %1788 = vmatprep.subr.mxu0 0.0
        %1789 = vmatpush1.xpose.msra.mxu0 0.0
        %1790 = vmatprep.subr.mxu0 0.0
        %1791 = vmatpush1.xpose.msra.mxu0 0.0
        %1792 = vmatprep.subr.mxu0 0.0
        %1793 = vmatpush1.xpose.msra.mxu0 0.0
        %1794 = vmatprep.subr.mxu0 0.0
        %1795 = vmatpush1.xpose.msra.mxu0 0.0
        %1796 = vmatprep.subr.mxu0 0.0
        %1797 = vmatpush1.xpose.msra.mxu0 0.0
        %1798 = vmatprep.subr.mxu0 0.0
        %1799 = vmatpush1.xpose.msra.mxu0 0.0
        %1800 = vmatprep.subr.mxu0 0.0
        %1801 = vmatpush1.xpose.msra.mxu0 0.0
        %1802 = vmatprep.subr.mxu0 0.0
        %1803 = vmatpush1.xpose.msra.mxu0 0.0
        %1804 = vmatprep.subr.mxu0 0.0
        %1805 = vmatpush1.xpose.msra.mxu0 0.0
        %1806 = vmatprep.subr.mxu0 0.0
        %1807 = vmatpush1.xpose.msra.mxu0 0.0
        %1808 = vmatprep.subr.mxu0 0.0
        %1809 = vmatpush1.xpose.msra.mxu0 0.0
        %1810 = vmatprep.subr.mxu0 0.0
        %1811 = vmatpush1.xpose.msra.mxu0 0.0
        %1812 = vmatprep.mubr.f32.mxu0 0.0
        %1813 = vmatmul.mubr.f32.gmra.mrb[0].mxu0 %v1744
        %v1814 = vpop.f32.mrb[0].mxu0
        %v1815 = vadd.f32 %v783, %v1814
        %v1816 = vpop.f32.mrb[0].mxu0
        %1817 = vdwg.mxu0
        %v1818 = vsel %vm962, %v1815, -inf
        %1819 = vmax.xlane.f32.xlu0 %v1818
        %v1820 = vpop.xlane.xlu0 %1819
        %v1821 = vsub.f32 %v1815, %v1820
        %v1822 = vmul.f32 %v1821, 1.442695
        %v1823 = vpow.pop %v1822
        %v1824 = vsel %vm962, %v1823, 0.0
        %1825 = vadd.xlane.f32.xlu0 %v1824
        %v1826 = vpop.xlane.xlu0 %1825
        %v1827 = vrcp.pop %v1826
        %v1828 = vmul.f32 %v1823, %v1827
        %1829 = vrot.lane.b32.xlu0 %v1571, 48
        %v1830 = vpop.permute.xlu0 %1829
        %v1833 = vsel %vm962, %v1828, 0
        %1835 = vmatprep.subr.mxu0 0.0
        %1836 = vmatpush1.msra.mxu0 %v1830
        %1837 = vmatprep.subr.mxu0 0.0
        %1838 = vmatpush1.msra.mxu0 0.0
        %1839 = vmatprep.subr.mxu0 0.0
        %1840 = vmatpush1.msra.mxu0 0.0
        %1841 = vmatprep.subr.mxu0 0.0
        %1842 = vmatpush1.msra.mxu0 0.0
        %1843 = vmatprep.subr.mxu0 0.0
        %1844 = vmatpush1.msra.mxu0 0.0
        %1845 = vmatprep.subr.mxu0 0.0
        %1846 = vmatpush1.msra.mxu0 0.0
        %1847 = vmatprep.subr.mxu0 0.0
        %1848 = vmatpush1.msra.mxu0 0.0
        %1849 = vmatprep.subr.mxu0 0.0
        %1850 = vmatpush1.msra.mxu0 0.0
        %1851 = vmatprep.subr.mxu0 0.0
        %1852 = vmatpush1.msra.mxu0 0.0
        %1853 = vmatprep.subr.mxu0 0.0
        %1854 = vmatpush1.msra.mxu0 0.0
        %1855 = vmatprep.subr.mxu0 0.0
        %1856 = vmatpush1.msra.mxu0 0.0
        %1857 = vmatprep.subr.mxu0 0.0
        %1858 = vmatpush1.msra.mxu0 0.0
        %1859 = vmatprep.subr.mxu0 0.0
        %1860 = vmatpush1.msra.mxu0 0.0
        %1861 = vmatprep.subr.mxu0 0.0
        %1862 = vmatpush1.msra.mxu0 0.0
        %1863 = vmatprep.subr.mxu0 0.0
        %1864 = vmatpush1.msra.mxu0 0.0
        %1865 = vmatprep.subr.mxu0 0.0
        %1866 = vmatpush1.msra.mxu0 0.0
        %1867 = vmatprep.subr.mxu0 0.0
        %1868 = vmatpush1.msra.mxu0 0.0
        %1869 = vmatprep.subr.mxu0 0.0
        %1870 = vmatpush1.msra.mxu0 0.0
        %1871 = vmatprep.subr.mxu0 0.0
        %1872 = vmatpush1.msra.mxu0 0.0
        %1873 = vmatprep.subr.mxu0 0.0
        %1874 = vmatpush1.msra.mxu0 0.0
        %1875 = vmatprep.subr.mxu0 0.0
        %1876 = vmatpush1.msra.mxu0 0.0
        %1877 = vmatprep.subr.mxu0 0.0
        %1878 = vmatpush1.msra.mxu0 0.0
        %1879 = vmatprep.subr.mxu0 0.0
        %1880 = vmatpush1.msra.mxu0 0.0
        %1881 = vmatprep.subr.mxu0 0.0
        %1882 = vmatpush1.msra.mxu0 0.0
        %1883 = vmatprep.subr.mxu0 0.0
        %1884 = vmatpush1.msra.mxu0 0.0
        %1885 = vmatprep.subr.mxu0 0.0
        %1886 = vmatpush1.msra.mxu0 0.0
        %1887 = vmatprep.subr.mxu0 0.0
        %1888 = vmatpush1.msra.mxu0 0.0
        %1889 = vmatprep.subr.mxu0 0.0
        %1890 = vmatpush1.msra.mxu0 0.0
        %1891 = vmatprep.subr.mxu0 0.0
        %1892 = vmatpush1.msra.mxu0 0.0
        %1893 = vmatprep.subr.mxu0 0.0
        %1894 = vmatpush1.msra.mxu0 0.0
        %1895 = vmatprep.subr.mxu0 0.0
        %1896 = vmatpush1.msra.mxu0 0.0
        %1897 = vmatprep.subr.mxu0 0.0
        %1898 = vmatpush1.msra.mxu0 0.0
        %1899 = vmatprep.mubr.f32.mxu0 0.0
        %1900 = vmatmul.mubr.f32.gmra.mrb[0].mxu0 %v1833
        %v1901 = vpop.f32.mrb[0].mxu0
        %v1902 = vadd.f32 0.0, %v1901
        %v1903 = vpop.f32.mrb[0].mxu0
        %1904 = vdwg.mxu0
        %1906 = vrot.lane.b32.xlu0 %v1902, 16
        %v1907 = vpop.permute.xlu0 %1906
        %v1909 = vsel %vm887, %v1737, %v1907
        %v1910 = vpack.c.bf16 %v1909, %v1909
        %s1911 = scalar_lea.vmem %s6, 16
        %v1912 = vld [vmem:[%s1911] sm:$0xf]
        %v1913 = vld [vmem:[%s1911 + $0x4] sm:$0xf]
        %v1914 = vld [vmem:[%s1911 + $0x8] sm:$0xf]
        %v1915 = vld [vmem:[%s1911 + $0xc] sm:$0xf]
        %s1916 = scalar_lea.vmem [#allocation12], 1
        %v1917 = vld [vmem:[%s1916] sm:$0x1]
        %v1919 = vlaneseq
        %v1920 = vshrl.u32 %v1919, 7
        %v1921 = vsub.s32 0, %v1920
        %v1922 = vrot.slane %v1917, %v1921
        %v1928 = vunpack.c.l.b16 %v1912
        %v1929 = vunpack.c.l.b16 %v1913
        %v1930 = vunpack.c.l.b16 %v1914
        %v1931 = vunpack.c.l.b16 %v1915
        %v1932 = vpack.c.b16 %v1929, %v1928
        %v1933 = vpack.c.b16 %v1931, %v1930
        %v1937 = vsel %vm788, %v1910, 0
        %1939 = vmatprep.subr.bf16.mxu0 0
        %1940 = vmatpush1.bf16.msra.mxu0 %v1932
        %1941 = vmatprep.subr.bf16.mxu0 0
        %1942 = vmatpush1.bf16.msra.mxu0 %v1933
        %1943 = vmatprep.subr.bf16.mxu0 0
        %1944 = vmatpush1.bf16.msra.mxu0 0
        %1945 = vmatprep.subr.bf16.mxu0 0
        %1946 = vmatpush1.bf16.msra.mxu0 0
        %1947 = vmatprep.subr.bf16.mxu0 0
        %1948 = vmatpush1.bf16.msra.mxu0 0
        %1949 = vmatprep.subr.bf16.mxu0 0
        %1950 = vmatpush1.bf16.msra.mxu0 0
        %1951 = vmatprep.subr.bf16.mxu0 0
        %1952 = vmatpush1.bf16.msra.mxu0 0
        %1953 = vmatprep.subr.bf16.mxu0 0
        %1954 = vmatpush1.bf16.msra.mxu0 0
        %1955 = vmatprep.subr.bf16.mxu0 0
        %1956 = vmatpush1.bf16.msra.mxu0 0
        %1957 = vmatprep.subr.bf16.mxu0 0
        %1958 = vmatpush1.bf16.msra.mxu0 0
        %1959 = vmatprep.subr.bf16.mxu0 0
        %1960 = vmatpush1.bf16.msra.mxu0 0
        %1961 = vmatprep.subr.bf16.mxu0 0
        %1962 = vmatpush1.bf16.msra.mxu0 0
        %1963 = vmatprep.subr.bf16.mxu0 0
        %1964 = vmatpush1.bf16.msra.mxu0 0
        %1965 = vmatprep.subr.bf16.mxu0 0
        %1966 = vmatpush1.bf16.msra.mxu0 0
        %1967 = vmatprep.subr.bf16.mxu0 0
        %1968 = vmatpush1.bf16.msra.mxu0 0
        %1969 = vmatprep.subr.bf16.mxu0 0
        %1970 = vmatpush1.bf16.msra.mxu0 0
        %1971 = vmatprep.mubr.bf16.mxu0 0
        %1972 = vmatmul.mubr.bf16.gmra.mrb[0].mxu0 %v1937
        %v1973 = vpop.f32.mrb[0].mxu0
        %v1974 = vadd.f32 %v1922, %v1973
        %v1975 = vpop.f32.mrb[0].mxu0
        %v1976 = vpop.f32.mrb[0].mxu0
        %v1977 = vpop.f32.mrb[0].mxu0
        %1978 = vdwg.mxu0
        %v1979 = vadd.f32 %v1506, %v1974
        %s1980 = scalar_lea.vmem [#allocation13], 1
        %v1981 = vld [vmem:[%s1980] sm:$0x1]
        %s1982 = scalar_lea.vmem [#allocation15], 1
        %v1983 = vld [vmem:[%s1982] sm:$0x1]
        %v1984 = vsel %vm788, %v1979, 0.0
        %1985 = vadd.xlane.f32.xlu0 %v1984
        %v1986 = vpop.xlane.xlu0 %1985
        %v1987 = vmul.f32 %v1986, %v792
        %v1988 = vsub.f32 %v1979, %v1987
        %v1989 = vmul.f32 %v1988, %v1988
        %v1990 = vsel %vm788, %v1989, 0.0
        %1991 = vadd.xlane.f32.xlu0 %v1990
        %v1992 = vpop.xlane.xlu0 %1991
        %v1993 = vmul.f32 %v1992, %v792
        %v1994 = vadd.f32 %v1993, 1e-12
        %v1995 = vrsqrt.pop %v1994
        %v1996 = vmul.f32 %v1988, %v1995
        %v1998 = vlaneseq
        %v1999 = vshrl.u32 %v1998, 7
        %v2000 = vsub.s32 0, %v1999
        %v2001 = vrot.slane %v1981, %v2000
        %v2003 = vmul.f32 %v1996, %v2001
        %v2005 = vlaneseq
        %v2006 = vshrl.u32 %v2005, 7
        %v2007 = vsub.s32 0, %v2006
        %v2008 = vrot.slane %v1983, %v2007
        %v2010 = vadd.f32 %v2003, %v2008
        %v2011 = vpack.c.bf16 %v2010, %v2010
        %s2012 = scalar_lea.vmem %s10, 16
        %v2013 = vld [vmem:[%s2012] sm:$0xf]
        %v2014 = vld [vmem:[%s2012 + $0x4] sm:$0xf]
        %v2015 = vld [vmem:[%s2012 + $0x8] sm:$0xf]
        %v2016 = vld [vmem:[%s2012 + $0xc] sm:$0xf]
        %s2017 = scalar_lea.vmem [#allocation16], 1
        %v2018 = vld [vmem:[%s2017] sm:$0x1]
        %v2020 = vlaneseq
        %v2021 = vshrl.u32 %v2020, 7
        %v2022 = vsub.s32 0, %v2021
        %v2023 = vrot.slane %v2018, %v2022
        %v2029 = vunpack.c.l.b16 %v2013
        %v2030 = vunpack.c.l.b16 %v2014
        %v2031 = vunpack.c.l.b16 %v2015
        %v2032 = vunpack.c.l.b16 %v2016
        %v2033 = vpack.c.b16 %v2030, %v2029
        %v2034 = vpack.c.b16 %v2032, %v2031
        %v2038 = vsel %vm788, %v2011, 0
        %2040 = vmatprep.subr.bf16.mxu0 0
        %2041 = vmatpush1.bf16.msra.mxu0 %v2033
        %2042 = vmatprep.subr.bf16.mxu0 0
        %2043 = vmatpush1.bf16.msra.mxu0 %v2034
        %2044 = vmatprep.subr.bf16.mxu0 0
        %2045 = vmatpush1.bf16.msra.mxu0 0
        %2046 = vmatprep.subr.bf16.mxu0 0
        %2047 = vmatpush1.bf16.msra.mxu0 0
        %2048 = vmatprep.subr.bf16.mxu0 0
        %2049 = vmatpush1.bf16.msra.mxu0 0
        %2050 = vmatprep.subr.bf16.mxu0 0
        %2051 = vmatpush1.bf16.msra.mxu0 0
        %2052 = vmatprep.subr.bf16.mxu0 0
        %2053 = vmatpush1.bf16.msra.mxu0 0
        %2054 = vmatprep.subr.bf16.mxu0 0
        %2055 = vmatpush1.bf16.msra.mxu0 0
        %2056 = vmatprep.subr.bf16.mxu0 0
        %2057 = vmatpush1.bf16.msra.mxu0 0
        %2058 = vmatprep.subr.bf16.mxu0 0
        %2059 = vmatpush1.bf16.msra.mxu0 0
        %2060 = vmatprep.subr.bf16.mxu0 0
        %2061 = vmatpush1.bf16.msra.mxu0 0
        %2062 = vmatprep.subr.bf16.mxu0 0
        %2063 = vmatpush1.bf16.msra.mxu0 0
        %2064 = vmatprep.subr.bf16.mxu0 0
        %2065 = vmatpush1.bf16.msra.mxu0 0
        %2066 = vmatprep.subr.bf16.mxu0 0
        %2067 = vmatpush1.bf16.msra.mxu0 0
        %2068 = vmatprep.subr.bf16.mxu0 0
        %2069 = vmatpush1.bf16.msra.mxu0 0
        %2070 = vmatprep.subr.bf16.mxu0 0
        %2071 = vmatpush1.bf16.msra.mxu0 0
        %2072 = vmatprep.mubr.bf16.mxu0 0
        %2073 = vmatmul.mubr.bf16.gmra.mrb[0].mxu0 %v2038
        %v2074 = vpop.f32.mrb[0].mxu0
        %v2075 = vadd.f32 %v2023, %v2074
        %v2076 = vpop.f32.mrb[0].mxu0
        %v2077 = vpop.f32.mrb[0].mxu0
        %v2078 = vpop.f32.mrb[0].mxu0
        %2079 = vdwg.mxu0
        %v2080 = vmul.f32 %v2075, %v2075
        %v2081 = vmul.f32 %v2075, %v2080
        %v2082 = vmul.f32 %v2081, 0.044715
        %v2083 = vadd.f32 %v2075, %v2082
        %v2084 = vmul.f32 %v2083, 0.7978846
        %v2085 = vtanh.pop %v2084
        %v2086 = vadd.f32 %v2085, 1.0
        %v2087 = vmul.f32 %v2086, 0.5
        %v2088 = vmul.f32 %v2075, %v2087
        %v2089 = vpack.c.bf16 %v2088, %v2088
        %s2090 = scalar_lea.vmem %s12, 32
        %v2091 = vld [vmem:[%s2090] sm:$0xf]
        %v2092 = vld [vmem:[%s2090 + $0x4] sm:$0xf]
        %v2093 = vld [vmem:[%s2090 + $0x8] sm:$0xf]
        %v2094 = vld [vmem:[%s2090 + $0xc] sm:$0xf]
        %v2095 = vld [vmem:[%s2090 + $0x10] sm:$0xf]
        %v2096 = vld [vmem:[%s2090 + $0x14] sm:$0xf]
        %v2097 = vld [vmem:[%s2090 + $0x18] sm:$0xf]
        %v2098 = vld [vmem:[%s2090 + $0x1c] sm:$0xf]
        %s2099 = scalar_lea.vmem [#allocation18], 1
        %v2100 = vld [vmem:[%s2099] sm:$0x1]
        %v2102 = vlaneseq
        %v2103 = vshrl.u32 %v2102, 7
        %v2104 = vsub.s32 0, %v2103
        %v2105 = vrot.slane %v2100, %v2104
        %v2115 = vunpack.c.l.b16 %v2091
        %v2116 = vunpack.c.l.b16 %v2092
        %v2117 = vunpack.c.l.b16 %v2093
        %v2118 = vunpack.c.l.b16 %v2094
        %v2119 = vunpack.c.l.b16 %v2095
        %v2120 = vunpack.c.l.b16 %v2096
        %v2121 = vunpack.c.l.b16 %v2097
        %v2122 = vunpack.c.l.b16 %v2098
        %v2123 = vpack.c.b16 %v2116, %v2115
        %v2124 = vpack.c.b16 %v2118, %v2117
        %v2125 = vpack.c.b16 %v2120, %v2119
        %v2126 = vpack.c.b16 %v2122, %v2121
        %v2132 = vsel %vm1433, %v2089, 0
        %2134 = vmatprep.subr.bf16.mxu0 0
        %2135 = vmatpush1.bf16.msra.mxu0 %v2123
        %2136 = vmatprep.subr.bf16.mxu0 0
        %2137 = vmatpush1.bf16.msra.mxu0 %v2124
        %2138 = vmatprep.subr.bf16.mxu0 0
        %2139 = vmatpush1.bf16.msra.mxu0 %v2125
        %2140 = vmatprep.subr.bf16.mxu0 0
        %2141 = vmatpush1.bf16.msra.mxu0 %v2126
        %2142 = vmatprep.subr.bf16.mxu0 0
        %2143 = vmatpush1.bf16.msra.mxu0 0
        %2144 = vmatprep.subr.bf16.mxu0 0
        %2145 = vmatpush1.bf16.msra.mxu0 0
        %2146 = vmatprep.subr.bf16.mxu0 0
        %2147 = vmatpush1.bf16.msra.mxu0 0
        %2148 = vmatprep.subr.bf16.mxu0 0
        %2149 = vmatpush1.bf16.msra.mxu0 0
        %2150 = vmatprep.subr.bf16.mxu0 0
        %2151 = vmatpush1.bf16.msra.mxu0 0
        %2152 = vmatprep.subr.bf16.mxu0 0
        %2153 = vmatpush1.bf16.msra.mxu0 0
        %2154 = vmatprep.subr.bf16.mxu0 0
        %2155 = vmatpush1.bf16.msra.mxu0 0
        %2156 = vmatprep.subr.bf16.mxu0 0
        %2157 = vmatpush1.bf16.msra.mxu0 0
        %2158 = vmatprep.subr.bf16.mxu0 0
        %2159 = vmatpush1.bf16.msra.mxu0 0
        %2160 = vmatprep.subr.bf16.mxu0 0
        %2161 = vmatpush1.bf16.msra.mxu0 0
        %2162 = vmatprep.subr.bf16.mxu0 0
        %2163 = vmatpush1.bf16.msra.mxu0 0
        %2164 = vmatprep.subr.bf16.mxu0 0
        %2165 = vmatpush1.bf16.msra.mxu0 0
        %2166 = vmatprep.mubr.bf16.mxu0 0
        %2167 = vmatmul.mubr.bf16.gmra.mrb[0].mxu0 %v2132
        %v2168 = vpop.f32.mrb[0].mxu0
        %v2169 = vadd.f32 %v2105, %v2168
        %v2170 = vpop.f32.mrb[0].mxu0
        %v2171 = vpop.f32.mrb[0].mxu0
        %v2172 = vpop.f32.mrb[0].mxu0
        %2173 = vdwg.mxu0
        %v2174 = vadd.f32 %v2010, %v2169
        %s2175 = scalar_lea.vmem [#allocation19], 1
        %v2176 = vld [vmem:[%s2175] sm:$0x1]
        %s2177 = scalar_lea.vmem [#allocation21], 1
        %v2178 = vld [vmem:[%s2177] sm:$0x1]
        %v2179 = vsel %vm788, %v2174, 0.0
        %2180 = vadd.xlane.f32.xlu0 %v2179
        %v2181 = vpop.xlane.xlu0 %2180
        %v2182 = vmul.f32 %v2181, %v792
        %v2183 = vsub.f32 %v2174, %v2182
        %v2184 = vmul.f32 %v2183, %v2183
        %v2185 = vsel %vm788, %v2184, 0.0
        %2186 = vadd.xlane.f32.xlu0 %v2185
        %v2187 = vpop.xlane.xlu0 %2186
        %v2188 = vmul.f32 %v2187, %v792
        %v2189 = vadd.f32 %v2188, 1e-12
        %v2190 = vrsqrt.pop %v2189
        %v2191 = vmul.f32 %v2183, %v2190
        %v2193 = vlaneseq
        %v2194 = vshrl.u32 %v2193, 7
        %v2195 = vsub.s32 0, %v2194
        %v2196 = vrot.slane %v2176, %v2195
        %v2198 = vmul.f32 %v2191, %v2196
        %v2200 = vlaneseq
        %v2201 = vshrl.u32 %v2200, 7
        %v2202 = vsub.s32 0, %v2201
        %v2203 = vrot.slane %v2178, %v2202
        %v2205 = vadd.f32 %v2198, %v2203
        %v2206 = vpack.c.bf16 %v2205, %v2205
        %v2207 = vld [vmem:[%s16] sm:$0xf]
        %v2208 = vld [vmem:[%s16 + $0x4] sm:$0xf]
        %v2209 = vld [vmem:[%s16 + $0x8] sm:$0xf]
        %v2210 = vld [vmem:[%s16 + $0xc] sm:$0xf]
        %v2211 = vld [vmem:[#allocation22] sm:$0x1]
        %v2213 = vlaneseq
        %v2214 = vshrl.u32 %v2213, 7
        %v2215 = vsub.s32 0, %v2214
        %v2216 = vrot.slane %v2211, %v2215
        %v2222 = vunpack.c.l.b16 %v2207
        %v2223 = vunpack.c.l.b16 %v2208
        %v2224 = vunpack.c.l.b16 %v2209
        %v2225 = vunpack.c.l.b16 %v2210
        %v2226 = vpack.c.b16 %v2223, %v2222
        %v2227 = vpack.c.b16 %v2225, %v2224
        %v2231 = vsel %vm788, %v2206, 0
        %2233 = vmatprep.subr.bf16.mxu0 0
        %2234 = vmatpush1.bf16.msra.mxu0 %v2226
        %2235 = vmatprep.subr.bf16.mxu0 0
        %2236 = vmatpush1.bf16.msra.mxu0 %v2227
        %2237 = vmatprep.subr.bf16.mxu0 0
        %2238 = vmatpush1.bf16.msra.mxu0 0
        %2239 = vmatprep.subr.bf16.mxu0 0
        %2240 = vmatpush1.bf16.msra.mxu0 0
        %2241 = vmatprep.subr.bf16.mxu0 0
        %2242 = vmatpush1.bf16.msra.mxu0 0
        %2243 = vmatprep.subr.bf16.mxu0 0
        %2244 = vmatpush1.bf16.msra.mxu0 0
        %2245 = vmatprep.subr.bf16.mxu0 0
        %2246 = vmatpush1.bf16.msra.mxu0 0
        %2247 = vmatprep.subr.bf16.mxu0 0
        %2248 = vmatpush1.bf16.msra.mxu0 0
        %2249 = vmatprep.subr.bf16.mxu0 0
        %2250 = vmatpush1.bf16.msra.mxu0 0
        %2251 = vmatprep.subr.bf16.mxu0 0
        %2252 = vmatpush1.bf16.msra.mxu0 0
        %2253 = vmatprep.subr.bf16.mxu0 0
        %2254 = vmatpush1.bf16.msra.mxu0 0
        %2255 = vmatprep.subr.bf16.mxu0 0
        %2256 = vmatpush1.bf16.msra.mxu0 0
        %2257 = vmatprep.subr.bf16.mxu0 0
        %2258 = vmatpush1.bf16.msra.mxu0 0
        %2259 = vmatprep.subr.bf16.mxu0 0
        %2260 = vmatpush1.bf16.msra.mxu0 0
        %2261 = vmatprep.subr.bf16.mxu0 0
        %2262 = vmatpush1.bf16.msra.mxu0 0
        %2263 = vmatprep.subr.bf16.mxu0 0
        %2264 = vmatpush1.bf16.msra.mxu0 0
        %2265 = vmatprep.mubr.bf16.mxu0 0
        %2266 = vmatmul.mubr.bf16.gmra.mrb[0].mxu0 %v2231
        %v2267 = vpop.f32.mrb[0].mxu0
        %v2268 = vadd.f32 %v2216, %v2267
        %v2269 = vpop.f32.mrb[0].mxu0
        %v2270 = vpop.f32.mrb[0].mxu0
        %v2271 = vpop.f32.mrb[0].mxu0
        %2272 = vdwg.mxu0
        %v2273 = vtanh.pop %v2268
        %v2274 = vpack.c.bf16 %v2273, %v2273
        %v2275 = vld [vmem:[%s18] sm:$0xf]
        %v2276 = vld [vmem:[%s18 + $0x4] sm:$0xf]
        %v2277 = vld [vmem:[%s18 + $0x8] sm:$0xf]
        %v2278 = vld [vmem:[%s18 + $0xc] sm:$0xf]
        %v2279 = vld [vmem:[%s19] sm:$0x1]
        %v2281 = vlaneseq
        %v2282 = vshrl.u32 %v2281, 7
        %v2283 = vsub.s32 0, %v2282
        %v2284 = vrot.slane %v2279, %v2283
        %v2290 = vunpack.c.l.b16 %v2275
        %v2291 = vunpack.c.l.b16 %v2276
        %v2292 = vunpack.c.l.b16 %v2277
        %v2293 = vunpack.c.l.b16 %v2278
        %v2294 = vpack.c.b16 %v2291, %v2290
        %v2295 = vpack.c.b16 %v2293, %v2292
        %v2299 = vsel %vm788, %v2274, 0
        %2301 = vmatprep.subr.bf16.mxu0 0
        %2302 = vmatpush1.bf16.msra.mxu0 %v2294
        %2303 = vmatprep.subr.bf16.mxu0 0
        %2304 = vmatpush1.bf16.msra.mxu0 %v2295
        %2305 = vmatprep.subr.bf16.mxu0 0
        %2306 = vmatpush1.bf16.msra.mxu0 0
        %2307 = vmatprep.subr.bf16.mxu0 0
        %2308 = vmatpush1.bf16.msra.mxu0 0
        %2309 = vmatprep.subr.bf16.mxu0 0
        %2310 = vmatpush1.bf16.msra.mxu0 0
        %2311 = vmatprep.subr.bf16.mxu0 0
        %2312 = vmatpush1.bf16.msra.mxu0 0
        %2313 = vmatprep.subr.bf16.mxu0 0
        %2314 = vmatpush1.bf16.msra.mxu0 0
        %2315 = vmatprep.subr.bf16.mxu0 0
        %2316 = vmatpush1.bf16.msra.mxu0 0
        %2317 = vmatprep.subr.bf16.mxu0 0
        %2318 = vmatpush1.bf16.msra.mxu0 0
        %2319 = vmatprep.subr.bf16.mxu0 0
        %2320 = vmatpush1.bf16.msra.mxu0 0
        %2321 = vmatprep.subr.bf16.mxu0 0
        %2322 = vmatpush1.bf16.msra.mxu0 0
        %2323 = vmatprep.subr.bf16.mxu0 0
        %2324 = vmatpush1.bf16.msra.mxu0 0
        %2325 = vmatprep.subr.bf16.mxu0 0
        %2326 = vmatpush1.bf16.msra.mxu0 0
        %2327 = vmatprep.subr.bf16.mxu0 0
        %2328 = vmatpush1.bf16.msra.mxu0 0
        %2329 = vmatprep.subr.bf16.mxu0 0
        %2330 = vmatpush1.bf16.msra.mxu0 0
        %2331 = vmatprep.subr.bf16.mxu0 0
        %2332 = vmatpush1.bf16.msra.mxu0 0
        %2333 = vmatprep.mubr.bf16.mxu0 0
        %2334 = vmatmul.mubr.bf16.gmra.mrb[0].mxu0 %v2299
        %v2335 = vpop.f32.mrb[0].mxu0
        %v2336 = vadd.f32 %v2284, %v2335
        %v2337 = vpop.f32.mrb[0].mxu0
        %v2338 = vpop.f32.mrb[0].mxu0
        %v2339 = vpop.f32.mrb[0].mxu0
        %2340 = vdwg.mxu0
        %2341 = vst [vmem:[%s776] sm:$0xff] %v2336
        %s2342 = sand.u32 %s459, 1
        %s2343 = scalar_lea.sflag [#allocation6], %s2342
        %s2344 = sand.u32 %s459, 1
        %s2345 = smul.addr %s2344, 8
        %s2346 = scalar_lea.vmem [#allocation24], %s2345
        // Predicated region
        $region145: #{tpu_custom_call.1} parent=95 // pred_check
          %p2347 = pneg %p469
        $region146: #{tpu_custom_call.1} parent=95 // pred_check_branch
          %2349 = sbr.rel (%p2347) target = $region148
        $region147: #{tpu_custom_call.1} parent=95 // pred_region
          %s2351 = ssub.s32 128, 128
          %2352 = vsyncadd %s2343, %s2351
          %s2353 = smul.addr %s47, 128
          %s2354 = scalar_lea.hbm %s20, %s2353
          %s2356 = sshll.u32 %s2346, 4
          %s2357 = int_to_ptr.vmem [resolvable:$true] %s2356
          %2359 = dma.vmem_to_hbm [thread:$0]  %s2357, 128, %s2354, %s2343
        $region148: #{tpu_custom_call.1} parent=95 // pred_fallthru
          _
      $region96: #{tpu_custom_call.1} parent=5 // pred_fallthru
        _
      %p2360 = scmp.le.s32.totalorder 2, %s42
      // Predicated region
      $region149: #{tpu_custom_call.1} parent=5 // pred_check
        %p2361 = pneg %p2360
      $region150: #{tpu_custom_call.1} parent=5 // pred_check_branch
        %2363 = sbr.rel (%p2361) target = $region152
      $region151: #{tpu_custom_call.1} parent=5 // pred_region
        %s2364 = ssub.s32 %s42, 2
        // Predicated region
        $region153: #{tpu_custom_call.1} parent=151 // pred_check
          %p2365 = pneg %p475
        $region154: #{tpu_custom_call.1} parent=151 // pred_check_branch
          %2367 = sbr.rel (%p2365) target = $region156
        $region155: #{tpu_custom_call.1} parent=151 // pred_region
          %s2368 = sand.u32 %s460, 1
          %s2369 = scalar_lea.sflag [#allocation6], %s2368
          %s2370 = sand.u32 %s460, 1
          %s2371 = smul.addr %s2370, 8
          %s2372 = scalar_lea.vmem [#allocation24], %s2371
          %2373 = dma.done %s2369, 128
        $region156: #{tpu_custom_call.1} parent=151 // pred_fallthru
          _
      $region152: #{tpu_custom_call.1} parent=5 // pred_fallthru
        _
    $region6: #{tpu_custom_call.1} parent=1 // loop_footer
      %s46 = sadd.s32 1, %s42
    $region7: #{tpu_custom_call.1} parent=1 // loop_footer_branch
      %41 = sbr.rel target = $region3
    $region8: #{tpu_custom_call.1} parent=1 // loop_exit
      _
    %2374 = vsyncpa [#allocation5], 1
    %s2375 = scalar_lea.sflag [#allocation5], 1
    %2376 = vsyncpa %s2375, 1
    %2377 = vsyncpa [#allocation8], 1
    %2378 = vsyncpa [#allocation11], 1
    %2379 = vsyncpa [#allocation14], 1
    %2380 = vsyncpa [#allocation17], 1
    %2381 = vsyncpa [#allocation20], 1
    %2382 = vsyncpa [#allocation23], 1
    %2383 = vsyncpa [#allocation6], 1
    %s2384 = scalar_lea.sflag [#allocation6], 1
    %2385 = vsyncpa %s2384, 1

</llo_original>
